<compile_context>
chip_gen: v5e
topology: v5e:2x2
jax: 0.10.0
libtpu: 0.0.40
codegen_flags: <defaults>
</compile_context>

<pallas_src>
import jax
import jax.numpy as jnp
from jax.experimental import pallas as pl
from jax.experimental.pallas import tpu as pltpu

# ----------------------------- static model dims -----------------------------
B, T, D, H = 2, 16, 8, 32            # batch, seq_len, input_size, lstm hidden
K1, K2, K3 = 8, 5, 3                 # conv kernel sizes
C1, C2, C3 = 128, 256, 128           # conv channel widths
L1 = T - K1 + 1                      # 9
L2 = L1 - K2 + 1                     # 5
L3 = L2 - K3 + 1                     # 3
assert 4 * H == C1 == C3 == 128 and 8 * H == C2 == 256
assert (B * T) % 8 == 0 and L3 >= 1, "conv stack (kernels 8,5,3) needs T >= 14"

FP32 = jnp.float32
BF16 = jnp.bfloat16


def _r8(n):                          # round rows up to a full sublane tile
    return -(-n // 8) * 8


# pack128 layout: every 128-lane parameter in one buffer (one prologue DMA).
# Each segment starts on an 8-row boundary so every in-kernel slice is aligned.
OFF_WIH1 = 0                          # (D, 4H)   LSTM1 input weight
OFF_B1 = OFF_WIH1 + _r8(D)            # (1, 4H)   LSTM1 bias (b_ih + b_hh)
OFF_WHH2 = OFF_B1 + 8                 # (H, 4H)   LSTM2 recurrent weight
OFF_B2 = OFF_WHH2 + _r8(H)            # (1, 4H)   LSTM2 bias
OFF_CW1 = OFF_B2 + 8                  # (K1*D, C1) conv1 im2col weight
OFF_S1 = OFF_CW1 + _r8(K1 * D)        # (1, C1)   BN1 folded scale
OFF_T1 = OFF_S1 + 8                   # (1, C1)   BN1 folded shift
OFF_S3 = OFF_T1 + 8                   # (1, C3)   BN3 folded scale
OFF_T3 = OFF_S3 + 8                   # (1, C3)   BN3 folded shift
OFF_W1H = OFF_T3 + 8                  # (H, 128)  fc1 weight, hidden half (cols>=32 zero)
OFF_W1P = OFF_W1H + _r8(H)            # (C3, 128) fc1 weight, pooled half (cols>=32 zero)
OFF_FB1 = OFF_W1P + _r8(C3)           # (1, 128)  fc1 bias (lanes>=32 zero)
OFF_W2 = OFF_FB1 + 8                  # (1, 128)  fc2 weight as a row (lanes>=32 zero)
OFF_FB2 = OFF_W2 + 8                  # (1, 1)    fc2 bias at lane 0
N128 = OFF_FB2 + 8

# pack256 layout: merged [W_ih2 | W_hh1] + conv-2 folded BN scale/shift.
OFF_WD = 0                            # (H, 8H)
OFF_S2 = OFF_WD + _r8(H)              # (1, C2)
OFF_T2 = OFF_S2 + 8                   # (1, C2)
N256 = OFF_T2 + 8


# ------------------------------ fused kernel ---------------------------------

def fused_model_kernel(x_ref, xcols_ref, pack128_ref, pack256_ref,
                       cw2_hbm, cw3_hbm, out_ref,
                       cw2_buf, cw3_buf, dma_sem):
    # -- kick off the two big conv-weight DMAs; they complete behind the LSTM --
    cp2 = pltpu.make_async_copy(cw2_hbm, cw2_buf, dma_sem.at[0])
    cp3 = pltpu.make_async_copy(cw3_hbm, cw3_buf, dma_sem.at[1])
    cp2.start()
    cp3.start()

    # -- carve LSTM params out of the packed buffers (static, tile-aligned) ----
    wih1 = pack128_ref[OFF_WIH1:OFF_WIH1 + D, :].astype(BF16)     # (D, 4H)
    b1 = pack128_ref[OFF_B1:OFF_B1 + 1, :]                        # (1, 4H)
    whh2 = pack128_ref[OFF_WHH2:OFF_WHH2 + H, :].astype(BF16)     # (H, 4H)
    b2 = pack128_ref[OFF_B2:OFF_B2 + 1, :]                        # (1, 4H)
    w_d = pack256_ref[OFF_WD:OFF_WD + H, :].astype(BF16)          # (H, 8H) = [Wih2 | Whh1]

    # ---------------- LSTM branch (2 layers; only final h of layer 2 used) ----
    # Hoisted layer-1 input projection: one (B*T, D)@(D, 4H) matmul + bias.
    x = x_ref[...]                                                # (B, T, D)
    xp = jnp.dot(x.reshape(B * T, D).astype(BF16), wih1,
                 preferred_element_type=FP32) + b1
    xp = xp.reshape(B, T, 4 * H)

    def lstm_cell(pre, c):
        # Full 4H-wide activations (one sigmoid + one tanh per cell), then slice
        # the gates.  Gate order matches PyTorch: [i, f, g, o].  f32 math.
        s = jax.nn.sigmoid(pre)
        th = jnp.tanh(pre)
        i = s[:, 0:H]
        f = s[:, H:2 * H]
        g = th[:, 2 * H:3 * H]
        o = s[:, 3 * H:4 * H]
        c_new = f * c + i * g
        return o * jnp.tanh(c_new), c_new

    h2 = jnp.zeros((B, H), FP32)
    c1 = jnp.zeros((B, H), FP32)
    c2 = jnp.zeros((B, H), FP32)
    rec1 = jnp.zeros((B, 4 * H), FP32)        # h1_{t-1} @ Whh1 (zero at t = 0)
    for t in range(T):                        # static trip count -> fully unrolled
        pre1 = xp[:, t, :] + rec1
        h1, c1 = lstm_cell(pre1, c1)
        # One matmul yields BOTH h1_t @ Wih2 (lanes 0:4H, needed for pre2 now)
        # and h1_t @ Whh1 (lanes 4H:8H, the layer-1 recurrent term for step t+1)
        # -> 2 MXU issues per step, no runtime concatenation, aligned slices.
        d = jnp.dot(h1.astype(BF16), w_d, preferred_element_type=FP32)   # (B, 8H)
        r2 = jnp.dot(h2.astype(BF16), whh2, preferred_element_type=FP32)
        pre2 = d[:, :4 * H] + r2 + b2
        h2, c2 = lstm_cell(pre2, c2)
        rec1 = d[:, 4 * H:]

    # ---------------- Conv branch: 3x (Conv1d + folded BN + ReLU) + max-pool ---
    s1 = pack128_ref[OFF_S1:OFF_S1 + 1, :]
    t1 = pack128_ref[OFF_T1:OFF_T1 + 1, :]
    s2 = pack256_ref[OFF_S2:OFF_S2 + 1, :]
    t2 = pack256_ref[OFF_T2:OFF_T2 + 1, :]
    s3 = pack128_ref[OFF_S3:OFF_S3 + 1, :]
    t3 = pack128_ref[OFF_T3:OFF_T3 + 1, :]
    cw1 = pack128_ref[OFF_CW1:OFF_CW1 + K1 * D, :].astype(BF16)   # (K1*D, C1)

    # Layer 1: one im2col matmul for BOTH samples (patches built in the wrapper).
    y1 = jnp.dot(xcols_ref[...].astype(BF16), cw1, preferred_element_type=FP32)
    y1 = jnp.maximum(y1 * s1 + t1, 0.0)                           # (B*L1, C1)

    cp2.wait()      # conv-2 weights (K2*C1, C2) bf16 now resident in VMEM
    y2 = []
    for b in range(B):                # tiny static batch; lane-aligned im2col
        base = b * L1
        cols = jnp.concatenate(
            [y1[base + k: base + k + L2, :] for k in range(K2)], axis=1)
        z = jnp.dot(cols.astype(BF16), cw2_buf[...], preferred_element_type=FP32)
        y2.append(jnp.maximum(z * s2 + t2, 0.0))                  # (L2, C2)

    cp3.wait()      # conv-3 weights (K3*C2, C3) bf16 now resident in VMEM
    pooled_rows = []
    for b in range(B):
        cols = jnp.concatenate(
            [y2[b][k: k + L3, :] for k in range(K3)], axis=1)
        z = jnp.dot(cols.astype(BF16), cw3_buf[...], preferred_element_type=FP32)
        y3 = jnp.maximum(z * s3 + t3, 0.0)                        # (L3, C3)
        pooled_rows.append(jnp.max(y3, axis=0, keepdims=True))    # adaptive_max_pool1d(.,1)

    # Assemble pooled (B, C3) in vregs (no VMEM scratch round trip and no
    # unaligned sublane concatenate): per-row select against a row iota.
    row_id = jax.lax.broadcasted_iota(jnp.int32, (B, C3), 0)
    pooled = jnp.zeros((B, C3), FP32)
    for b in range(B):
        pooled = jnp.where(row_id == b, pooled_rows[b], pooled)

    # ---------------- FC head: cat -> fc1 -> ReLU -> fc2 (eval dropout = id) ---
    # fc1 weight pre-split into [hidden | pooled] halves, zero-padded to 128
    # output lanes; lanes >= 32 stay exactly zero through ReLU and fc2.
    w1h = pack128_ref[OFF_W1H:OFF_W1H + H, :]                     # (H, 128)
    w1p = pack128_ref[OFF_W1P:OFF_W1P + C3, :]                    # (C3, 128)
    fb1 = pack128_ref[OFF_FB1:OFF_FB1 + 1, :]                     # (1, 128)
    w2r = pack128_ref[OFF_W2:OFF_W2 + 1, :]                       # (1, 128)
    fb2 = pack128_ref[OFF_FB2:OFF_FB2 + 1, 0:1]                   # (1, 1)

    z = (jnp.dot(h2, w1h, preferred_element_type=FP32)
         + jnp.dot(pooled, w1p, preferred_element_type=FP32) + fb1)
    z = jnp.maximum(z, 0.0)                                       # (B, 128)
    # fc2 (32 -> 1) as a lane reduction: sum_j relu(z)_j * w2_j  (+ bias).
    out_ref[...] = jnp.sum(z * w2r, axis=1, keepdims=True) + fb2


# ------------------------- one-time parameter prep ---------------------------

def prepare_params(p, eps=1e-5):
    """BN folding + weight re-layout + packing, done ONCE off the hot path."""
    def fold_bn(bias, gamma, beta, mean, var):
        s = gamma / jnp.sqrt(var + eps)
        t = beta + (bias - mean) * s
        return s.reshape(1, -1), t.reshape(1, -1)

    s1, t1 = fold_bn(p["cb1"], p["g1"], p["be1"], p["m1"], p["v1"])
    s2, t2 = fold_bn(p["cb2"], p["g2"], p["be2"], p["m2"], p["v2"])
    s3, t3 = fold_bn(p["cb3"], p["g3"], p["be3"], p["m3"], p["v3"])

    pk = jnp.zeros((N128, 128), jnp.float32)
    pk = pk.at[OFF_WIH1:OFF_WIH1 + D, :].set(p["wih1"])
    pk = pk.at[OFF_B1, :].set(p["b1"][0])
    pk = pk.at[OFF_WHH2:OFF_WHH2 + H, :].set(p["whh2"])
    pk = pk.at[OFF_B2, :].set(p["b2"][0])
    pk = pk.at[OFF_CW1:OFF_CW1 + K1 * D, :].set(p["cw1"].reshape(K1 * D, C1))
    pk = pk.at[OFF_S1, :].set(s1[0])
    pk = pk.at[OFF_T1, :].set(t1[0])
    pk = pk.at[OFF_S3, :].set(s3[0])
    pk = pk.at[OFF_T3, :].set(t3[0])
    pk = pk.at[OFF_W1H:OFF_W1H + H, :32].set(p["w1h"])
    pk = pk.at[OFF_W1P:OFF_W1P + C3, :32].set(p["w1p"])
    pk = pk.at[OFF_FB1, :32].set(p["fb1"][0])
    pk = pk.at[OFF_W2, :32].set(p["w2"][:, 0])
    pk = pk.at[OFF_FB2, 0].set(p["fb2"][0, 0])

    pq = jnp.zeros((N256, 256), jnp.float32)
    pq = pq.at[OFF_WD:OFF_WD + H, :].set(
        jnp.concatenate([p["wih2"], p["whh1"]], axis=1))          # [Wih2 | Whh1]
    pq = pq.at[OFF_S2, :].set(s2[0])
    pq = pq.at[OFF_T2, :].set(t2[0])

    return {
        "pack128": pk,
        "pack256": pq,
        # im2col-reshaped conv weights, cast to bf16 once; left in HBM and DMA'd
        # manually inside the kernel so the transfer hides behind the LSTM.
        "cw2": p["cw2"].reshape(K2 * C1, C2).astype(jnp.bfloat16),
        "cw3": p["cw3"].reshape(K3 * C2, C3).astype(jnp.bfloat16),
    }


@jax.jit
def model_forward(prep, x):
    assert x.shape == (B, T, D)
    # Conv-1 im2col patches (B*L1, K1*D): tiny (4.6 KB), built once here so that
    # conv layer 1 is a single batched MXU matmul inside the kernel.
    xcols = jnp.concatenate([x[:, k:k + L1, :] for k in range(K1)], axis=-1)
    xcols = xcols.reshape(B * L1, K1 * D)
    return pl.pallas_call(
        fused_model_kernel,
        out_shape=jax.ShapeDtypeStruct((B, 1), jnp.float32),
        in_specs=[
            pl.BlockSpec(memory_space=pltpu.MemorySpace.VMEM),    # x
            pl.BlockSpec(memory_space=pltpu.MemorySpace.VMEM),    # xcols
            pl.BlockSpec(memory_space=pltpu.MemorySpace.VMEM),    # pack128
            pl.BlockSpec(memory_space=pltpu.MemorySpace.VMEM),    # pack256
            pl.BlockSpec(memory_space=pl.ANY),                    # cw2 (HBM, manual DMA)
            pl.BlockSpec(memory_space=pl.ANY),                    # cw3 (HBM, manual DMA)
        ],
        out_specs=pl.BlockSpec(memory_space=pltpu.MemorySpace.VMEM),
        scratch_shapes=[
            pltpu.VMEM((K2 * C1, C2), jnp.bfloat16),              # conv-2 weight buffer
            pltpu.VMEM((K3 * C2, C3), jnp.bfloat16),              # conv-3 weight buffer
            pltpu.SemaphoreType.DMA((2,)),
        ],
    )(x, xcols, prep["pack128"], prep["pack256"], prep["cw2"], prep["cw3"])


# ------------------------- pure-JAX reference (check) ------------------------

def reference_forward(p, x):
    Bx, Tx, Dx = x.shape
    Hh = p["whh1"].shape[0]

    def cell(h, c, inp, wih, whh, b):
        pre = inp @ wih + h @ whh + b
        i = jax.nn.sigmoid(pre[:, :Hh]); f = jax.nn.sigmoid(pre[:, Hh:2 * Hh])
        g = jnp.tanh(pre[:, 2 * Hh:3 * Hh]); o = jax.nn.sigmoid(pre[:, 3 * Hh:])
        c = f * c + i * g
        return o * jnp.tanh(c), c

    h1 = c1 = h2 = c2 = jnp.zeros((Bx, Hh), jnp.float32)
    for t in range(Tx):
        h1, c1 = cell(h1, c1, x[:, t, :], p["wih1"], p["whh1"], p["b1"])
        h2, c2 = cell(h2, c2, h1, p["wih2"], p["whh2"], p["b2"])

    def conv_bn_relu(y, w, bias, gamma, beta, mean, var):
        K = w.shape[0]
        L = y.shape[1] - K + 1
        acc = sum(jnp.einsum("bli,io->blo", y[:, k:k + L, :], w[k]) for k in range(K))
        acc = acc + bias
        z = gamma * (acc - mean) / jnp.sqrt(var + 1e-5) + beta
        return jnp.maximum(z, 0.0)

    y = conv_bn_relu(x, p["cw1"], p["cb1"], p["g1"], p["be1"], p["m1"], p["v1"])
    y = conv_bn_relu(y, p["cw2"], p["cb2"], p["g2"], p["be2"], p["m2"], p["v2"])
    y = conv_bn_relu(y, p["cw3"], p["cb3"], p["g3"], p["be3"], p["m3"], p["v3"])
    pooled = jnp.max(y, axis=1)

    z = jnp.maximum(h2 @ p["w1h"] + pooled @ p["w1p"] + p["fb1"], 0.0)
    return z @ p["w2"] + p["fb2"]


# ----------------------------- deterministic init ----------------------------

def init_params(key, Dx, Hh):
    ks = jax.random.split(key, 32)

    def u(k, shape, lo=-0.1, hi=0.1):
        return jax.random.uniform(k, shape, jnp.float32, lo, hi)

    p = {}
    # LSTM layer 1 / 2 (weights pre-transposed, biases b_ih + b_hh merged)
    p["wih1"] = u(ks[0], (Dx, 4 * Hh)); p["whh1"] = u(ks[1], (Hh, 4 * Hh)); p["b1"] = u(ks[2], (1, 4 * Hh))
    p["wih2"] = u(ks[3], (Hh, 4 * Hh)); p["whh2"] = u(ks[4], (Hh, 4 * Hh)); p["b2"] = u(ks[5], (1, 4 * Hh))
    # Conv1d(D->128, k=8) + BN
    p["cw1"] = u(ks[6], (K1, Dx, C1)); p["cb1"] = u(ks[7], (C1,))
    p["g1"] = u(ks[8], (C1,), 0.5, 1.5); p["be1"] = u(ks[9], (C1,))
    p["m1"] = u(ks[10], (C1,)); p["v1"] = u(ks[11], (C1,), 0.5, 1.5)
    # Conv1d(128->256, k=5) + BN
    p["cw2"] = u(ks[12], (K2, C1, C2)); p["cb2"] = u(ks[13], (C2,))
    p["g2"] = u(ks[14], (C2,), 0.5, 1.5); p["be2"] = u(ks[15], (C2,))
    p["m2"] = u(ks[16], (C2,)); p["v2"] = u(ks[17], (C2,), 0.5, 1.5)
    # Conv1d(256->128, k=3) + BN
    p["cw3"] = u(ks[18], (K3, C2, C3)); p["cb3"] = u(ks[19], (C3,))
    p["g3"] = u(ks[20], (C3,), 0.5, 1.5); p["be3"] = u(ks[21], (C3,))
    p["m3"] = u(ks[22], (C3,)); p["v3"] = u(ks[23], (C3,), 0.5, 1.5)
    # fc1(H+128 -> 32) split into [hidden | pooled] halves; fc2(32 -> 1)
    p["w1h"] = u(ks[24], (Hh, 32)); p["w1p"] = u(ks[25], (C3, 32)); p["fb1"] = u(ks[26], (1, 32))
    p["w2"] = u(ks[27], (32, 1)); p["fb2"] = u(ks[28], (1, 1))
    return p


if __name__ == "__main__":
    key = jax.random.PRNGKey(0)
    kp, kx = jax.random.split(key)
    params = init_params(kp, D, H)
    x = jax.random.normal(kx, (B, T, D), jnp.float32)

    prep = prepare_params(params)        # one-time weight/BN prep (off hot path)
    out = jax.block_until_ready(model_forward(prep, x))

    ref = reference_forward(params, x)
    assert out.shape == (B, 1), out.shape
    # bf16 MXU operands (f32 accumulation) -> compare at bf16-level tolerance.
    assert jnp.allclose(out, ref, rtol=2e-2, atol=2e-2), (out, ref)

    print("KERNEL_OK")
</pallas_src>

<mosaic_0001>
module attributes {stable_mosaic.version = 11 : i64} {
  func.func @fused_model_kernel(%arg0: memref<2x16x8xf32, #tpu.memory_space<vmem>>, %arg1: memref<18x64xf32, #tpu.memory_space<vmem>>, %arg2: memref<336x128xf32, #tpu.memory_space<vmem>>, %arg3: memref<48x256xf32, #tpu.memory_space<vmem>>, %arg4: memref<640x256xbf16, #tpu.memory_space<any>>, %arg5: memref<768x128xbf16, #tpu.memory_space<any>>, %arg6: memref<2x1xf32, #tpu.memory_space<vmem>>, %arg7: memref<640x256xbf16, #tpu.memory_space<vmem>>, %arg8: memref<768x128xbf16, #tpu.memory_space<vmem>>, %arg9: memref<2x!tpu.dma_semaphore, #tpu.memory_space<semaphore_mem>>) attributes {dimension_semantics = [], scalar_prefetch = 0 : i64, scratch_operands = 3 : i64, tpu.core_type = #tpu.core_type<tc>} {
    %c0_i32 = arith.constant 0 : i32
    %0 = tpu.memref_slice %arg9[%c0_i32] : memref<2x!tpu.dma_semaphore, #tpu.memory_space<semaphore_mem>> -> memref<1x!tpu.dma_semaphore, #tpu.memory_space<semaphore_mem>>
    %1 = tpu.memref_squeeze %0 : memref<1x!tpu.dma_semaphore, #tpu.memory_space<semaphore_mem>> -> memref<!tpu.dma_semaphore, #tpu.memory_space<semaphore_mem>>
    tpu.enqueue_dma source(%arg4 : memref<640x256xbf16, #tpu.memory_space<any>>) target(%arg7 : memref<640x256xbf16, #tpu.memory_space<vmem>>) target_semaphore(%1 : memref<!tpu.dma_semaphore, #tpu.memory_space<semaphore_mem>>)
    %c1_i32 = arith.constant 1 : i32
    %2 = tpu.memref_slice %arg9[%c1_i32] : memref<2x!tpu.dma_semaphore, #tpu.memory_space<semaphore_mem>> -> memref<1x!tpu.dma_semaphore, #tpu.memory_space<semaphore_mem>>
    %3 = tpu.memref_squeeze %2 : memref<1x!tpu.dma_semaphore, #tpu.memory_space<semaphore_mem>> -> memref<!tpu.dma_semaphore, #tpu.memory_space<semaphore_mem>>
    tpu.enqueue_dma source(%arg5 : memref<768x128xbf16, #tpu.memory_space<any>>) target(%arg8 : memref<768x128xbf16, #tpu.memory_space<vmem>>) target_semaphore(%3 : memref<!tpu.dma_semaphore, #tpu.memory_space<semaphore_mem>>)
    %c0 = arith.constant 0 : index
    %c0_0 = arith.constant 0 : index
    %4 = vector.load %arg2[%c0, %c0_0] : memref<336x128xf32, #tpu.memory_space<vmem>>, vector<8x128xf32>
    %5 = arith.truncf %4 : vector<8x128xf32> to vector<8x128xbf16>
    %c8 = arith.constant 8 : index
    %c0_1 = arith.constant 0 : index
    %6 = vector.load %arg2[%c8, %c0_1] : memref<336x128xf32, #tpu.memory_space<vmem>>, vector<1x128xf32>
    %c16 = arith.constant 16 : index
    %c0_2 = arith.constant 0 : index
    %7 = vector.load %arg2[%c16, %c0_2] : memref<336x128xf32, #tpu.memory_space<vmem>>, vector<32x128xf32>
    %8 = arith.truncf %7 : vector<32x128xf32> to vector<32x128xbf16>
    %c48 = arith.constant 48 : index
    %c0_3 = arith.constant 0 : index
    %9 = vector.load %arg2[%c48, %c0_3] : memref<336x128xf32, #tpu.memory_space<vmem>>, vector<1x128xf32>
    %c0_4 = arith.constant 0 : index
    %c0_5 = arith.constant 0 : index
    %10 = vector.load %arg3[%c0_4, %c0_5] : memref<48x256xf32, #tpu.memory_space<vmem>>, vector<32x256xf32>
    %11 = arith.truncf %10 : vector<32x256xf32> to vector<32x256xbf16>
    %c0_6 = arith.constant 0 : index
    %c0_7 = arith.constant 0 : index
    %c0_8 = arith.constant 0 : index
    %12 = vector.load %arg0[%c0_6, %c0_7, %c0_8] : memref<2x16x8xf32, #tpu.memory_space<vmem>>, vector<2x16x8xf32>
    %13 = vector.shape_cast %12 : vector<2x16x8xf32> to vector<32x8xf32>
    %14 = arith.truncf %13 : vector<32x8xf32> to vector<32x8xbf16>
    %cst = arith.constant dense<0.000000e+00> : vector<32x128xf32>
    %15 = tpu.matmul %14, %5, %cst {dimension_numbers = #tpu.dot_dimension_numbers<[1], [0], [0], [1], [0, 0, 1, 1], [], []>} : vector<32x8xbf16>, vector<8x128xbf16>, vector<32x128xf32> -> vector<32x128xf32>
    %16 = vector.broadcast %6 : vector<1x128xf32> to vector<32x128xf32>
    %17 = arith.addf %15, %16 : vector<32x128xf32>
    %18 = vector.shape_cast %17 : vector<32x128xf32> to vector<2x16x128xf32>
    %cst_9 = arith.constant 0.000000e+00 : f32
    %19 = vector.broadcast %cst_9 : f32 to vector<2x32xf32>
    %cst_10 = arith.constant 0.000000e+00 : f32
    %20 = vector.broadcast %cst_10 : f32 to vector<2x32xf32>
    %cst_11 = arith.constant 0.000000e+00 : f32
    %21 = vector.broadcast %cst_11 : f32 to vector<2x32xf32>
    %cst_12 = arith.constant 0.000000e+00 : f32
    %22 = vector.broadcast %cst_12 : f32 to vector<2x128xf32>
    %23 = vector.extract_strided_slice %18 {offsets = [0, 0, 0], sizes = [2, 1, 128], strides = [1, 1, 1]} : vector<2x16x128xf32> to vector<2x1x128xf32>
    %24 = vector.shape_cast %23 : vector<2x1x128xf32> to vector<2x128xf32>
    %25 = arith.addf %24, %22 : vector<2x128xf32>
    %26 = arith.negf %25 : vector<2x128xf32>
    %27 = math.exp %26 : vector<2x128xf32>
    %cst_13 = arith.constant 1.000000e+00 : f32
    %28 = vector.broadcast %cst_13 : f32 to vector<2x128xf32>
    %29 = arith.addf %28, %27 : vector<2x128xf32>
    %30 = arith.divf %28, %29 : vector<2x128xf32>
    %31 = math.tanh %25 : vector<2x128xf32>
    %32 = vector.extract_strided_slice %30 {offsets = [0, 0], sizes = [2, 32], strides = [1, 1]} : vector<2x128xf32> to vector<2x32xf32>
    %33 = vector.extract_strided_slice %30 {offsets = [0, 32], sizes = [2, 32], strides = [1, 1]} : vector<2x128xf32> to vector<2x32xf32>
    %34 = vector.extract_strided_slice %31 {offsets = [0, 64], sizes = [2, 32], strides = [1, 1]} : vector<2x128xf32> to vector<2x32xf32>
    %35 = vector.extract_strided_slice %30 {offsets = [0, 96], sizes = [2, 32], strides = [1, 1]} : vector<2x128xf32> to vector<2x32xf32>
    %36 = arith.mulf %33, %20 : vector<2x32xf32>
    %37 = arith.mulf %32, %34 : vector<2x32xf32>
    %38 = arith.addf %36, %37 : vector<2x32xf32>
    %39 = math.tanh %38 : vector<2x32xf32>
    %40 = arith.mulf %35, %39 : vector<2x32xf32>
    %41 = arith.truncf %40 : vector<2x32xf32> to vector<2x32xbf16>
    %cst_14 = arith.constant dense<0.000000e+00> : vector<2x256xf32>
    %42 = tpu.matmul %41, %11, %cst_14 {dimension_numbers = #tpu.dot_dimension_numbers<[1], [0], [0], [1], [0, 0, 1, 1], [], []>} : vector<2x32xbf16>, vector<32x256xbf16>, vector<2x256xf32> -> vector<2x256xf32>
    %43 = arith.truncf %19 : vector<2x32xf32> to vector<2x32xbf16>
    %cst_15 = arith.constant dense<0.000000e+00> : vector<2x128xf32>
    %44 = tpu.matmul %43, %8, %cst_15 {dimension_numbers = #tpu.dot_dimension_numbers<[1], [0], [0], [1], [0, 0, 1, 1], [], []>} : vector<2x32xbf16>, vector<32x128xbf16>, vector<2x128xf32> -> vector<2x128xf32>
    %45 = vector.extract_strided_slice %42 {offsets = [0, 0], sizes = [2, 128], strides = [1, 1]} : vector<2x256xf32> to vector<2x128xf32>
    %46 = arith.addf %45, %44 : vector<2x128xf32>
    %47 = vector.broadcast %9 : vector<1x128xf32> to vector<2x128xf32>
    %48 = arith.addf %46, %47 : vector<2x128xf32>
    %49 = arith.negf %48 : vector<2x128xf32>
    %50 = math.exp %49 : vector<2x128xf32>
    %cst_16 = arith.constant 1.000000e+00 : f32
    %51 = vector.broadcast %cst_16 : f32 to vector<2x128xf32>
    %52 = arith.addf %51, %50 : vector<2x128xf32>
    %53 = arith.divf %51, %52 : vector<2x128xf32>
    %54 = math.tanh %48 : vector<2x128xf32>
    %55 = vector.extract_strided_slice %53 {offsets = [0, 0], sizes = [2, 32], strides = [1, 1]} : vector<2x128xf32> to vector<2x32xf32>
    %56 = vector.extract_strided_slice %53 {offsets = [0, 32], sizes = [2, 32], strides = [1, 1]} : vector<2x128xf32> to vector<2x32xf32>
    %57 = vector.extract_strided_slice %54 {offsets = [0, 64], sizes = [2, 32], strides = [1, 1]} : vector<2x128xf32> to vector<2x32xf32>
    %58 = vector.extract_strided_slice %53 {offsets = [0, 96], sizes = [2, 32], strides = [1, 1]} : vector<2x128xf32> to vector<2x32xf32>
    %59 = arith.mulf %56, %21 : vector<2x32xf32>
    %60 = arith.mulf %55, %57 : vector<2x32xf32>
    %61 = arith.addf %59, %60 : vector<2x32xf32>
    %62 = math.tanh %61 : vector<2x32xf32>
    %63 = arith.mulf %58, %62 : vector<2x32xf32>
    %64 = vector.extract_strided_slice %42 {offsets = [0, 128], sizes = [2, 128], strides = [1, 1]} : vector<2x256xf32> to vector<2x128xf32>
    %65 = vector.extract_strided_slice %18 {offsets = [0, 1, 0], sizes = [2, 1, 128], strides = [1, 1, 1]} : vector<2x16x128xf32> to vector<2x1x128xf32>
    %66 = vector.shape_cast %65 : vector<2x1x128xf32> to vector<2x128xf32>
    %67 = arith.addf %66, %64 : vector<2x128xf32>
    %68 = arith.negf %67 : vector<2x128xf32>
    %69 = math.exp %68 : vector<2x128xf32>
    %cst_17 = arith.constant 1.000000e+00 : f32
    %70 = vector.broadcast %cst_17 : f32 to vector<2x128xf32>
    %71 = arith.addf %70, %69 : vector<2x128xf32>
    %72 = arith.divf %70, %71 : vector<2x128xf32>
    %73 = math.tanh %67 : vector<2x128xf32>
    %74 = vector.extract_strided_slice %72 {offsets = [0, 0], sizes = [2, 32], strides = [1, 1]} : vector<2x128xf32> to vector<2x32xf32>
    %75 = vector.extract_strided_slice %72 {offsets = [0, 32], sizes = [2, 32], strides = [1, 1]} : vector<2x128xf32> to vector<2x32xf32>
    %76 = vector.extract_strided_slice %73 {offsets = [0, 64], sizes = [2, 32], strides = [1, 1]} : vector<2x128xf32> to vector<2x32xf32>
    %77 = vector.extract_strided_slice %72 {offsets = [0, 96], sizes = [2, 32], strides = [1, 1]} : vector<2x128xf32> to vector<2x32xf32>
    %78 = arith.mulf %75, %38 : vector<2x32xf32>
    %79 = arith.mulf %74, %76 : vector<2x32xf32>
    %80 = arith.addf %78, %79 : vector<2x32xf32>
    %81 = math.tanh %80 : vector<2x32xf32>
    %82 = arith.mulf %77, %81 : vector<2x32xf32>
    %83 = arith.truncf %82 : vector<2x32xf32> to vector<2x32xbf16>
    %cst_18 = arith.constant dense<0.000000e+00> : vector<2x256xf32>
    %84 = tpu.matmul %83, %11, %cst_18 {dimension_numbers = #tpu.dot_dimension_numbers<[1], [0], [0], [1], [0, 0, 1, 1], [], []>} : vector<2x32xbf16>, vector<32x256xbf16>, vector<2x256xf32> -> vector<2x256xf32>
    %85 = arith.truncf %63 : vector<2x32xf32> to vector<2x32xbf16>
    %cst_19 = arith.constant dense<0.000000e+00> : vector<2x128xf32>
    %86 = tpu.matmul %85, %8, %cst_19 {dimension_numbers = #tpu.dot_dimension_numbers<[1], [0], [0], [1], [0, 0, 1, 1], [], []>} : vector<2x32xbf16>, vector<32x128xbf16>, vector<2x128xf32> -> vector<2x128xf32>
    %87 = vector.extract_strided_slice %84 {offsets = [0, 0], sizes = [2, 128], strides = [1, 1]} : vector<2x256xf32> to vector<2x128xf32>
    %88 = arith.addf %87, %86 : vector<2x128xf32>
    %89 = vector.broadcast %9 : vector<1x128xf32> to vector<2x128xf32>
    %90 = arith.addf %88, %89 : vector<2x128xf32>
    %91 = arith.negf %90 : vector<2x128xf32>
    %92 = math.exp %91 : vector<2x128xf32>
    %cst_20 = arith.constant 1.000000e+00 : f32
    %93 = vector.broadcast %cst_20 : f32 to vector<2x128xf32>
    %94 = arith.addf %93, %92 : vector<2x128xf32>
    %95 = arith.divf %93, %94 : vector<2x128xf32>
    %96 = math.tanh %90 : vector<2x128xf32>
    %97 = vector.extract_strided_slice %95 {offsets = [0, 0], sizes = [2, 32], strides = [1, 1]} : vector<2x128xf32> to vector<2x32xf32>
    %98 = vector.extract_strided_slice %95 {offsets = [0, 32], sizes = [2, 32], strides = [1, 1]} : vector<2x128xf32> to vector<2x32xf32>
    %99 = vector.extract_strided_slice %96 {offsets = [0, 64], sizes = [2, 32], strides = [1, 1]} : vector<2x128xf32> to vector<2x32xf32>
    %100 = vector.extract_strided_slice %95 {offsets = [0, 96], sizes = [2, 32], strides = [1, 1]} : vector<2x128xf32> to vector<2x32xf32>
    %101 = arith.mulf %98, %61 : vector<2x32xf32>
    %102 = arith.mulf %97, %99 : vector<2x32xf32>
    %103 = arith.addf %101, %102 : vector<2x32xf32>
    %104 = math.tanh %103 : vector<2x32xf32>
    %105 = arith.mulf %100, %104 : vector<2x32xf32>
    %106 = vector.extract_strided_slice %84 {offsets = [0, 128], sizes = [2, 128], strides = [1, 1]} : vector<2x256xf32> to vector<2x128xf32>
    %107 = vector.extract_strided_slice %18 {offsets = [0, 2, 0], sizes = [2, 1, 128], strides = [1, 1, 1]} : vector<2x16x128xf32> to vector<2x1x128xf32>
    %108 = vector.shape_cast %107 : vector<2x1x128xf32> to vector<2x128xf32>
    %109 = arith.addf %108, %106 : vector<2x128xf32>
    %110 = arith.negf %109 : vector<2x128xf32>
    %111 = math.exp %110 : vector<2x128xf32>
    %cst_21 = arith.constant 1.000000e+00 : f32
    %112 = vector.broadcast %cst_21 : f32 to vector<2x128xf32>
    %113 = arith.addf %112, %111 : vector<2x128xf32>
    %114 = arith.divf %112, %113 : vector<2x128xf32>
    %115 = math.tanh %109 : vector<2x128xf32>
    %116 = vector.extract_strided_slice %114 {offsets = [0, 0], sizes = [2, 32], strides = [1, 1]} : vector<2x128xf32> to vector<2x32xf32>
    %117 = vector.extract_strided_slice %114 {offsets = [0, 32], sizes = [2, 32], strides = [1, 1]} : vector<2x128xf32> to vector<2x32xf32>
    %118 = vector.extract_strided_slice %115 {offsets = [0, 64], sizes = [2, 32], strides = [1, 1]} : vector<2x128xf32> to vector<2x32xf32>
    %119 = vector.extract_strided_slice %114 {offsets = [0, 96], sizes = [2, 32], strides = [1, 1]} : vector<2x128xf32> to vector<2x32xf32>
    %120 = arith.mulf %117, %80 : vector<2x32xf32>
    %121 = arith.mulf %116, %118 : vector<2x32xf32>
    %122 = arith.addf %120, %121 : vector<2x32xf32>
    %123 = math.tanh %122 : vector<2x32xf32>
    %124 = arith.mulf %119, %123 : vector<2x32xf32>
    %125 = arith.truncf %124 : vector<2x32xf32> to vector<2x32xbf16>
    %cst_22 = arith.constant dense<0.000000e+00> : vector<2x256xf32>
    %126 = tpu.matmul %125, %11, %cst_22 {dimension_numbers = #tpu.dot_dimension_numbers<[1], [0], [0], [1], [0, 0, 1, 1], [], []>} : vector<2x32xbf16>, vector<32x256xbf16>, vector<2x256xf32> -> vector<2x256xf32>
    %127 = arith.truncf %105 : vector<2x32xf32> to vector<2x32xbf16>
    %cst_23 = arith.constant dense<0.000000e+00> : vector<2x128xf32>
    %128 = tpu.matmul %127, %8, %cst_23 {dimension_numbers = #tpu.dot_dimension_numbers<[1], [0], [0], [1], [0, 0, 1, 1], [], []>} : vector<2x32xbf16>, vector<32x128xbf16>, vector<2x128xf32> -> vector<2x128xf32>
    %129 = vector.extract_strided_slice %126 {offsets = [0, 0], sizes = [2, 128], strides = [1, 1]} : vector<2x256xf32> to vector<2x128xf32>
    %130 = arith.addf %129, %128 : vector<2x128xf32>
    %131 = vector.broadcast %9 : vector<1x128xf32> to vector<2x128xf32>
    %132 = arith.addf %130, %131 : vector<2x128xf32>
    %133 = arith.negf %132 : vector<2x128xf32>
    %134 = math.exp %133 : vector<2x128xf32>
    %cst_24 = arith.constant 1.000000e+00 : f32
    %135 = vector.broadcast %cst_24 : f32 to vector<2x128xf32>
    %136 = arith.addf %135, %134 : vector<2x128xf32>
    %137 = arith.divf %135, %136 : vector<2x128xf32>
    %138 = math.tanh %132 : vector<2x128xf32>
    %139 = vector.extract_strided_slice %137 {offsets = [0, 0], sizes = [2, 32], strides = [1, 1]} : vector<2x128xf32> to vector<2x32xf32>
    %140 = vector.extract_strided_slice %137 {offsets = [0, 32], sizes = [2, 32], strides = [1, 1]} : vector<2x128xf32> to vector<2x32xf32>
    %141 = vector.extract_strided_slice %138 {offsets = [0, 64], sizes = [2, 32], strides = [1, 1]} : vector<2x128xf32> to vector<2x32xf32>
    %142 = vector.extract_strided_slice %137 {offsets = [0, 96], sizes = [2, 32], strides = [1, 1]} : vector<2x128xf32> to vector<2x32xf32>
    %143 = arith.mulf %140, %103 : vector<2x32xf32>
    %144 = arith.mulf %139, %141 : vector<2x32xf32>
    %145 = arith.addf %143, %144 : vector<2x32xf32>
    %146 = math.tanh %145 : vector<2x32xf32>
    %147 = arith.mulf %142, %146 : vector<2x32xf32>
    %148 = vector.extract_strided_slice %126 {offsets = [0, 128], sizes = [2, 128], strides = [1, 1]} : vector<2x256xf32> to vector<2x128xf32>
    %149 = vector.extract_strided_slice %18 {offsets = [0, 3, 0], sizes = [2, 1, 128], strides = [1, 1, 1]} : vector<2x16x128xf32> to vector<2x1x128xf32>
    %150 = vector.shape_cast %149 : vector<2x1x128xf32> to vector<2x128xf32>
    %151 = arith.addf %150, %148 : vector<2x128xf32>
    %152 = arith.negf %151 : vector<2x128xf32>
    %153 = math.exp %152 : vector<2x128xf32>
    %cst_25 = arith.constant 1.000000e+00 : f32
    %154 = vector.broadcast %cst_25 : f32 to vector<2x128xf32>
    %155 = arith.addf %154, %153 : vector<2x128xf32>
    %156 = arith.divf %154, %155 : vector<2x128xf32>
    %157 = math.tanh %151 : vector<2x128xf32>
    %158 = vector.extract_strided_slice %156 {offsets = [0, 0], sizes = [2, 32], strides = [1, 1]} : vector<2x128xf32> to vector<2x32xf32>
    %159 = vector.extract_strided_slice %156 {offsets = [0, 32], sizes = [2, 32], strides = [1, 1]} : vector<2x128xf32> to vector<2x32xf32>
    %160 = vector.extract_strided_slice %157 {offsets = [0, 64], sizes = [2, 32], strides = [1, 1]} : vector<2x128xf32> to vector<2x32xf32>
    %161 = vector.extract_strided_slice %156 {offsets = [0, 96], sizes = [2, 32], strides = [1, 1]} : vector<2x128xf32> to vector<2x32xf32>
    %162 = arith.mulf %159, %122 : vector<2x32xf32>
    %163 = arith.mulf %158, %160 : vector<2x32xf32>
    %164 = arith.addf %162, %163 : vector<2x32xf32>
    %165 = math.tanh %164 : vector<2x32xf32>
    %166 = arith.mulf %161, %165 : vector<2x32xf32>
    %167 = arith.truncf %166 : vector<2x32xf32> to vector<2x32xbf16>
    %cst_26 = arith.constant dense<0.000000e+00> : vector<2x256xf32>
    %168 = tpu.matmul %167, %11, %cst_26 {dimension_numbers = #tpu.dot_dimension_numbers<[1], [0], [0], [1], [0, 0, 1, 1], [], []>} : vector<2x32xbf16>, vector<32x256xbf16>, vector<2x256xf32> -> vector<2x256xf32>
    %169 = arith.truncf %147 : vector<2x32xf32> to vector<2x32xbf16>
    %cst_27 = arith.constant dense<0.000000e+00> : vector<2x128xf32>
    %170 = tpu.matmul %169, %8, %cst_27 {dimension_numbers = #tpu.dot_dimension_numbers<[1], [0], [0], [1], [0, 0, 1, 1], [], []>} : vector<2x32xbf16>, vector<32x128xbf16>, vector<2x128xf32> -> vector<2x128xf32>
    %171 = vector.extract_strided_slice %168 {offsets = [0, 0], sizes = [2, 128], strides = [1, 1]} : vector<2x256xf32> to vector<2x128xf32>
    %172 = arith.addf %171, %170 : vector<2x128xf32>
    %173 = vector.broadcast %9 : vector<1x128xf32> to vector<2x128xf32>
    %174 = arith.addf %172, %173 : vector<2x128xf32>
    %175 = arith.negf %174 : vector<2x128xf32>
    %176 = math.exp %175 : vector<2x128xf32>
    %cst_28 = arith.constant 1.000000e+00 : f32
    %177 = vector.broadcast %cst_28 : f32 to vector<2x128xf32>
    %178 = arith.addf %177, %176 : vector<2x128xf32>
    %179 = arith.divf %177, %178 : vector<2x128xf32>
    %180 = math.tanh %174 : vector<2x128xf32>
    %181 = vector.extract_strided_slice %179 {offsets = [0, 0], sizes = [2, 32], strides = [1, 1]} : vector<2x128xf32> to vector<2x32xf32>
    %182 = vector.extract_strided_slice %179 {offsets = [0, 32], sizes = [2, 32], strides = [1, 1]} : vector<2x128xf32> to vector<2x32xf32>
    %183 = vector.extract_strided_slice %180 {offsets = [0, 64], sizes = [2, 32], strides = [1, 1]} : vector<2x128xf32> to vector<2x32xf32>
    %184 = vector.extract_strided_slice %179 {offsets = [0, 96], sizes = [2, 32], strides = [1, 1]} : vector<2x128xf32> to vector<2x32xf32>
    %185 = arith.mulf %182, %145 : vector<2x32xf32>
    %186 = arith.mulf %181, %183 : vector<2x32xf32>
    %187 = arith.addf %185, %186 : vector<2x32xf32>
    %188 = math.tanh %187 : vector<2x32xf32>
    %189 = arith.mulf %184, %188 : vector<2x32xf32>
    %190 = vector.extract_strided_slice %168 {offsets = [0, 128], sizes = [2, 128], strides = [1, 1]} : vector<2x256xf32> to vector<2x128xf32>
    %191 = vector.extract_strided_slice %18 {offsets = [0, 4, 0], sizes = [2, 1, 128], strides = [1, 1, 1]} : vector<2x16x128xf32> to vector<2x1x128xf32>
    %192 = vector.shape_cast %191 : vector<2x1x128xf32> to vector<2x128xf32>
    %193 = arith.addf %192, %190 : vector<2x128xf32>
    %194 = arith.negf %193 : vector<2x128xf32>
    %195 = math.exp %194 : vector<2x128xf32>
    %cst_29 = arith.constant 1.000000e+00 : f32
    %196 = vector.broadcast %cst_29 : f32 to vector<2x128xf32>
    %197 = arith.addf %196, %195 : vector<2x128xf32>
    %198 = arith.divf %196, %197 : vector<2x128xf32>
    %199 = math.tanh %193 : vector<2x128xf32>
    %200 = vector.extract_strided_slice %198 {offsets = [0, 0], sizes = [2, 32], strides = [1, 1]} : vector<2x128xf32> to vector<2x32xf32>
    %201 = vector.extract_strided_slice %198 {offsets = [0, 32], sizes = [2, 32], strides = [1, 1]} : vector<2x128xf32> to vector<2x32xf32>
    %202 = vector.extract_strided_slice %199 {offsets = [0, 64], sizes = [2, 32], strides = [1, 1]} : vector<2x128xf32> to vector<2x32xf32>
    %203 = vector.extract_strided_slice %198 {offsets = [0, 96], sizes = [2, 32], strides = [1, 1]} : vector<2x128xf32> to vector<2x32xf32>
    %204 = arith.mulf %201, %164 : vector<2x32xf32>
    %205 = arith.mulf %200, %202 : vector<2x32xf32>
    %206 = arith.addf %204, %205 : vector<2x32xf32>
    %207 = math.tanh %206 : vector<2x32xf32>
    %208 = arith.mulf %203, %207 : vector<2x32xf32>
    %209 = arith.truncf %208 : vector<2x32xf32> to vector<2x32xbf16>
    %cst_30 = arith.constant dense<0.000000e+00> : vector<2x256xf32>
    %210 = tpu.matmul %209, %11, %cst_30 {dimension_numbers = #tpu.dot_dimension_numbers<[1], [0], [0], [1], [0, 0, 1, 1], [], []>} : vector<2x32xbf16>, vector<32x256xbf16>, vector<2x256xf32> -> vector<2x256xf32>
    %211 = arith.truncf %189 : vector<2x32xf32> to vector<2x32xbf16>
    %cst_31 = arith.constant dense<0.000000e+00> : vector<2x128xf32>
    %212 = tpu.matmul %211, %8, %cst_31 {dimension_numbers = #tpu.dot_dimension_numbers<[1], [0], [0], [1], [0, 0, 1, 1], [], []>} : vector<2x32xbf16>, vector<32x128xbf16>, vector<2x128xf32> -> vector<2x128xf32>
    %213 = vector.extract_strided_slice %210 {offsets = [0, 0], sizes = [2, 128], strides = [1, 1]} : vector<2x256xf32> to vector<2x128xf32>
    %214 = arith.addf %213, %212 : vector<2x128xf32>
    %215 = vector.broadcast %9 : vector<1x128xf32> to vector<2x128xf32>
    %216 = arith.addf %214, %215 : vector<2x128xf32>
    %217 = arith.negf %216 : vector<2x128xf32>
    %218 = math.exp %217 : vector<2x128xf32>
    %cst_32 = arith.constant 1.000000e+00 : f32
    %219 = vector.broadcast %cst_32 : f32 to vector<2x128xf32>
    %220 = arith.addf %219, %218 : vector<2x128xf32>
    %221 = arith.divf %219, %220 : vector<2x128xf32>
    %222 = math.tanh %216 : vector<2x128xf32>
    %223 = vector.extract_strided_slice %221 {offsets = [0, 0], sizes = [2, 32], strides = [1, 1]} : vector<2x128xf32> to vector<2x32xf32>
    %224 = vector.extract_strided_slice %221 {offsets = [0, 32], sizes = [2, 32], strides = [1, 1]} : vector<2x128xf32> to vector<2x32xf32>
    %225 = vector.extract_strided_slice %222 {offsets = [0, 64], sizes = [2, 32], strides = [1, 1]} : vector<2x128xf32> to vector<2x32xf32>
    %226 = vector.extract_strided_slice %221 {offsets = [0, 96], sizes = [2, 32], strides = [1, 1]} : vector<2x128xf32> to vector<2x32xf32>
    %227 = arith.mulf %224, %187 : vector<2x32xf32>
    %228 = arith.mulf %223, %225 : vector<2x32xf32>
    %229 = arith.addf %227, %228 : vector<2x32xf32>
    %230 = math.tanh %229 : vector<2x32xf32>
    %231 = arith.mulf %226, %230 : vector<2x32xf32>
    %232 = vector.extract_strided_slice %210 {offsets = [0, 128], sizes = [2, 128], strides = [1, 1]} : vector<2x256xf32> to vector<2x128xf32>
    %233 = vector.extract_strided_slice %18 {offsets = [0, 5, 0], sizes = [2, 1, 128], strides = [1, 1, 1]} : vector<2x16x128xf32> to vector<2x1x128xf32>
    %234 = vector.shape_cast %233 : vector<2x1x128xf32> to vector<2x128xf32>
    %235 = arith.addf %234, %232 : vector<2x128xf32>
    %236 = arith.negf %235 : vector<2x128xf32>
    %237 = math.exp %236 : vector<2x128xf32>
    %cst_33 = arith.constant 1.000000e+00 : f32
    %238 = vector.broadcast %cst_33 : f32 to vector<2x128xf32>
    %239 = arith.addf %238, %237 : vector<2x128xf32>
    %240 = arith.divf %238, %239 : vector<2x128xf32>
    %241 = math.tanh %235 : vector<2x128xf32>
    %242 = vector.extract_strided_slice %240 {offsets = [0, 0], sizes = [2, 32], strides = [1, 1]} : vector<2x128xf32> to vector<2x32xf32>
    %243 = vector.extract_strided_slice %240 {offsets = [0, 32], sizes = [2, 32], strides = [1, 1]} : vector<2x128xf32> to vector<2x32xf32>
    %244 = vector.extract_strided_slice %241 {offsets = [0, 64], sizes = [2, 32], strides = [1, 1]} : vector<2x128xf32> to vector<2x32xf32>
    %245 = vector.extract_strided_slice %240 {offsets = [0, 96], sizes = [2, 32], strides = [1, 1]} : vector<2x128xf32> to vector<2x32xf32>
    %246 = arith.mulf %243, %206 : vector<2x32xf32>
    %247 = arith.mulf %242, %244 : vector<2x32xf32>
    %248 = arith.addf %246, %247 : vector<2x32xf32>
    %249 = math.tanh %248 : vector<2x32xf32>
    %250 = arith.mulf %245, %249 : vector<2x32xf32>
    %251 = arith.truncf %250 : vector<2x32xf32> to vector<2x32xbf16>
    %cst_34 = arith.constant dense<0.000000e+00> : vector<2x256xf32>
    %252 = tpu.matmul %251, %11, %cst_34 {dimension_numbers = #tpu.dot_dimension_numbers<[1], [0], [0], [1], [0, 0, 1, 1], [], []>} : vector<2x32xbf16>, vector<32x256xbf16>, vector<2x256xf32> -> vector<2x256xf32>
    %253 = arith.truncf %231 : vector<2x32xf32> to vector<2x32xbf16>
    %cst_35 = arith.constant dense<0.000000e+00> : vector<2x128xf32>
    %254 = tpu.matmul %253, %8, %cst_35 {dimension_numbers = #tpu.dot_dimension_numbers<[1], [0], [0], [1], [0, 0, 1, 1], [], []>} : vector<2x32xbf16>, vector<32x128xbf16>, vector<2x128xf32> -> vector<2x128xf32>
    %255 = vector.extract_strided_slice %252 {offsets = [0, 0], sizes = [2, 128], strides = [1, 1]} : vector<2x256xf32> to vector<2x128xf32>
    %256 = arith.addf %255, %254 : vector<2x128xf32>
    %257 = vector.broadcast %9 : vector<1x128xf32> to vector<2x128xf32>
    %258 = arith.addf %256, %257 : vector<2x128xf32>
    %259 = arith.negf %258 : vector<2x128xf32>
    %260 = math.exp %259 : vector<2x128xf32>
    %cst_36 = arith.constant 1.000000e+00 : f32
    %261 = vector.broadcast %cst_36 : f32 to vector<2x128xf32>
    %262 = arith.addf %261, %260 : vector<2x128xf32>
    %263 = arith.divf %261, %262 : vector<2x128xf32>
    %264 = math.tanh %258 : vector<2x128xf32>
    %265 = vector.extract_strided_slice %263 {offsets = [0, 0], sizes = [2, 32], strides = [1, 1]} : vector<2x128xf32> to vector<2x32xf32>
    %266 = vector.extract_strided_slice %263 {offsets = [0, 32], sizes = [2, 32], strides = [1, 1]} : vector<2x128xf32> to vector<2x32xf32>
    %267 = vector.extract_strided_slice %264 {offsets = [0, 64], sizes = [2, 32], strides = [1, 1]} : vector<2x128xf32> to vector<2x32xf32>
    %268 = vector.extract_strided_slice %263 {offsets = [0, 96], sizes = [2, 32], strides = [1, 1]} : vector<2x128xf32> to vector<2x32xf32>
    %269 = arith.mulf %266, %229 : vector<2x32xf32>
    %270 = arith.mulf %265, %267 : vector<2x32xf32>
    %271 = arith.addf %269, %270 : vector<2x32xf32>
    %272 = math.tanh %271 : vector<2x32xf32>
    %273 = arith.mulf %268, %272 : vector<2x32xf32>
    %274 = vector.extract_strided_slice %252 {offsets = [0, 128], sizes = [2, 128], strides = [1, 1]} : vector<2x256xf32> to vector<2x128xf32>
    %275 = vector.extract_strided_slice %18 {offsets = [0, 6, 0], sizes = [2, 1, 128], strides = [1, 1, 1]} : vector<2x16x128xf32> to vector<2x1x128xf32>
    %276 = vector.shape_cast %275 : vector<2x1x128xf32> to vector<2x128xf32>
    %277 = arith.addf %276, %274 : vector<2x128xf32>
    %278 = arith.negf %277 : vector<2x128xf32>
    %279 = math.exp %278 : vector<2x128xf32>
    %cst_37 = arith.constant 1.000000e+00 : f32
    %280 = vector.broadcast %cst_37 : f32 to vector<2x128xf32>
    %281 = arith.addf %280, %279 : vector<2x128xf32>
    %282 = arith.divf %280, %281 : vector<2x128xf32>
    %283 = math.tanh %277 : vector<2x128xf32>
    %284 = vector.extract_strided_slice %282 {offsets = [0, 0], sizes = [2, 32], strides = [1, 1]} : vector<2x128xf32> to vector<2x32xf32>
    %285 = vector.extract_strided_slice %282 {offsets = [0, 32], sizes = [2, 32], strides = [1, 1]} : vector<2x128xf32> to vector<2x32xf32>
    %286 = vector.extract_strided_slice %283 {offsets = [0, 64], sizes = [2, 32], strides = [1, 1]} : vector<2x128xf32> to vector<2x32xf32>
    %287 = vector.extract_strided_slice %282 {offsets = [0, 96], sizes = [2, 32], strides = [1, 1]} : vector<2x128xf32> to vector<2x32xf32>
    %288 = arith.mulf %285, %248 : vector<2x32xf32>
    %289 = arith.mulf %284, %286 : vector<2x32xf32>
    %290 = arith.addf %288, %289 : vector<2x32xf32>
    %291 = math.tanh %290 : vector<2x32xf32>
    %292 = arith.mulf %287, %291 : vector<2x32xf32>
    %293 = arith.truncf %292 : vector<2x32xf32> to vector<2x32xbf16>
    %cst_38 = arith.constant dense<0.000000e+00> : vector<2x256xf32>
    %294 = tpu.matmul %293, %11, %cst_38 {dimension_numbers = #tpu.dot_dimension_numbers<[1], [0], [0], [1], [0, 0, 1, 1], [], []>} : vector<2x32xbf16>, vector<32x256xbf16>, vector<2x256xf32> -> vector<2x256xf32>
    %295 = arith.truncf %273 : vector<2x32xf32> to vector<2x32xbf16>
    %cst_39 = arith.constant dense<0.000000e+00> : vector<2x128xf32>
    %296 = tpu.matmul %295, %8, %cst_39 {dimension_numbers = #tpu.dot_dimension_numbers<[1], [0], [0], [1], [0, 0, 1, 1], [], []>} : vector<2x32xbf16>, vector<32x128xbf16>, vector<2x128xf32> -> vector<2x128xf32>
    %297 = vector.extract_strided_slice %294 {offsets = [0, 0], sizes = [2, 128], strides = [1, 1]} : vector<2x256xf32> to vector<2x128xf32>
    %298 = arith.addf %297, %296 : vector<2x128xf32>
    %299 = vector.broadcast %9 : vector<1x128xf32> to vector<2x128xf32>
    %300 = arith.addf %298, %299 : vector<2x128xf32>
    %301 = arith.negf %300 : vector<2x128xf32>
    %302 = math.exp %301 : vector<2x128xf32>
    %cst_40 = arith.constant 1.000000e+00 : f32
    %303 = vector.broadcast %cst_40 : f32 to vector<2x128xf32>
    %304 = arith.addf %303, %302 : vector<2x128xf32>
    %305 = arith.divf %303, %304 : vector<2x128xf32>
    %306 = math.tanh %300 : vector<2x128xf32>
    %307 = vector.extract_strided_slice %305 {offsets = [0, 0], sizes = [2, 32], strides = [1, 1]} : vector<2x128xf32> to vector<2x32xf32>
    %308 = vector.extract_strided_slice %305 {offsets = [0, 32], sizes = [2, 32], strides = [1, 1]} : vector<2x128xf32> to vector<2x32xf32>
    %309 = vector.extract_strided_slice %306 {offsets = [0, 64], sizes = [2, 32], strides = [1, 1]} : vector<2x128xf32> to vector<2x32xf32>
    %310 = vector.extract_strided_slice %305 {offsets = [0, 96], sizes = [2, 32], strides = [1, 1]} : vector<2x128xf32> to vector<2x32xf32>
    %311 = arith.mulf %308, %271 : vector<2x32xf32>
    %312 = arith.mulf %307, %309 : vector<2x32xf32>
    %313 = arith.addf %311, %312 : vector<2x32xf32>
    %314 = math.tanh %313 : vector<2x32xf32>
    %315 = arith.mulf %310, %314 : vector<2x32xf32>
    %316 = vector.extract_strided_slice %294 {offsets = [0, 128], sizes = [2, 128], strides = [1, 1]} : vector<2x256xf32> to vector<2x128xf32>
    %317 = vector.extract_strided_slice %18 {offsets = [0, 7, 0], sizes = [2, 1, 128], strides = [1, 1, 1]} : vector<2x16x128xf32> to vector<2x1x128xf32>
    %318 = vector.shape_cast %317 : vector<2x1x128xf32> to vector<2x128xf32>
    %319 = arith.addf %318, %316 : vector<2x128xf32>
    %320 = arith.negf %319 : vector<2x128xf32>
    %321 = math.exp %320 : vector<2x128xf32>
    %cst_41 = arith.constant 1.000000e+00 : f32
    %322 = vector.broadcast %cst_41 : f32 to vector<2x128xf32>
    %323 = arith.addf %322, %321 : vector<2x128xf32>
    %324 = arith.divf %322, %323 : vector<2x128xf32>
    %325 = math.tanh %319 : vector<2x128xf32>
    %326 = vector.extract_strided_slice %324 {offsets = [0, 0], sizes = [2, 32], strides = [1, 1]} : vector<2x128xf32> to vector<2x32xf32>
    %327 = vector.extract_strided_slice %324 {offsets = [0, 32], sizes = [2, 32], strides = [1, 1]} : vector<2x128xf32> to vector<2x32xf32>
    %328 = vector.extract_strided_slice %325 {offsets = [0, 64], sizes = [2, 32], strides = [1, 1]} : vector<2x128xf32> to vector<2x32xf32>
    %329 = vector.extract_strided_slice %324 {offsets = [0, 96], sizes = [2, 32], strides = [1, 1]} : vector<2x128xf32> to vector<2x32xf32>
    %330 = arith.mulf %327, %290 : vector<2x32xf32>
    %331 = arith.mulf %326, %328 : vector<2x32xf32>
    %332 = arith.addf %330, %331 : vector<2x32xf32>
    %333 = math.tanh %332 : vector<2x32xf32>
    %334 = arith.mulf %329, %333 : vector<2x32xf32>
    %335 = arith.truncf %334 : vector<2x32xf32> to vector<2x32xbf16>
    %cst_42 = arith.constant dense<0.000000e+00> : vector<2x256xf32>
    %336 = tpu.matmul %335, %11, %cst_42 {dimension_numbers = #tpu.dot_dimension_numbers<[1], [0], [0], [1], [0, 0, 1, 1], [], []>} : vector<2x32xbf16>, vector<32x256xbf16>, vector<2x256xf32> -> vector<2x256xf32>
    %337 = arith.truncf %315 : vector<2x32xf32> to vector<2x32xbf16>
    %cst_43 = arith.constant dense<0.000000e+00> : vector<2x128xf32>
    %338 = tpu.matmul %337, %8, %cst_43 {dimension_numbers = #tpu.dot_dimension_numbers<[1], [0], [0], [1], [0, 0, 1, 1], [], []>} : vector<2x32xbf16>, vector<32x128xbf16>, vector<2x128xf32> -> vector<2x128xf32>
    %339 = vector.extract_strided_slice %336 {offsets = [0, 0], sizes = [2, 128], strides = [1, 1]} : vector<2x256xf32> to vector<2x128xf32>
    %340 = arith.addf %339, %338 : vector<2x128xf32>
    %341 = vector.broadcast %9 : vector<1x128xf32> to vector<2x128xf32>
    %342 = arith.addf %340, %341 : vector<2x128xf32>
    %343 = arith.negf %342 : vector<2x128xf32>
    %344 = math.exp %343 : vector<2x128xf32>
    %cst_44 = arith.constant 1.000000e+00 : f32
    %345 = vector.broadcast %cst_44 : f32 to vector<2x128xf32>
    %346 = arith.addf %345, %344 : vector<2x128xf32>
    %347 = arith.divf %345, %346 : vector<2x128xf32>
    %348 = math.tanh %342 : vector<2x128xf32>
    %349 = vector.extract_strided_slice %347 {offsets = [0, 0], sizes = [2, 32], strides = [1, 1]} : vector<2x128xf32> to vector<2x32xf32>
    %350 = vector.extract_strided_slice %347 {offsets = [0, 32], sizes = [2, 32], strides = [1, 1]} : vector<2x128xf32> to vector<2x32xf32>
    %351 = vector.extract_strided_slice %348 {offsets = [0, 64], sizes = [2, 32], strides = [1, 1]} : vector<2x128xf32> to vector<2x32xf32>
    %352 = vector.extract_strided_slice %347 {offsets = [0, 96], sizes = [2, 32], strides = [1, 1]} : vector<2x128xf32> to vector<2x32xf32>
    %353 = arith.mulf %350, %313 : vector<2x32xf32>
    %354 = arith.mulf %349, %351 : vector<2x32xf32>
    %355 = arith.addf %353, %354 : vector<2x32xf32>
    %356 = math.tanh %355 : vector<2x32xf32>
    %357 = arith.mulf %352, %356 : vector<2x32xf32>
    %358 = vector.extract_strided_slice %336 {offsets = [0, 128], sizes = [2, 128], strides = [1, 1]} : vector<2x256xf32> to vector<2x128xf32>
    %359 = vector.extract_strided_slice %18 {offsets = [0, 8, 0], sizes = [2, 1, 128], strides = [1, 1, 1]} : vector<2x16x128xf32> to vector<2x1x128xf32>
    %360 = vector.shape_cast %359 : vector<2x1x128xf32> to vector<2x128xf32>
    %361 = arith.addf %360, %358 : vector<2x128xf32>
    %362 = arith.negf %361 : vector<2x128xf32>
    %363 = math.exp %362 : vector<2x128xf32>
    %cst_45 = arith.constant 1.000000e+00 : f32
    %364 = vector.broadcast %cst_45 : f32 to vector<2x128xf32>
    %365 = arith.addf %364, %363 : vector<2x128xf32>
    %366 = arith.divf %364, %365 : vector<2x128xf32>
    %367 = math.tanh %361 : vector<2x128xf32>
    %368 = vector.extract_strided_slice %366 {offsets = [0, 0], sizes = [2, 32], strides = [1, 1]} : vector<2x128xf32> to vector<2x32xf32>
    %369 = vector.extract_strided_slice %366 {offsets = [0, 32], sizes = [2, 32], strides = [1, 1]} : vector<2x128xf32> to vector<2x32xf32>
    %370 = vector.extract_strided_slice %367 {offsets = [0, 64], sizes = [2, 32], strides = [1, 1]} : vector<2x128xf32> to vector<2x32xf32>
    %371 = vector.extract_strided_slice %366 {offsets = [0, 96], sizes = [2, 32], strides = [1, 1]} : vector<2x128xf32> to vector<2x32xf32>
    %372 = arith.mulf %369, %332 : vector<2x32xf32>
    %373 = arith.mulf %368, %370 : vector<2x32xf32>
    %374 = arith.addf %372, %373 : vector<2x32xf32>
    %375 = math.tanh %374 : vector<2x32xf32>
    %376 = arith.mulf %371, %375 : vector<2x32xf32>
    %377 = arith.truncf %376 : vector<2x32xf32> to vector<2x32xbf16>
    %cst_46 = arith.constant dense<0.000000e+00> : vector<2x256xf32>
    %378 = tpu.matmul %377, %11, %cst_46 {dimension_numbers = #tpu.dot_dimension_numbers<[1], [0], [0], [1], [0, 0, 1, 1], [], []>} : vector<2x32xbf16>, vector<32x256xbf16>, vector<2x256xf32> -> vector<2x256xf32>
    %379 = arith.truncf %357 : vector<2x32xf32> to vector<2x32xbf16>
    %cst_47 = arith.constant dense<0.000000e+00> : vector<2x128xf32>
    %380 = tpu.matmul %379, %8, %cst_47 {dimension_numbers = #tpu.dot_dimension_numbers<[1], [0], [0], [1], [0, 0, 1, 1], [], []>} : vector<2x32xbf16>, vector<32x128xbf16>, vector<2x128xf32> -> vector<2x128xf32>
    %381 = vector.extract_strided_slice %378 {offsets = [0, 0], sizes = [2, 128], strides = [1, 1]} : vector<2x256xf32> to vector<2x128xf32>
    %382 = arith.addf %381, %380 : vector<2x128xf32>
    %383 = vector.broadcast %9 : vector<1x128xf32> to vector<2x128xf32>
    %384 = arith.addf %382, %383 : vector<2x128xf32>
    %385 = arith.negf %384 : vector<2x128xf32>
    %386 = math.exp %385 : vector<2x128xf32>
    %cst_48 = arith.constant 1.000000e+00 : f32
    %387 = vector.broadcast %cst_48 : f32 to vector<2x128xf32>
    %388 = arith.addf %387, %386 : vector<2x128xf32>
    %389 = arith.divf %387, %388 : vector<2x128xf32>
    %390 = math.tanh %384 : vector<2x128xf32>
    %391 = vector.extract_strided_slice %389 {offsets = [0, 0], sizes = [2, 32], strides = [1, 1]} : vector<2x128xf32> to vector<2x32xf32>
    %392 = vector.extract_strided_slice %389 {offsets = [0, 32], sizes = [2, 32], strides = [1, 1]} : vector<2x128xf32> to vector<2x32xf32>
    %393 = vector.extract_strided_slice %390 {offsets = [0, 64], sizes = [2, 32], strides = [1, 1]} : vector<2x128xf32> to vector<2x32xf32>
    %394 = vector.extract_strided_slice %389 {offsets = [0, 96], sizes = [2, 32], strides = [1, 1]} : vector<2x128xf32> to vector<2x32xf32>
    %395 = arith.mulf %392, %355 : vector<2x32xf32>
    %396 = arith.mulf %391, %393 : vector<2x32xf32>
    %397 = arith.addf %395, %396 : vector<2x32xf32>
    %398 = math.tanh %397 : vector<2x32xf32>
    %399 = arith.mulf %394, %398 : vector<2x32xf32>
    %400 = vector.extract_strided_slice %378 {offsets = [0, 128], sizes = [2, 128], strides = [1, 1]} : vector<2x256xf32> to vector<2x128xf32>
    %401 = vector.extract_strided_slice %18 {offsets = [0, 9, 0], sizes = [2, 1, 128], strides = [1, 1, 1]} : vector<2x16x128xf32> to vector<2x1x128xf32>
    %402 = vector.shape_cast %401 : vector<2x1x128xf32> to vector<2x128xf32>
    %403 = arith.addf %402, %400 : vector<2x128xf32>
    %404 = arith.negf %403 : vector<2x128xf32>
    %405 = math.exp %404 : vector<2x128xf32>
    %cst_49 = arith.constant 1.000000e+00 : f32
    %406 = vector.broadcast %cst_49 : f32 to vector<2x128xf32>
    %407 = arith.addf %406, %405 : vector<2x128xf32>
    %408 = arith.divf %406, %407 : vector<2x128xf32>
    %409 = math.tanh %403 : vector<2x128xf32>
    %410 = vector.extract_strided_slice %408 {offsets = [0, 0], sizes = [2, 32], strides = [1, 1]} : vector<2x128xf32> to vector<2x32xf32>
    %411 = vector.extract_strided_slice %408 {offsets = [0, 32], sizes = [2, 32], strides = [1, 1]} : vector<2x128xf32> to vector<2x32xf32>
    %412 = vector.extract_strided_slice %409 {offsets = [0, 64], sizes = [2, 32], strides = [1, 1]} : vector<2x128xf32> to vector<2x32xf32>
    %413 = vector.extract_strided_slice %408 {offsets = [0, 96], sizes = [2, 32], strides = [1, 1]} : vector<2x128xf32> to vector<2x32xf32>
    %414 = arith.mulf %411, %374 : vector<2x32xf32>
    %415 = arith.mulf %410, %412 : vector<2x32xf32>
    %416 = arith.addf %414, %415 : vector<2x32xf32>
    %417 = math.tanh %416 : vector<2x32xf32>
    %418 = arith.mulf %413, %417 : vector<2x32xf32>
    %419 = arith.truncf %418 : vector<2x32xf32> to vector<2x32xbf16>
    %cst_50 = arith.constant dense<0.000000e+00> : vector<2x256xf32>
    %420 = tpu.matmul %419, %11, %cst_50 {dimension_numbers = #tpu.dot_dimension_numbers<[1], [0], [0], [1], [0, 0, 1, 1], [], []>} : vector<2x32xbf16>, vector<32x256xbf16>, vector<2x256xf32> -> vector<2x256xf32>
    %421 = arith.truncf %399 : vector<2x32xf32> to vector<2x32xbf16>
    %cst_51 = arith.constant dense<0.000000e+00> : vector<2x128xf32>
    %422 = tpu.matmul %421, %8, %cst_51 {dimension_numbers = #tpu.dot_dimension_numbers<[1], [0], [0], [1], [0, 0, 1, 1], [], []>} : vector<2x32xbf16>, vector<32x128xbf16>, vector<2x128xf32> -> vector<2x128xf32>
    %423 = vector.extract_strided_slice %420 {offsets = [0, 0], sizes = [2, 128], strides = [1, 1]} : vector<2x256xf32> to vector<2x128xf32>
    %424 = arith.addf %423, %422 : vector<2x128xf32>
    %425 = vector.broadcast %9 : vector<1x128xf32> to vector<2x128xf32>
    %426 = arith.addf %424, %425 : vector<2x128xf32>
    %427 = arith.negf %426 : vector<2x128xf32>
    %428 = math.exp %427 : vector<2x128xf32>
    %cst_52 = arith.constant 1.000000e+00 : f32
    %429 = vector.broadcast %cst_52 : f32 to vector<2x128xf32>
    %430 = arith.addf %429, %428 : vector<2x128xf32>
    %431 = arith.divf %429, %430 : vector<2x128xf32>
    %432 = math.tanh %426 : vector<2x128xf32>
    %433 = vector.extract_strided_slice %431 {offsets = [0, 0], sizes = [2, 32], strides = [1, 1]} : vector<2x128xf32> to vector<2x32xf32>
    %434 = vector.extract_strided_slice %431 {offsets = [0, 32], sizes = [2, 32], strides = [1, 1]} : vector<2x128xf32> to vector<2x32xf32>
    %435 = vector.extract_strided_slice %432 {offsets = [0, 64], sizes = [2, 32], strides = [1, 1]} : vector<2x128xf32> to vector<2x32xf32>
    %436 = vector.extract_strided_slice %431 {offsets = [0, 96], sizes = [2, 32], strides = [1, 1]} : vector<2x128xf32> to vector<2x32xf32>
    %437 = arith.mulf %434, %397 : vector<2x32xf32>
    %438 = arith.mulf %433, %435 : vector<2x32xf32>
    %439 = arith.addf %437, %438 : vector<2x32xf32>
    %440 = math.tanh %439 : vector<2x32xf32>
    %441 = arith.mulf %436, %440 : vector<2x32xf32>
    %442 = vector.extract_strided_slice %420 {offsets = [0, 128], sizes = [2, 128], strides = [1, 1]} : vector<2x256xf32> to vector<2x128xf32>
    %443 = vector.extract_strided_slice %18 {offsets = [0, 10, 0], sizes = [2, 1, 128], strides = [1, 1, 1]} : vector<2x16x128xf32> to vector<2x1x128xf32>
    %444 = vector.shape_cast %443 : vector<2x1x128xf32> to vector<2x128xf32>
    %445 = arith.addf %444, %442 : vector<2x128xf32>
    %446 = arith.negf %445 : vector<2x128xf32>
    %447 = math.exp %446 : vector<2x128xf32>
    %cst_53 = arith.constant 1.000000e+00 : f32
    %448 = vector.broadcast %cst_53 : f32 to vector<2x128xf32>
    %449 = arith.addf %448, %447 : vector<2x128xf32>
    %450 = arith.divf %448, %449 : vector<2x128xf32>
    %451 = math.tanh %445 : vector<2x128xf32>
    %452 = vector.extract_strided_slice %450 {offsets = [0, 0], sizes = [2, 32], strides = [1, 1]} : vector<2x128xf32> to vector<2x32xf32>
    %453 = vector.extract_strided_slice %450 {offsets = [0, 32], sizes = [2, 32], strides = [1, 1]} : vector<2x128xf32> to vector<2x32xf32>
    %454 = vector.extract_strided_slice %451 {offsets = [0, 64], sizes = [2, 32], strides = [1, 1]} : vector<2x128xf32> to vector<2x32xf32>
    %455 = vector.extract_strided_slice %450 {offsets = [0, 96], sizes = [2, 32], strides = [1, 1]} : vector<2x128xf32> to vector<2x32xf32>
    %456 = arith.mulf %453, %416 : vector<2x32xf32>
    %457 = arith.mulf %452, %454 : vector<2x32xf32>
    %458 = arith.addf %456, %457 : vector<2x32xf32>
    %459 = math.tanh %458 : vector<2x32xf32>
    %460 = arith.mulf %455, %459 : vector<2x32xf32>
    %461 = arith.truncf %460 : vector<2x32xf32> to vector<2x32xbf16>
    %cst_54 = arith.constant dense<0.000000e+00> : vector<2x256xf32>
    %462 = tpu.matmul %461, %11, %cst_54 {dimension_numbers = #tpu.dot_dimension_numbers<[1], [0], [0], [1], [0, 0, 1, 1], [], []>} : vector<2x32xbf16>, vector<32x256xbf16>, vector<2x256xf32> -> vector<2x256xf32>
    %463 = arith.truncf %441 : vector<2x32xf32> to vector<2x32xbf16>
    %cst_55 = arith.constant dense<0.000000e+00> : vector<2x128xf32>
    %464 = tpu.matmul %463, %8, %cst_55 {dimension_numbers = #tpu.dot_dimension_numbers<[1], [0], [0], [1], [0, 0, 1, 1], [], []>} : vector<2x32xbf16>, vector<32x128xbf16>, vector<2x128xf32> -> vector<2x128xf32>
    %465 = vector.extract_strided_slice %462 {offsets = [0, 0], sizes = [2, 128], strides = [1, 1]} : vector<2x256xf32> to vector<2x128xf32>
    %466 = arith.addf %465, %464 : vector<2x128xf32>
    %467 = vector.broadcast %9 : vector<1x128xf32> to vector<2x128xf32>
    %468 = arith.addf %466, %467 : vector<2x128xf32>
    %469 = arith.negf %468 : vector<2x128xf32>
    %470 = math.exp %469 : vector<2x128xf32>
    %cst_56 = arith.constant 1.000000e+00 : f32
    %471 = vector.broadcast %cst_56 : f32 to vector<2x128xf32>
    %472 = arith.addf %471, %470 : vector<2x128xf32>
    %473 = arith.divf %471, %472 : vector<2x128xf32>
    %474 = math.tanh %468 : vector<2x128xf32>
    %475 = vector.extract_strided_slice %473 {offsets = [0, 0], sizes = [2, 32], strides = [1, 1]} : vector<2x128xf32> to vector<2x32xf32>
    %476 = vector.extract_strided_slice %473 {offsets = [0, 32], sizes = [2, 32], strides = [1, 1]} : vector<2x128xf32> to vector<2x32xf32>
    %477 = vector.extract_strided_slice %474 {offsets = [0, 64], sizes = [2, 32], strides = [1, 1]} : vector<2x128xf32> to vector<2x32xf32>
    %478 = vector.extract_strided_slice %473 {offsets = [0, 96], sizes = [2, 32], strides = [1, 1]} : vector<2x128xf32> to vector<2x32xf32>
    %479 = arith.mulf %476, %439 : vector<2x32xf32>
    %480 = arith.mulf %475, %477 : vector<2x32xf32>
    %481 = arith.addf %479, %480 : vector<2x32xf32>
    %482 = math.tanh %481 : vector<2x32xf32>
    %483 = arith.mulf %478, %482 : vector<2x32xf32>
    %484 = vector.extract_strided_slice %462 {offsets = [0, 128], sizes = [2, 128], strides = [1, 1]} : vector<2x256xf32> to vector<2x128xf32>
    %485 = vector.extract_strided_slice %18 {offsets = [0, 11, 0], sizes = [2, 1, 128], strides = [1, 1, 1]} : vector<2x16x128xf32> to vector<2x1x128xf32>
    %486 = vector.shape_cast %485 : vector<2x1x128xf32> to vector<2x128xf32>
    %487 = arith.addf %486, %484 : vector<2x128xf32>
    %488 = arith.negf %487 : vector<2x128xf32>
    %489 = math.exp %488 : vector<2x128xf32>
    %cst_57 = arith.constant 1.000000e+00 : f32
    %490 = vector.broadcast %cst_57 : f32 to vector<2x128xf32>
    %491 = arith.addf %490, %489 : vector<2x128xf32>
    %492 = arith.divf %490, %491 : vector<2x128xf32>
    %493 = math.tanh %487 : vector<2x128xf32>
    %494 = vector.extract_strided_slice %492 {offsets = [0, 0], sizes = [2, 32], strides = [1, 1]} : vector<2x128xf32> to vector<2x32xf32>
    %495 = vector.extract_strided_slice %492 {offsets = [0, 32], sizes = [2, 32], strides = [1, 1]} : vector<2x128xf32> to vector<2x32xf32>
    %496 = vector.extract_strided_slice %493 {offsets = [0, 64], sizes = [2, 32], strides = [1, 1]} : vector<2x128xf32> to vector<2x32xf32>
    %497 = vector.extract_strided_slice %492 {offsets = [0, 96], sizes = [2, 32], strides = [1, 1]} : vector<2x128xf32> to vector<2x32xf32>
    %498 = arith.mulf %495, %458 : vector<2x32xf32>
    %499 = arith.mulf %494, %496 : vector<2x32xf32>
    %500 = arith.addf %498, %499 : vector<2x32xf32>
    %501 = math.tanh %500 : vector<2x32xf32>
    %502 = arith.mulf %497, %501 : vector<2x32xf32>
    %503 = arith.truncf %502 : vector<2x32xf32> to vector<2x32xbf16>
    %cst_58 = arith.constant dense<0.000000e+00> : vector<2x256xf32>
    %504 = tpu.matmul %503, %11, %cst_58 {dimension_numbers = #tpu.dot_dimension_numbers<[1], [0], [0], [1], [0, 0, 1, 1], [], []>} : vector<2x32xbf16>, vector<32x256xbf16>, vector<2x256xf32> -> vector<2x256xf32>
    %505 = arith.truncf %483 : vector<2x32xf32> to vector<2x32xbf16>
    %cst_59 = arith.constant dense<0.000000e+00> : vector<2x128xf32>
    %506 = tpu.matmul %505, %8, %cst_59 {dimension_numbers = #tpu.dot_dimension_numbers<[1], [0], [0], [1], [0, 0, 1, 1], [], []>} : vector<2x32xbf16>, vector<32x128xbf16>, vector<2x128xf32> -> vector<2x128xf32>
    %507 = vector.extract_strided_slice %504 {offsets = [0, 0], sizes = [2, 128], strides = [1, 1]} : vector<2x256xf32> to vector<2x128xf32>
    %508 = arith.addf %507, %506 : vector<2x128xf32>
    %509 = vector.broadcast %9 : vector<1x128xf32> to vector<2x128xf32>
    %510 = arith.addf %508, %509 : vector<2x128xf32>
    %511 = arith.negf %510 : vector<2x128xf32>
    %512 = math.exp %511 : vector<2x128xf32>
    %cst_60 = arith.constant 1.000000e+00 : f32
    %513 = vector.broadcast %cst_60 : f32 to vector<2x128xf32>
    %514 = arith.addf %513, %512 : vector<2x128xf32>
    %515 = arith.divf %513, %514 : vector<2x128xf32>
    %516 = math.tanh %510 : vector<2x128xf32>
    %517 = vector.extract_strided_slice %515 {offsets = [0, 0], sizes = [2, 32], strides = [1, 1]} : vector<2x128xf32> to vector<2x32xf32>
    %518 = vector.extract_strided_slice %515 {offsets = [0, 32], sizes = [2, 32], strides = [1, 1]} : vector<2x128xf32> to vector<2x32xf32>
    %519 = vector.extract_strided_slice %516 {offsets = [0, 64], sizes = [2, 32], strides = [1, 1]} : vector<2x128xf32> to vector<2x32xf32>
    %520 = vector.extract_strided_slice %515 {offsets = [0, 96], sizes = [2, 32], strides = [1, 1]} : vector<2x128xf32> to vector<2x32xf32>
    %521 = arith.mulf %518, %481 : vector<2x32xf32>
    %522 = arith.mulf %517, %519 : vector<2x32xf32>
    %523 = arith.addf %521, %522 : vector<2x32xf32>
    %524 = math.tanh %523 : vector<2x32xf32>
    %525 = arith.mulf %520, %524 : vector<2x32xf32>
    %526 = vector.extract_strided_slice %504 {offsets = [0, 128], sizes = [2, 128], strides = [1, 1]} : vector<2x256xf32> to vector<2x128xf32>
    %527 = vector.extract_strided_slice %18 {offsets = [0, 12, 0], sizes = [2, 1, 128], strides = [1, 1, 1]} : vector<2x16x128xf32> to vector<2x1x128xf32>
    %528 = vector.shape_cast %527 : vector<2x1x128xf32> to vector<2x128xf32>
    %529 = arith.addf %528, %526 : vector<2x128xf32>
    %530 = arith.negf %529 : vector<2x128xf32>
    %531 = math.exp %530 : vector<2x128xf32>
    %cst_61 = arith.constant 1.000000e+00 : f32
    %532 = vector.broadcast %cst_61 : f32 to vector<2x128xf32>
    %533 = arith.addf %532, %531 : vector<2x128xf32>
    %534 = arith.divf %532, %533 : vector<2x128xf32>
    %535 = math.tanh %529 : vector<2x128xf32>
    %536 = vector.extract_strided_slice %534 {offsets = [0, 0], sizes = [2, 32], strides = [1, 1]} : vector<2x128xf32> to vector<2x32xf32>
    %537 = vector.extract_strided_slice %534 {offsets = [0, 32], sizes = [2, 32], strides = [1, 1]} : vector<2x128xf32> to vector<2x32xf32>
    %538 = vector.extract_strided_slice %535 {offsets = [0, 64], sizes = [2, 32], strides = [1, 1]} : vector<2x128xf32> to vector<2x32xf32>
    %539 = vector.extract_strided_slice %534 {offsets = [0, 96], sizes = [2, 32], strides = [1, 1]} : vector<2x128xf32> to vector<2x32xf32>
    %540 = arith.mulf %537, %500 : vector<2x32xf32>
    %541 = arith.mulf %536, %538 : vector<2x32xf32>
    %542 = arith.addf %540, %541 : vector<2x32xf32>
    %543 = math.tanh %542 : vector<2x32xf32>
    %544 = arith.mulf %539, %543 : vector<2x32xf32>
    %545 = arith.truncf %544 : vector<2x32xf32> to vector<2x32xbf16>
    %cst_62 = arith.constant dense<0.000000e+00> : vector<2x256xf32>
    %546 = tpu.matmul %545, %11, %cst_62 {dimension_numbers = #tpu.dot_dimension_numbers<[1], [0], [0], [1], [0, 0, 1, 1], [], []>} : vector<2x32xbf16>, vector<32x256xbf16>, vector<2x256xf32> -> vector<2x256xf32>
    %547 = arith.truncf %525 : vector<2x32xf32> to vector<2x32xbf16>
    %cst_63 = arith.constant dense<0.000000e+00> : vector<2x128xf32>
    %548 = tpu.matmul %547, %8, %cst_63 {dimension_numbers = #tpu.dot_dimension_numbers<[1], [0], [0], [1], [0, 0, 1, 1], [], []>} : vector<2x32xbf16>, vector<32x128xbf16>, vector<2x128xf32> -> vector<2x128xf32>
    %549 = vector.extract_strided_slice %546 {offsets = [0, 0], sizes = [2, 128], strides = [1, 1]} : vector<2x256xf32> to vector<2x128xf32>
    %550 = arith.addf %549, %548 : vector<2x128xf32>
    %551 = vector.broadcast %9 : vector<1x128xf32> to vector<2x128xf32>
    %552 = arith.addf %550, %551 : vector<2x128xf32>
    %553 = arith.negf %552 : vector<2x128xf32>
    %554 = math.exp %553 : vector<2x128xf32>
    %cst_64 = arith.constant 1.000000e+00 : f32
    %555 = vector.broadcast %cst_64 : f32 to vector<2x128xf32>
    %556 = arith.addf %555, %554 : vector<2x128xf32>
    %557 = arith.divf %555, %556 : vector<2x128xf32>
    %558 = math.tanh %552 : vector<2x128xf32>
    %559 = vector.extract_strided_slice %557 {offsets = [0, 0], sizes = [2, 32], strides = [1, 1]} : vector<2x128xf32> to vector<2x32xf32>
    %560 = vector.extract_strided_slice %557 {offsets = [0, 32], sizes = [2, 32], strides = [1, 1]} : vector<2x128xf32> to vector<2x32xf32>
    %561 = vector.extract_strided_slice %558 {offsets = [0, 64], sizes = [2, 32], strides = [1, 1]} : vector<2x128xf32> to vector<2x32xf32>
    %562 = vector.extract_strided_slice %557 {offsets = [0, 96], sizes = [2, 32], strides = [1, 1]} : vector<2x128xf32> to vector<2x32xf32>
    %563 = arith.mulf %560, %523 : vector<2x32xf32>
    %564 = arith.mulf %559, %561 : vector<2x32xf32>
    %565 = arith.addf %563, %564 : vector<2x32xf32>
    %566 = math.tanh %565 : vector<2x32xf32>
    %567 = arith.mulf %562, %566 : vector<2x32xf32>
    %568 = vector.extract_strided_slice %546 {offsets = [0, 128], sizes = [2, 128], strides = [1, 1]} : vector<2x256xf32> to vector<2x128xf32>
    %569 = vector.extract_strided_slice %18 {offsets = [0, 13, 0], sizes = [2, 1, 128], strides = [1, 1, 1]} : vector<2x16x128xf32> to vector<2x1x128xf32>
    %570 = vector.shape_cast %569 : vector<2x1x128xf32> to vector<2x128xf32>
    %571 = arith.addf %570, %568 : vector<2x128xf32>
    %572 = arith.negf %571 : vector<2x128xf32>
    %573 = math.exp %572 : vector<2x128xf32>
    %cst_65 = arith.constant 1.000000e+00 : f32
    %574 = vector.broadcast %cst_65 : f32 to vector<2x128xf32>
    %575 = arith.addf %574, %573 : vector<2x128xf32>
    %576 = arith.divf %574, %575 : vector<2x128xf32>
    %577 = math.tanh %571 : vector<2x128xf32>
    %578 = vector.extract_strided_slice %576 {offsets = [0, 0], sizes = [2, 32], strides = [1, 1]} : vector<2x128xf32> to vector<2x32xf32>
    %579 = vector.extract_strided_slice %576 {offsets = [0, 32], sizes = [2, 32], strides = [1, 1]} : vector<2x128xf32> to vector<2x32xf32>
    %580 = vector.extract_strided_slice %577 {offsets = [0, 64], sizes = [2, 32], strides = [1, 1]} : vector<2x128xf32> to vector<2x32xf32>
    %581 = vector.extract_strided_slice %576 {offsets = [0, 96], sizes = [2, 32], strides = [1, 1]} : vector<2x128xf32> to vector<2x32xf32>
    %582 = arith.mulf %579, %542 : vector<2x32xf32>
    %583 = arith.mulf %578, %580 : vector<2x32xf32>
    %584 = arith.addf %582, %583 : vector<2x32xf32>
    %585 = math.tanh %584 : vector<2x32xf32>
    %586 = arith.mulf %581, %585 : vector<2x32xf32>
    %587 = arith.truncf %586 : vector<2x32xf32> to vector<2x32xbf16>
    %cst_66 = arith.constant dense<0.000000e+00> : vector<2x256xf32>
    %588 = tpu.matmul %587, %11, %cst_66 {dimension_numbers = #tpu.dot_dimension_numbers<[1], [0], [0], [1], [0, 0, 1, 1], [], []>} : vector<2x32xbf16>, vector<32x256xbf16>, vector<2x256xf32> -> vector<2x256xf32>
    %589 = arith.truncf %567 : vector<2x32xf32> to vector<2x32xbf16>
    %cst_67 = arith.constant dense<0.000000e+00> : vector<2x128xf32>
    %590 = tpu.matmul %589, %8, %cst_67 {dimension_numbers = #tpu.dot_dimension_numbers<[1], [0], [0], [1], [0, 0, 1, 1], [], []>} : vector<2x32xbf16>, vector<32x128xbf16>, vector<2x128xf32> -> vector<2x128xf32>
    %591 = vector.extract_strided_slice %588 {offsets = [0, 0], sizes = [2, 128], strides = [1, 1]} : vector<2x256xf32> to vector<2x128xf32>
    %592 = arith.addf %591, %590 : vector<2x128xf32>
    %593 = vector.broadcast %9 : vector<1x128xf32> to vector<2x128xf32>
    %594 = arith.addf %592, %593 : vector<2x128xf32>
    %595 = arith.negf %594 : vector<2x128xf32>
    %596 = math.exp %595 : vector<2x128xf32>
    %cst_68 = arith.constant 1.000000e+00 : f32
    %597 = vector.broadcast %cst_68 : f32 to vector<2x128xf32>
    %598 = arith.addf %597, %596 : vector<2x128xf32>
    %599 = arith.divf %597, %598 : vector<2x128xf32>
    %600 = math.tanh %594 : vector<2x128xf32>
    %601 = vector.extract_strided_slice %599 {offsets = [0, 0], sizes = [2, 32], strides = [1, 1]} : vector<2x128xf32> to vector<2x32xf32>
    %602 = vector.extract_strided_slice %599 {offsets = [0, 32], sizes = [2, 32], strides = [1, 1]} : vector<2x128xf32> to vector<2x32xf32>
    %603 = vector.extract_strided_slice %600 {offsets = [0, 64], sizes = [2, 32], strides = [1, 1]} : vector<2x128xf32> to vector<2x32xf32>
    %604 = vector.extract_strided_slice %599 {offsets = [0, 96], sizes = [2, 32], strides = [1, 1]} : vector<2x128xf32> to vector<2x32xf32>
    %605 = arith.mulf %602, %565 : vector<2x32xf32>
    %606 = arith.mulf %601, %603 : vector<2x32xf32>
    %607 = arith.addf %605, %606 : vector<2x32xf32>
    %608 = math.tanh %607 : vector<2x32xf32>
    %609 = arith.mulf %604, %608 : vector<2x32xf32>
    %610 = vector.extract_strided_slice %588 {offsets = [0, 128], sizes = [2, 128], strides = [1, 1]} : vector<2x256xf32> to vector<2x128xf32>
    %611 = vector.extract_strided_slice %18 {offsets = [0, 14, 0], sizes = [2, 1, 128], strides = [1, 1, 1]} : vector<2x16x128xf32> to vector<2x1x128xf32>
    %612 = vector.shape_cast %611 : vector<2x1x128xf32> to vector<2x128xf32>
    %613 = arith.addf %612, %610 : vector<2x128xf32>
    %614 = arith.negf %613 : vector<2x128xf32>
    %615 = math.exp %614 : vector<2x128xf32>
    %cst_69 = arith.constant 1.000000e+00 : f32
    %616 = vector.broadcast %cst_69 : f32 to vector<2x128xf32>
    %617 = arith.addf %616, %615 : vector<2x128xf32>
    %618 = arith.divf %616, %617 : vector<2x128xf32>
    %619 = math.tanh %613 : vector<2x128xf32>
    %620 = vector.extract_strided_slice %618 {offsets = [0, 0], sizes = [2, 32], strides = [1, 1]} : vector<2x128xf32> to vector<2x32xf32>
    %621 = vector.extract_strided_slice %618 {offsets = [0, 32], sizes = [2, 32], strides = [1, 1]} : vector<2x128xf32> to vector<2x32xf32>
    %622 = vector.extract_strided_slice %619 {offsets = [0, 64], sizes = [2, 32], strides = [1, 1]} : vector<2x128xf32> to vector<2x32xf32>
    %623 = vector.extract_strided_slice %618 {offsets = [0, 96], sizes = [2, 32], strides = [1, 1]} : vector<2x128xf32> to vector<2x32xf32>
    %624 = arith.mulf %621, %584 : vector<2x32xf32>
    %625 = arith.mulf %620, %622 : vector<2x32xf32>
    %626 = arith.addf %624, %625 : vector<2x32xf32>
    %627 = math.tanh %626 : vector<2x32xf32>
    %628 = arith.mulf %623, %627 : vector<2x32xf32>
    %629 = arith.truncf %628 : vector<2x32xf32> to vector<2x32xbf16>
    %cst_70 = arith.constant dense<0.000000e+00> : vector<2x256xf32>
    %630 = tpu.matmul %629, %11, %cst_70 {dimension_numbers = #tpu.dot_dimension_numbers<[1], [0], [0], [1], [0, 0, 1, 1], [], []>} : vector<2x32xbf16>, vector<32x256xbf16>, vector<2x256xf32> -> vector<2x256xf32>
    %631 = arith.truncf %609 : vector<2x32xf32> to vector<2x32xbf16>
    %cst_71 = arith.constant dense<0.000000e+00> : vector<2x128xf32>
    %632 = tpu.matmul %631, %8, %cst_71 {dimension_numbers = #tpu.dot_dimension_numbers<[1], [0], [0], [1], [0, 0, 1, 1], [], []>} : vector<2x32xbf16>, vector<32x128xbf16>, vector<2x128xf32> -> vector<2x128xf32>
    %633 = vector.extract_strided_slice %630 {offsets = [0, 0], sizes = [2, 128], strides = [1, 1]} : vector<2x256xf32> to vector<2x128xf32>
    %634 = arith.addf %633, %632 : vector<2x128xf32>
    %635 = vector.broadcast %9 : vector<1x128xf32> to vector<2x128xf32>
    %636 = arith.addf %634, %635 : vector<2x128xf32>
    %637 = arith.negf %636 : vector<2x128xf32>
    %638 = math.exp %637 : vector<2x128xf32>
    %cst_72 = arith.constant 1.000000e+00 : f32
    %639 = vector.broadcast %cst_72 : f32 to vector<2x128xf32>
    %640 = arith.addf %639, %638 : vector<2x128xf32>
    %641 = arith.divf %639, %640 : vector<2x128xf32>
    %642 = math.tanh %636 : vector<2x128xf32>
    %643 = vector.extract_strided_slice %641 {offsets = [0, 0], sizes = [2, 32], strides = [1, 1]} : vector<2x128xf32> to vector<2x32xf32>
    %644 = vector.extract_strided_slice %641 {offsets = [0, 32], sizes = [2, 32], strides = [1, 1]} : vector<2x128xf32> to vector<2x32xf32>
    %645 = vector.extract_strided_slice %642 {offsets = [0, 64], sizes = [2, 32], strides = [1, 1]} : vector<2x128xf32> to vector<2x32xf32>
    %646 = vector.extract_strided_slice %641 {offsets = [0, 96], sizes = [2, 32], strides = [1, 1]} : vector<2x128xf32> to vector<2x32xf32>
    %647 = arith.mulf %644, %607 : vector<2x32xf32>
    %648 = arith.mulf %643, %645 : vector<2x32xf32>
    %649 = arith.addf %647, %648 : vector<2x32xf32>
    %650 = math.tanh %649 : vector<2x32xf32>
    %651 = arith.mulf %646, %650 : vector<2x32xf32>
    %652 = vector.extract_strided_slice %630 {offsets = [0, 128], sizes = [2, 128], strides = [1, 1]} : vector<2x256xf32> to vector<2x128xf32>
    %653 = vector.extract_strided_slice %18 {offsets = [0, 15, 0], sizes = [2, 1, 128], strides = [1, 1, 1]} : vector<2x16x128xf32> to vector<2x1x128xf32>
    %654 = vector.shape_cast %653 : vector<2x1x128xf32> to vector<2x128xf32>
    %655 = arith.addf %654, %652 : vector<2x128xf32>
    %656 = arith.negf %655 : vector<2x128xf32>
    %657 = math.exp %656 : vector<2x128xf32>
    %cst_73 = arith.constant 1.000000e+00 : f32
    %658 = vector.broadcast %cst_73 : f32 to vector<2x128xf32>
    %659 = arith.addf %658, %657 : vector<2x128xf32>
    %660 = arith.divf %658, %659 : vector<2x128xf32>
    %661 = math.tanh %655 : vector<2x128xf32>
    %662 = vector.extract_strided_slice %660 {offsets = [0, 0], sizes = [2, 32], strides = [1, 1]} : vector<2x128xf32> to vector<2x32xf32>
    %663 = vector.extract_strided_slice %660 {offsets = [0, 32], sizes = [2, 32], strides = [1, 1]} : vector<2x128xf32> to vector<2x32xf32>
    %664 = vector.extract_strided_slice %661 {offsets = [0, 64], sizes = [2, 32], strides = [1, 1]} : vector<2x128xf32> to vector<2x32xf32>
    %665 = vector.extract_strided_slice %660 {offsets = [0, 96], sizes = [2, 32], strides = [1, 1]} : vector<2x128xf32> to vector<2x32xf32>
    %666 = arith.mulf %663, %626 : vector<2x32xf32>
    %667 = arith.mulf %662, %664 : vector<2x32xf32>
    %668 = arith.addf %666, %667 : vector<2x32xf32>
    %669 = math.tanh %668 : vector<2x32xf32>
    %670 = arith.mulf %665, %669 : vector<2x32xf32>
    %671 = arith.truncf %670 : vector<2x32xf32> to vector<2x32xbf16>
    %cst_74 = arith.constant dense<0.000000e+00> : vector<2x256xf32>
    %672 = tpu.matmul %671, %11, %cst_74 {dimension_numbers = #tpu.dot_dimension_numbers<[1], [0], [0], [1], [0, 0, 1, 1], [], []>} : vector<2x32xbf16>, vector<32x256xbf16>, vector<2x256xf32> -> vector<2x256xf32>
    %673 = arith.truncf %651 : vector<2x32xf32> to vector<2x32xbf16>
    %cst_75 = arith.constant dense<0.000000e+00> : vector<2x128xf32>
    %674 = tpu.matmul %673, %8, %cst_75 {dimension_numbers = #tpu.dot_dimension_numbers<[1], [0], [0], [1], [0, 0, 1, 1], [], []>} : vector<2x32xbf16>, vector<32x128xbf16>, vector<2x128xf32> -> vector<2x128xf32>
    %675 = vector.extract_strided_slice %672 {offsets = [0, 0], sizes = [2, 128], strides = [1, 1]} : vector<2x256xf32> to vector<2x128xf32>
    %676 = arith.addf %675, %674 : vector<2x128xf32>
    %677 = vector.broadcast %9 : vector<1x128xf32> to vector<2x128xf32>
    %678 = arith.addf %676, %677 : vector<2x128xf32>
    %679 = arith.negf %678 : vector<2x128xf32>
    %680 = math.exp %679 : vector<2x128xf32>
    %cst_76 = arith.constant 1.000000e+00 : f32
    %681 = vector.broadcast %cst_76 : f32 to vector<2x128xf32>
    %682 = arith.addf %681, %680 : vector<2x128xf32>
    %683 = arith.divf %681, %682 : vector<2x128xf32>
    %684 = math.tanh %678 : vector<2x128xf32>
    %685 = vector.extract_strided_slice %683 {offsets = [0, 0], sizes = [2, 32], strides = [1, 1]} : vector<2x128xf32> to vector<2x32xf32>
    %686 = vector.extract_strided_slice %683 {offsets = [0, 32], sizes = [2, 32], strides = [1, 1]} : vector<2x128xf32> to vector<2x32xf32>
    %687 = vector.extract_strided_slice %684 {offsets = [0, 64], sizes = [2, 32], strides = [1, 1]} : vector<2x128xf32> to vector<2x32xf32>
    %688 = vector.extract_strided_slice %683 {offsets = [0, 96], sizes = [2, 32], strides = [1, 1]} : vector<2x128xf32> to vector<2x32xf32>
    %689 = arith.mulf %686, %649 : vector<2x32xf32>
    %690 = arith.mulf %685, %687 : vector<2x32xf32>
    %691 = arith.addf %689, %690 : vector<2x32xf32>
    %692 = math.tanh %691 : vector<2x32xf32>
    %693 = arith.mulf %688, %692 : vector<2x32xf32>
    %c120 = arith.constant 120 : index
    %c0_77 = arith.constant 0 : index
    %694 = vector.load %arg2[%c120, %c0_77] : memref<336x128xf32, #tpu.memory_space<vmem>>, vector<1x128xf32>
    %c128 = arith.constant 128 : index
    %c0_78 = arith.constant 0 : index
    %695 = vector.load %arg2[%c128, %c0_78] : memref<336x128xf32, #tpu.memory_space<vmem>>, vector<1x128xf32>
    %c32 = arith.constant 32 : index
    %c0_79 = arith.constant 0 : index
    %696 = vector.load %arg3[%c32, %c0_79] : memref<48x256xf32, #tpu.memory_space<vmem>>, vector<1x256xf32>
    %c40 = arith.constant 40 : index
    %c0_80 = arith.constant 0 : index
    %697 = vector.load %arg3[%c40, %c0_80] : memref<48x256xf32, #tpu.memory_space<vmem>>, vector<1x256xf32>
    %c136 = arith.constant 136 : index
    %c0_81 = arith.constant 0 : index
    %698 = vector.load %arg2[%c136, %c0_81] : memref<336x128xf32, #tpu.memory_space<vmem>>, vector<1x128xf32>
    %c144 = arith.constant 144 : index
    %c0_82 = arith.constant 0 : index
    %699 = vector.load %arg2[%c144, %c0_82] : memref<336x128xf32, #tpu.memory_space<vmem>>, vector<1x128xf32>
    %c56 = arith.constant 56 : index
    %c0_83 = arith.constant 0 : index
    %700 = vector.load %arg2[%c56, %c0_83] : memref<336x128xf32, #tpu.memory_space<vmem>>, vector<64x128xf32>
    %701 = arith.truncf %700 : vector<64x128xf32> to vector<64x128xbf16>
    %c0_84 = arith.constant 0 : index
    %c0_85 = arith.constant 0 : index
    %702 = vector.load %arg1[%c0_84, %c0_85] : memref<18x64xf32, #tpu.memory_space<vmem>>, vector<18x64xf32>
    %703 = arith.truncf %702 : vector<18x64xf32> to vector<18x64xbf16>
    %cst_86 = arith.constant dense<0.000000e+00> : vector<18x128xf32>
    %704 = tpu.matmul %703, %701, %cst_86 {dimension_numbers = #tpu.dot_dimension_numbers<[1], [0], [0], [1], [0, 0, 1, 1], [], []>} : vector<18x64xbf16>, vector<64x128xbf16>, vector<18x128xf32> -> vector<18x128xf32>
    %705 = vector.broadcast %694 : vector<1x128xf32> to vector<18x128xf32>
    %706 = arith.mulf %704, %705 : vector<18x128xf32>
    %707 = vector.broadcast %695 : vector<1x128xf32> to vector<18x128xf32>
    %708 = arith.addf %706, %707 : vector<18x128xf32>
    %cst_87 = arith.constant 0.000000e+00 : f32
    %709 = vector.broadcast %cst_87 : f32 to vector<18x128xf32>
    %710 = arith.maximumf %708, %709 : vector<18x128xf32>
    %c0_i32_88 = arith.constant 0 : i32
    %711 = tpu.memref_slice %arg9[%c0_i32_88] : memref<2x!tpu.dma_semaphore, #tpu.memory_space<semaphore_mem>> -> memref<1x!tpu.dma_semaphore, #tpu.memory_space<semaphore_mem>>
    %712 = tpu.memref_squeeze %711 : memref<1x!tpu.dma_semaphore, #tpu.memory_space<semaphore_mem>> -> memref<!tpu.dma_semaphore, #tpu.memory_space<semaphore_mem>>
    tpu.wait_dma2 semaphore(%712 : memref<!tpu.dma_semaphore, #tpu.memory_space<semaphore_mem>>) src(%arg4 : memref<640x256xbf16, #tpu.memory_space<any>>) dst(%arg7 : memref<640x256xbf16, #tpu.memory_space<vmem>>)
    %713 = vector.extract_strided_slice %710 {offsets = [0, 0], sizes = [5, 128], strides = [1, 1]} : vector<18x128xf32> to vector<5x128xf32>
    %714 = vector.extract_strided_slice %710 {offsets = [1, 0], sizes = [5, 128], strides = [1, 1]} : vector<18x128xf32> to vector<5x128xf32>
    %715 = vector.extract_strided_slice %710 {offsets = [2, 0], sizes = [5, 128], strides = [1, 1]} : vector<18x128xf32> to vector<5x128xf32>
    %716 = vector.extract_strided_slice %710 {offsets = [3, 0], sizes = [5, 128], strides = [1, 1]} : vector<18x128xf32> to vector<5x128xf32>
    %717 = vector.extract_strided_slice %710 {offsets = [4, 0], sizes = [5, 128], strides = [1, 1]} : vector<18x128xf32> to vector<5x128xf32>
    %718 = tpu.concatenate %713, %714, %715, %716, %717 in 1 : vector<5x128xf32>, vector<5x128xf32>, vector<5x128xf32>, vector<5x128xf32>, vector<5x128xf32> -> vector<5x640xf32>
    %719 = arith.truncf %718 : vector<5x640xf32> to vector<5x640xbf16>
    %c0_89 = arith.constant 0 : index
    %c0_90 = arith.constant 0 : index
    %720 = vector.load %arg7[%c0_89, %c0_90] : memref<640x256xbf16, #tpu.memory_space<vmem>>, vector<640x256xbf16>
    %cst_91 = arith.constant dense<0.000000e+00> : vector<5x256xf32>
    %721 = tpu.matmul %719, %720, %cst_91 {dimension_numbers = #tpu.dot_dimension_numbers<[1], [0], [0], [1], [0, 0, 1, 1], [], []>} : vector<5x640xbf16>, vector<640x256xbf16>, vector<5x256xf32> -> vector<5x256xf32>
    %722 = vector.broadcast %696 : vector<1x256xf32> to vector<5x256xf32>
    %723 = arith.mulf %721, %722 : vector<5x256xf32>
    %724 = vector.broadcast %697 : vector<1x256xf32> to vector<5x256xf32>
    %725 = arith.addf %723, %724 : vector<5x256xf32>
    %cst_92 = arith.constant 0.000000e+00 : f32
    %726 = vector.broadcast %cst_92 : f32 to vector<5x256xf32>
    %727 = arith.maximumf %725, %726 : vector<5x256xf32>
    %728 = vector.extract_strided_slice %710 {offsets = [9, 0], sizes = [5, 128], strides = [1, 1]} : vector<18x128xf32> to vector<5x128xf32>
    %729 = vector.extract_strided_slice %710 {offsets = [10, 0], sizes = [5, 128], strides = [1, 1]} : vector<18x128xf32> to vector<5x128xf32>
    %730 = vector.extract_strided_slice %710 {offsets = [11, 0], sizes = [5, 128], strides = [1, 1]} : vector<18x128xf32> to vector<5x128xf32>
    %731 = vector.extract_strided_slice %710 {offsets = [12, 0], sizes = [5, 128], strides = [1, 1]} : vector<18x128xf32> to vector<5x128xf32>
    %732 = vector.extract_strided_slice %710 {offsets = [13, 0], sizes = [5, 128], strides = [1, 1]} : vector<18x128xf32> to vector<5x128xf32>
    %733 = tpu.concatenate %728, %729, %730, %731, %732 in 1 : vector<5x128xf32>, vector<5x128xf32>, vector<5x128xf32>, vector<5x128xf32>, vector<5x128xf32> -> vector<5x640xf32>
    %734 = arith.truncf %733 : vector<5x640xf32> to vector<5x640xbf16>
    %c0_93 = arith.constant 0 : index
    %c0_94 = arith.constant 0 : index
    %735 = vector.load %arg7[%c0_93, %c0_94] : memref<640x256xbf16, #tpu.memory_space<vmem>>, vector<640x256xbf16>
    %cst_95 = arith.constant dense<0.000000e+00> : vector<5x256xf32>
    %736 = tpu.matmul %734, %735, %cst_95 {dimension_numbers = #tpu.dot_dimension_numbers<[1], [0], [0], [1], [0, 0, 1, 1], [], []>} : vector<5x640xbf16>, vector<640x256xbf16>, vector<5x256xf32> -> vector<5x256xf32>
    %737 = vector.broadcast %696 : vector<1x256xf32> to vector<5x256xf32>
    %738 = arith.mulf %736, %737 : vector<5x256xf32>
    %739 = vector.broadcast %697 : vector<1x256xf32> to vector<5x256xf32>
    %740 = arith.addf %738, %739 : vector<5x256xf32>
    %cst_96 = arith.constant 0.000000e+00 : f32
    %741 = vector.broadcast %cst_96 : f32 to vector<5x256xf32>
    %742 = arith.maximumf %740, %741 : vector<5x256xf32>
    %c1_i32_97 = arith.constant 1 : i32
    %743 = tpu.memref_slice %arg9[%c1_i32_97] : memref<2x!tpu.dma_semaphore, #tpu.memory_space<semaphore_mem>> -> memref<1x!tpu.dma_semaphore, #tpu.memory_space<semaphore_mem>>
    %744 = tpu.memref_squeeze %743 : memref<1x!tpu.dma_semaphore, #tpu.memory_space<semaphore_mem>> -> memref<!tpu.dma_semaphore, #tpu.memory_space<semaphore_mem>>
    tpu.wait_dma2 semaphore(%744 : memref<!tpu.dma_semaphore, #tpu.memory_space<semaphore_mem>>) src(%arg5 : memref<768x128xbf16, #tpu.memory_space<any>>) dst(%arg8 : memref<768x128xbf16, #tpu.memory_space<vmem>>)
    %745 = vector.extract_strided_slice %727 {offsets = [0, 0], sizes = [3, 256], strides = [1, 1]} : vector<5x256xf32> to vector<3x256xf32>
    %746 = vector.extract_strided_slice %727 {offsets = [1, 0], sizes = [3, 256], strides = [1, 1]} : vector<5x256xf32> to vector<3x256xf32>
    %747 = vector.extract_strided_slice %727 {offsets = [2, 0], sizes = [3, 256], strides = [1, 1]} : vector<5x256xf32> to vector<3x256xf32>
    %748 = tpu.concatenate %745, %746, %747 in 1 : vector<3x256xf32>, vector<3x256xf32>, vector<3x256xf32> -> vector<3x768xf32>
    %749 = arith.truncf %748 : vector<3x768xf32> to vector<3x768xbf16>
    %c0_98 = arith.constant 0 : index
    %c0_99 = arith.constant 0 : index
    %750 = vector.load %arg8[%c0_98, %c0_99] : memref<768x128xbf16, #tpu.memory_space<vmem>>, vector<768x128xbf16>
    %cst_100 = arith.constant dense<0.000000e+00> : vector<3x128xf32>
    %751 = tpu.matmul %749, %750, %cst_100 {dimension_numbers = #tpu.dot_dimension_numbers<[1], [0], [0], [1], [0, 0, 1, 1], [], []>} : vector<3x768xbf16>, vector<768x128xbf16>, vector<3x128xf32> -> vector<3x128xf32>
    %752 = vector.broadcast %698 : vector<1x128xf32> to vector<3x128xf32>
    %753 = arith.mulf %751, %752 : vector<3x128xf32>
    %754 = vector.broadcast %699 : vector<1x128xf32> to vector<3x128xf32>
    %755 = arith.addf %753, %754 : vector<3x128xf32>
    %cst_101 = arith.constant 0.000000e+00 : f32
    %756 = vector.broadcast %cst_101 : f32 to vector<3x128xf32>
    %757 = arith.maximumf %755, %756 : vector<3x128xf32>
    %cst_102 = arith.constant dense<0xFF800000> : vector<128xf32>
    %758 = vector.multi_reduction <maximumf>, %757, %cst_102 [0] : vector<3x128xf32> to vector<128xf32>
    %759 = vector.shape_cast %758 : vector<128xf32> to vector<1x128xf32>
    %760 = vector.extract_strided_slice %742 {offsets = [0, 0], sizes = [3, 256], strides = [1, 1]} : vector<5x256xf32> to vector<3x256xf32>
    %761 = vector.extract_strided_slice %742 {offsets = [1, 0], sizes = [3, 256], strides = [1, 1]} : vector<5x256xf32> to vector<3x256xf32>
    %762 = vector.extract_strided_slice %742 {offsets = [2, 0], sizes = [3, 256], strides = [1, 1]} : vector<5x256xf32> to vector<3x256xf32>
    %763 = tpu.concatenate %760, %761, %762 in 1 : vector<3x256xf32>, vector<3x256xf32>, vector<3x256xf32> -> vector<3x768xf32>
    %764 = arith.truncf %763 : vector<3x768xf32> to vector<3x768xbf16>
    %c0_103 = arith.constant 0 : index
    %c0_104 = arith.constant 0 : index
    %765 = vector.load %arg8[%c0_103, %c0_104] : memref<768x128xbf16, #tpu.memory_space<vmem>>, vector<768x128xbf16>
    %cst_105 = arith.constant dense<0.000000e+00> : vector<3x128xf32>
    %766 = tpu.matmul %764, %765, %cst_105 {dimension_numbers = #tpu.dot_dimension_numbers<[1], [0], [0], [1], [0, 0, 1, 1], [], []>} : vector<3x768xbf16>, vector<768x128xbf16>, vector<3x128xf32> -> vector<3x128xf32>
    %767 = vector.broadcast %698 : vector<1x128xf32> to vector<3x128xf32>
    %768 = arith.mulf %766, %767 : vector<3x128xf32>
    %769 = vector.broadcast %699 : vector<1x128xf32> to vector<3x128xf32>
    %770 = arith.addf %768, %769 : vector<3x128xf32>
    %cst_106 = arith.constant 0.000000e+00 : f32
    %771 = vector.broadcast %cst_106 : f32 to vector<3x128xf32>
    %772 = arith.maximumf %770, %771 : vector<3x128xf32>
    %cst_107 = arith.constant dense<0xFF800000> : vector<128xf32>
    %773 = vector.multi_reduction <maximumf>, %772, %cst_107 [0] : vector<3x128xf32> to vector<128xf32>
    %774 = vector.shape_cast %773 : vector<128xf32> to vector<1x128xf32>
    %775 = tpu.iota {dimensions = array<i32: 0>} : vector<2x128xi32>
    %cst_108 = arith.constant 0.000000e+00 : f32
    %776 = vector.broadcast %cst_108 : f32 to vector<2x128xf32>
    %c0_i32_109 = arith.constant 0 : i32
    %777 = vector.broadcast %c0_i32_109 : i32 to vector<2x128xi32>
    %778 = arith.cmpi eq, %775, %777 : vector<2x128xi32>
    %779 = vector.shape_cast %759 : vector<1x128xf32> to vector<1x128xf32>
    %780 = vector.broadcast %779 : vector<1x128xf32> to vector<2x128xf32>
    %781 = arith.select %778, %780, %776 : vector<2x128xi1>, vector<2x128xf32>
    %c1_i32_110 = arith.constant 1 : i32
    %782 = vector.broadcast %c1_i32_110 : i32 to vector<2x128xi32>
    %783 = arith.cmpi eq, %775, %782 : vector<2x128xi32>
    %784 = vector.shape_cast %774 : vector<1x128xf32> to vector<1x128xf32>
    %785 = vector.broadcast %784 : vector<1x128xf32> to vector<2x128xf32>
    %786 = arith.select %783, %785, %781 : vector<2x128xi1>, vector<2x128xf32>
    %c152 = arith.constant 152 : index
    %c0_111 = arith.constant 0 : index
    %787 = vector.load %arg2[%c152, %c0_111] : memref<336x128xf32, #tpu.memory_space<vmem>>, vector<32x128xf32>
    %c184 = arith.constant 184 : index
    %c0_112 = arith.constant 0 : index
    %788 = vector.load %arg2[%c184, %c0_112] : memref<336x128xf32, #tpu.memory_space<vmem>>, vector<128x128xf32>
    %c312 = arith.constant 312 : index
    %c0_113 = arith.constant 0 : index
    %789 = vector.load %arg2[%c312, %c0_113] : memref<336x128xf32, #tpu.memory_space<vmem>>, vector<1x128xf32>
    %c320 = arith.constant 320 : index
    %c0_114 = arith.constant 0 : index
    %790 = vector.load %arg2[%c320, %c0_114] : memref<336x128xf32, #tpu.memory_space<vmem>>, vector<1x128xf32>
    %c328 = arith.constant 328 : index
    %c0_115 = arith.constant 0 : index
    %791 = vector.load %arg2[%c328, %c0_115] : memref<336x128xf32, #tpu.memory_space<vmem>>, vector<1x1xf32>
    %cst_116 = arith.constant dense<0.000000e+00> : vector<2x128xf32>
    %792 = tpu.matmul %693, %787, %cst_116 {dimension_numbers = #tpu.dot_dimension_numbers<[1], [0], [0], [1], [0, 0, 1, 1], [], []>} : vector<2x32xf32>, vector<32x128xf32>, vector<2x128xf32> -> vector<2x128xf32>
    %cst_117 = arith.constant dense<0.000000e+00> : vector<2x128xf32>
    %793 = tpu.matmul %786, %788, %cst_117 {dimension_numbers = #tpu.dot_dimension_numbers<[1], [0], [0], [1], [0, 0, 1, 1], [], []>} : vector<2x128xf32>, vector<128x128xf32>, vector<2x128xf32> -> vector<2x128xf32>
    %794 = arith.addf %792, %793 : vector<2x128xf32>
    %795 = vector.broadcast %789 : vector<1x128xf32> to vector<2x128xf32>
    %796 = arith.addf %794, %795 : vector<2x128xf32>
    %cst_118 = arith.constant 0.000000e+00 : f32
    %797 = vector.broadcast %cst_118 : f32 to vector<2x128xf32>
    %798 = arith.maximumf %796, %797 : vector<2x128xf32>
    %799 = vector.broadcast %790 : vector<1x128xf32> to vector<2x128xf32>
    %800 = arith.mulf %798, %799 : vector<2x128xf32>
    %cst_119 = arith.constant dense<0.000000e+00> : vector<2xf32>
    %801 = vector.multi_reduction <add>, %800, %cst_119 [1] : vector<2x128xf32> to vector<2xf32>
    %802 = vector.shape_cast %801 : vector<2xf32> to vector<2x1xf32>
    %803 = vector.broadcast %791 : vector<1x1xf32> to vector<2x1xf32>
    %804 = arith.addf %802, %803 : vector<2x1xf32>
    %c0_120 = arith.constant 0 : index
    %c0_121 = arith.constant 0 : index
    %805 = vector.load %arg6[%c0_120, %c0_121] : memref<2x1xf32, #tpu.memory_space<vmem>>, vector<2x1xf32>
    tpu.vector_store %arg6[%c0_120, %c0_121], %804 {strides = array<i32>} : memref<2x1xf32, #tpu.memory_space<vmem>>, vector<2x1xf32>,
    return
  }
}

</mosaic_0001>

<llo_original>
// kernel: model_forward.1
$region0: #{model_forward.1}
  #allocation0 [shape = 'u32[]', space=smem, size = 0x4, offset = 0x4, fixed_abs, tag = 'smem constant byte address 0x4 - core index']
  #allocation1 [shape = 'u32[72,128]{1,0:T(1,128)}', space=vmem, size = 0x9000, scoped, tag = 'internal scratch']
  #allocation2 [shape = 'bf16[640,256]{1,0:T(8,128)(2,1)}', space=vmem, size = 0x50000, scoped, tag = 'scratch operand']
  #allocation3 [shape = 'bf16[768,128]{1,0:T(8,128)(2,1)}', space=vmem, size = 0x30000, scoped, tag = 'scratch operand']
  #allocation4 [shape = 's32[2]{0}', space=sflag, size = 0x8, scoped, tag = 'scratch operand']
  #allocation7 [shape = 's32[]', space=sflag, size = 0x4, offset = 0, fixed_abs, tag = 'sflag constant byte address 0x0 - dummy sync flag']
  #allocation8 [shape = 's32[]', space=sflag, size = 0x4, offset = 0, fixed_abs, tag = 'sflag constant byte address 0x0 - dummy sync flag']
  #allocation9 [shape = 's32[]', space=sflag, size = 0x4, offset = 0, fixed_abs, tag = 'sflag constant byte address 0x0 - dummy sync flag']
  #allocation10 [shape = 'u32[]', space=smem, size = 0x4, offset = 0x44, fixed_abs, tag = 'smem constant byte address 0x44 - assertion arg 0']
  #allocation11 [shape = 'u32[]', space=smem, size = 0x4, offset = 0x48, fixed_abs, tag = 'smem constant byte address 0x48 - assertion arg 1']
  %s0 = inlined_call_operand.vmem [shape: f32[2,16,8], index: 0, kind: input, shape index: {}]
  %s1 = inlined_call_operand.vmem [shape: f32[18,64], index: 1, kind: input, shape index: {}]
  %s2 = inlined_call_operand.hbm [shape: f32[336,128], index: 2, kind: input, shape index: {}]
  %s3 = inlined_call_operand.vmem [shape: f32[48,256], index: 3, kind: input, shape index: {}]
  %s4 = inlined_call_operand.vmem [shape: bf16[640,256], index: 4, kind: input, shape index: {}]
  %s5 = inlined_call_operand.hbm [shape: bf16[768,128], index: 5, kind: input, shape index: {}]
  %s6 = inlined_call_operand.vmem [shape: f32[2,1], index: 6, kind: output, shape index: {}]
  %s7 = sld [smem:[#allocation0]]
  $region53: #{model_forward.1} parent=0
    _
  %s9 = ssub.s32 1, %s7
  %s10 = scalar_select 0, %s9, %s7
  $region1: #{model_forward.1} parent=0
    #allocation5 [shape = 'u8[172032]{0}', space=vmem, size = 0x2a000, scoped, tag = 'input window, operand 2, single buffered']
    #allocation6 [shape = 's32[1]{0}', space=sflag, size = 0x4, scoped, tag = 'scoped memory for model_forward.1']
    %11 = vsyncpa [#allocation6], 0
    // Predicated region
    $region2: #{model_forward.1} parent=1 // pred_check
      _
    $region3: #{model_forward.1} parent=1 // pred_check_branch
      %13 = sbr.rel (0) target = $region5
    $region4: #{model_forward.1} parent=1 // pred_region
      _
    $region5: #{model_forward.1} parent=1 // pred_fallthru
      _
    // Predicated region
    $region6: #{model_forward.1} parent=1 // pred_check
      _
    $region7: #{model_forward.1} parent=1 // pred_check_branch
      %15 = sbr.rel (0) target = $region9
    $region8: #{model_forward.1} parent=1 // pred_region
      _
    $region9: #{model_forward.1} parent=1 // pred_fallthru
      _
    // Predicated region
    $region10: #{model_forward.1} parent=1 // pred_check
      _
    $region11: #{model_forward.1} parent=1 // pred_check_branch
      %17 = sbr.rel (0) target = $region13
    $region12: #{model_forward.1} parent=1 // pred_region
      %19 = vsyncadd [#allocation6], 0
      %s20 = sshll.u32 %s2, 4
      %s21 = int_to_ptr.hbm [resolvable:$true] %s20
      %s22 = sshll.u32 [#allocation5], 4
      %s23 = int_to_ptr.vmem [resolvable:$true] %s22
      %28 = dma.hbm_to_vmem [thread:$0]  %s21, 5376, %s23, [#allocation6], 128, 128, 8
    $region13: #{model_forward.1} parent=1 // pred_fallthru
      _
    // Predicated region
    $region14: #{model_forward.1} parent=1 // pred_check
      _
    $region15: #{model_forward.1} parent=1 // pred_check_branch
      %30 = sbr.rel (0) target = $region17
    $region16: #{model_forward.1} parent=1 // pred_region
      _
    $region17: #{model_forward.1} parent=1 // pred_fallthru
      _
    // Predicated region
    $region18: #{model_forward.1} parent=1 // pred_check
      _
    $region19: #{model_forward.1} parent=1 // pred_check_branch
      %32 = sbr.rel (0) target = $region21
    $region20: #{model_forward.1} parent=1 // pred_region
      %34 = dma.done [#allocation6], 5376
    $region21: #{model_forward.1} parent=1 // pred_fallthru
      _
    // Predicated region
    $region22: #{model_forward.1} parent=1 // pred_check
      _
    $region23: #{model_forward.1} parent=1 // pred_check_branch
      %37 = sbr.rel (0) target = $region25
    $region24: #{model_forward.1} parent=1 // pred_region
      loop: start=0, step=1, limit=1
      $region26: #{model_forward.1} parent=24 // loop_pre_header
        _
      $region27: #{model_forward.1} parent=24 // loop_header
        %s39 = sphi 0, %s43
        %p40 = scmp.ge.s32.totalorder %s39, 1
        %s44 = sphi %s4, %s4
        %s45 = sphi [#allocation2], [#allocation2]
      $region28: #{model_forward.1} parent=24 // loop_header_branch
        %42 = sbr.rel (%p40) target = $region32
      $region29: #{model_forward.1} parent=24 // loop_body
        %v46 = vld [vmem:[%s44] sm:$0xff]
        %47 = vst [vmem:[%s45] sm:$0xff] %v46
        %v48 = vld [vmem:[%s44 + $0x8] sm:$0xff]
        %49 = vst [vmem:[%s45 + $0x8] sm:$0xff] %v48
        %v50 = vld [vmem:[%s44 + $0x10] sm:$0xff]
        %51 = vst [vmem:[%s45 + $0x10] sm:$0xff] %v50
        %v52 = vld [vmem:[%s44 + $0x18] sm:$0xff]
        %53 = vst [vmem:[%s45 + $0x18] sm:$0xff] %v52
        %v54 = vld [vmem:[%s44 + $0x20] sm:$0xff]
        %55 = vst [vmem:[%s45 + $0x20] sm:$0xff] %v54
        %v56 = vld [vmem:[%s44 + $0x28] sm:$0xff]
        %57 = vst [vmem:[%s45 + $0x28] sm:$0xff] %v56
        %v58 = vld [vmem:[%s44 + $0x30] sm:$0xff]
        %59 = vst [vmem:[%s45 + $0x30] sm:$0xff] %v58
        %v60 = vld [vmem:[%s44 + $0x38] sm:$0xff]
        %61 = vst [vmem:[%s45 + $0x38] sm:$0xff] %v60
        %v62 = vld [vmem:[%s44 + $0x40] sm:$0xff]
        %63 = vst [vmem:[%s45 + $0x40] sm:$0xff] %v62
        %v64 = vld [vmem:[%s44 + $0x48] sm:$0xff]
        %65 = vst [vmem:[%s45 + $0x48] sm:$0xff] %v64
        %v66 = vld [vmem:[%s44 + $0x50] sm:$0xff]
        %67 = vst [vmem:[%s45 + $0x50] sm:$0xff] %v66
        %v68 = vld [vmem:[%s44 + $0x58] sm:$0xff]
        %69 = vst [vmem:[%s45 + $0x58] sm:$0xff] %v68
        %v70 = vld [vmem:[%s44 + $0x60] sm:$0xff]
        %71 = vst [vmem:[%s45 + $0x60] sm:$0xff] %v70
        %v72 = vld [vmem:[%s44 + $0x68] sm:$0xff]
        %73 = vst [vmem:[%s45 + $0x68] sm:$0xff] %v72
        %v74 = vld [vmem:[%s44 + $0x70] sm:$0xff]
        %75 = vst [vmem:[%s45 + $0x70] sm:$0xff] %v74
        %v76 = vld [vmem:[%s44 + $0x78] sm:$0xff]
        %77 = vst [vmem:[%s45 + $0x78] sm:$0xff] %v76
        %v78 = vld [vmem:[%s44 + $0x80] sm:$0xff]
        %79 = vst [vmem:[%s45 + $0x80] sm:$0xff] %v78
        %v80 = vld [vmem:[%s44 + $0x88] sm:$0xff]
        %81 = vst [vmem:[%s45 + $0x88] sm:$0xff] %v80
        %v82 = vld [vmem:[%s44 + $0x90] sm:$0xff]
        %83 = vst [vmem:[%s45 + $0x90] sm:$0xff] %v82
        %v84 = vld [vmem:[%s44 + $0x98] sm:$0xff]
        %85 = vst [vmem:[%s45 + $0x98] sm:$0xff] %v84
        %v86 = vld [vmem:[%s44 + $0xa0] sm:$0xff]
        %87 = vst [vmem:[%s45 + $0xa0] sm:$0xff] %v86
        %v88 = vld [vmem:[%s44 + $0xa8] sm:$0xff]
        %89 = vst [vmem:[%s45 + $0xa8] sm:$0xff] %v88
        %v90 = vld [vmem:[%s44 + $0xb0] sm:$0xff]
        %91 = vst [vmem:[%s45 + $0xb0] sm:$0xff] %v90
        %v92 = vld [vmem:[%s44 + $0xb8] sm:$0xff]
        %93 = vst [vmem:[%s45 + $0xb8] sm:$0xff] %v92
        %v94 = vld [vmem:[%s44 + $0xc0] sm:$0xff]
        %95 = vst [vmem:[%s45 + $0xc0] sm:$0xff] %v94
        %v96 = vld [vmem:[%s44 + $0xc8] sm:$0xff]
        %97 = vst [vmem:[%s45 + $0xc8] sm:$0xff] %v96
        %v98 = vld [vmem:[%s44 + $0xd0] sm:$0xff]
        %99 = vst [vmem:[%s45 + $0xd0] sm:$0xff] %v98
        %v100 = vld [vmem:[%s44 + $0xd8] sm:$0xff]
        %101 = vst [vmem:[%s45 + $0xd8] sm:$0xff] %v100
        %v102 = vld [vmem:[%s44 + $0xe0] sm:$0xff]
        %103 = vst [vmem:[%s45 + $0xe0] sm:$0xff] %v102
        %v104 = vld [vmem:[%s44 + $0xe8] sm:$0xff]
        %105 = vst [vmem:[%s45 + $0xe8] sm:$0xff] %v104
        %v106 = vld [vmem:[%s44 + $0xf0] sm:$0xff]
        %107 = vst [vmem:[%s45 + $0xf0] sm:$0xff] %v106
        %v108 = vld [vmem:[%s44 + $0xf8] sm:$0xff]
        %109 = vst [vmem:[%s45 + $0xf8] sm:$0xff] %v108
        %v110 = vld [vmem:[%s44 + $0x100] sm:$0xff]
        %111 = vst [vmem:[%s45 + $0x100] sm:$0xff] %v110
        %v112 = vld [vmem:[%s44 + $0x108] sm:$0xff]
        %113 = vst [vmem:[%s45 + $0x108] sm:$0xff] %v112
        %v114 = vld [vmem:[%s44 + $0x110] sm:$0xff]
        %115 = vst [vmem:[%s45 + $0x110] sm:$0xff] %v114
        %v116 = vld [vmem:[%s44 + $0x118] sm:$0xff]
        %117 = vst [vmem:[%s45 + $0x118] sm:$0xff] %v116
        %v118 = vld [vmem:[%s44 + $0x120] sm:$0xff]
        %119 = vst [vmem:[%s45 + $0x120] sm:$0xff] %v118
        %v120 = vld [vmem:[%s44 + $0x128] sm:$0xff]
        %121 = vst [vmem:[%s45 + $0x128] sm:$0xff] %v120
        %v122 = vld [vmem:[%s44 + $0x130] sm:$0xff]
        %123 = vst [vmem:[%s45 + $0x130] sm:$0xff] %v122
        %v124 = vld [vmem:[%s44 + $0x138] sm:$0xff]
        %125 = vst [vmem:[%s45 + $0x138] sm:$0xff] %v124
        %v126 = vld [vmem:[%s44 + $0x140] sm:$0xff]
        %127 = vst [vmem:[%s45 + $0x140] sm:$0xff] %v126
        %v128 = vld [vmem:[%s44 + $0x148] sm:$0xff]
        %129 = vst [vmem:[%s45 + $0x148] sm:$0xff] %v128
        %v130 = vld [vmem:[%s44 + $0x150] sm:$0xff]
        %131 = vst [vmem:[%s45 + $0x150] sm:$0xff] %v130
        %v132 = vld [vmem:[%s44 + $0x158] sm:$0xff]
        %133 = vst [vmem:[%s45 + $0x158] sm:$0xff] %v132
        %v134 = vld [vmem:[%s44 + $0x160] sm:$0xff]
        %135 = vst [vmem:[%s45 + $0x160] sm:$0xff] %v134
        %v136 = vld [vmem:[%s44 + $0x168] sm:$0xff]
        %137 = vst [vmem:[%s45 + $0x168] sm:$0xff] %v136
        %v138 = vld [vmem:[%s44 + $0x170] sm:$0xff]
        %139 = vst [vmem:[%s45 + $0x170] sm:$0xff] %v138
        %v140 = vld [vmem:[%s44 + $0x178] sm:$0xff]
        %141 = vst [vmem:[%s45 + $0x178] sm:$0xff] %v140
        %v142 = vld [vmem:[%s44 + $0x180] sm:$0xff]
        %143 = vst [vmem:[%s45 + $0x180] sm:$0xff] %v142
        %v144 = vld [vmem:[%s44 + $0x188] sm:$0xff]
        %145 = vst [vmem:[%s45 + $0x188] sm:$0xff] %v144
        %v146 = vld [vmem:[%s44 + $0x190] sm:$0xff]
        %147 = vst [vmem:[%s45 + $0x190] sm:$0xff] %v146
        %v148 = vld [vmem:[%s44 + $0x198] sm:$0xff]
        %149 = vst [vmem:[%s45 + $0x198] sm:$0xff] %v148
        %v150 = vld [vmem:[%s44 + $0x1a0] sm:$0xff]
        %151 = vst [vmem:[%s45 + $0x1a0] sm:$0xff] %v150
        %v152 = vld [vmem:[%s44 + $0x1a8] sm:$0xff]
        %153 = vst [vmem:[%s45 + $0x1a8] sm:$0xff] %v152
        %v154 = vld [vmem:[%s44 + $0x1b0] sm:$0xff]
        %155 = vst [vmem:[%s45 + $0x1b0] sm:$0xff] %v154
        %v156 = vld [vmem:[%s44 + $0x1b8] sm:$0xff]
        %157 = vst [vmem:[%s45 + $0x1b8] sm:$0xff] %v156
        %v158 = vld [vmem:[%s44 + $0x1c0] sm:$0xff]
        %159 = vst [vmem:[%s45 + $0x1c0] sm:$0xff] %v158
        %v160 = vld [vmem:[%s44 + $0x1c8] sm:$0xff]
        %161 = vst [vmem:[%s45 + $0x1c8] sm:$0xff] %v160
        %v162 = vld [vmem:[%s44 + $0x1d0] sm:$0xff]
        %163 = vst [vmem:[%s45 + $0x1d0] sm:$0xff] %v162
        %v164 = vld [vmem:[%s44 + $0x1d8] sm:$0xff]
        %165 = vst [vmem:[%s45 + $0x1d8] sm:$0xff] %v164
        %v166 = vld [vmem:[%s44 + $0x1e0] sm:$0xff]
        %167 = vst [vmem:[%s45 + $0x1e0] sm:$0xff] %v166
        %v168 = vld [vmem:[%s44 + $0x1e8] sm:$0xff]
        %169 = vst [vmem:[%s45 + $0x1e8] sm:$0xff] %v168
        %v170 = vld [vmem:[%s44 + $0x1f0] sm:$0xff]
        %171 = vst [vmem:[%s45 + $0x1f0] sm:$0xff] %v170
        %v172 = vld [vmem:[%s44 + $0x1f8] sm:$0xff]
        %173 = vst [vmem:[%s45 + $0x1f8] sm:$0xff] %v172
        %v174 = vld [vmem:[%s44 + $0x200] sm:$0xff]
        %175 = vst [vmem:[%s45 + $0x200] sm:$0xff] %v174
        %v176 = vld [vmem:[%s44 + $0x208] sm:$0xff]
        %177 = vst [vmem:[%s45 + $0x208] sm:$0xff] %v176
        %v178 = vld [vmem:[%s44 + $0x210] sm:$0xff]
        %179 = vst [vmem:[%s45 + $0x210] sm:$0xff] %v178
        %v180 = vld [vmem:[%s44 + $0x218] sm:$0xff]
        %181 = vst [vmem:[%s45 + $0x218] sm:$0xff] %v180
        %v182 = vld [vmem:[%s44 + $0x220] sm:$0xff]
        %183 = vst [vmem:[%s45 + $0x220] sm:$0xff] %v182
        %v184 = vld [vmem:[%s44 + $0x228] sm:$0xff]
        %185 = vst [vmem:[%s45 + $0x228] sm:$0xff] %v184
        %v186 = vld [vmem:[%s44 + $0x230] sm:$0xff]
        %187 = vst [vmem:[%s45 + $0x230] sm:$0xff] %v186
        %v188 = vld [vmem:[%s44 + $0x238] sm:$0xff]
        %189 = vst [vmem:[%s45 + $0x238] sm:$0xff] %v188
        %v190 = vld [vmem:[%s44 + $0x240] sm:$0xff]
        %191 = vst [vmem:[%s45 + $0x240] sm:$0xff] %v190
        %v192 = vld [vmem:[%s44 + $0x248] sm:$0xff]
        %193 = vst [vmem:[%s45 + $0x248] sm:$0xff] %v192
        %v194 = vld [vmem:[%s44 + $0x250] sm:$0xff]
        %195 = vst [vmem:[%s45 + $0x250] sm:$0xff] %v194
        %v196 = vld [vmem:[%s44 + $0x258] sm:$0xff]
        %197 = vst [vmem:[%s45 + $0x258] sm:$0xff] %v196
        %v198 = vld [vmem:[%s44 + $0x260] sm:$0xff]
        %199 = vst [vmem:[%s45 + $0x260] sm:$0xff] %v198
        %v200 = vld [vmem:[%s44 + $0x268] sm:$0xff]
        %201 = vst [vmem:[%s45 + $0x268] sm:$0xff] %v200
        %v202 = vld [vmem:[%s44 + $0x270] sm:$0xff]
        %203 = vst [vmem:[%s45 + $0x270] sm:$0xff] %v202
        %v204 = vld [vmem:[%s44 + $0x278] sm:$0xff]
        %205 = vst [vmem:[%s45 + $0x278] sm:$0xff] %v204
      $region30: #{model_forward.1} parent=24 // loop_footer
        %s43 = sadd.s32 1, %s39
      $region31: #{model_forward.1} parent=24 // loop_footer_branch
        %38 = sbr.rel target = $region27
      $region32: #{model_forward.1} parent=24 // loop_exit
        _
    $region25: #{model_forward.1} parent=1 // pred_fallthru
      _
    // Predicated region
    $region33: #{model_forward.1} parent=1 // pred_check
      _
    $region34: #{model_forward.1} parent=1 // pred_check_branch
      %207 = sbr.rel target = $region36
    $region35: #{model_forward.1} parent=1 // pred_region
      _
    $region36: #{model_forward.1} parent=1 // pred_fallthru
      _
    // Predicated region
    $region37: #{model_forward.1} parent=1 // pred_check
      _
    $region38: #{model_forward.1} parent=1 // pred_check_branch
      %210 = sbr.rel (0) target = $region40
    $region39: #{model_forward.1} parent=1 // pred_region
      %211 = vsyncadd [#allocation4], 10240
    $region40: #{model_forward.1} parent=1 // pred_fallthru
      _
    %s212 = scalar_lea.sflag [#allocation4], 1
    // Predicated region
    $region41: #{model_forward.1} parent=1 // pred_check
      _
    $region42: #{model_forward.1} parent=1 // pred_check_branch
      %214 = sbr.rel target = $region44
    $region43: #{model_forward.1} parent=1 // pred_region
      %215 = sst [smem:[#allocation10]] [#allocation9]
      %216 = sst [smem:[#allocation11]] [#allocation8]
    $region44: #{model_forward.1} parent=1 // pred_fallthru
      _
    %218 = shalt.err (0)
    %s220 = sshll.u32 %s5, 4
    %s221 = int_to_ptr.hbm [resolvable:$true] %s220
    %s222 = sshll.u32 [#allocation3], 4
    %s223 = int_to_ptr.vmem [resolvable:$true] %s222
    %225 = dma.hbm_to_vmem [thread:$0]  %s221, 6144, %s223, %s212
    %v226 = vld [vmem:[#allocation5] sm:$0xff]
    %v227 = vpack.c.bf16 %v226, %v226
    %v228 = vld [vmem:[#allocation5 + $0x8] sm:$0x1]
    %v229 = vld [vmem:[#allocation5 + $0x10] sm:$0xff]
    %v230 = vld [vmem:[#allocation5 + $0x18] sm:$0xff]
    %v231 = vld [vmem:[#allocation5 + $0x20] sm:$0xff]
    %v232 = vld [vmem:[#allocation5 + $0x28] sm:$0xff]
    %v233 = vpack.c.bf16 %v230, %v229
    %v234 = vpack.c.bf16 %v232, %v231
    %v235 = vld [vmem:[#allocation5 + $0x30] sm:$0x1]
    %v236 = vld [vmem:[%s3] sm:$0xff]
    %v237 = vld [vmem:[%s3 + $0x8] sm:$0xff]
    %v238 = vld [vmem:[%s3 + $0x10] sm:$0xff]
    %v239 = vld [vmem:[%s3 + $0x18] sm:$0xff]
    %v240 = vld [vmem:[%s3 + $0x20] sm:$0xff]
    %v241 = vld [vmem:[%s3 + $0x28] sm:$0xff]
    %v242 = vld [vmem:[%s3 + $0x30] sm:$0xff]
    %v243 = vld [vmem:[%s3 + $0x38] sm:$0xff]
    %v244 = vpack.c.bf16 %v238, %v236
    %v245 = vpack.c.bf16 %v239, %v237
    %v246 = vpack.c.bf16 %v242, %v240
    %v247 = vpack.c.bf16 %v243, %v241
    %v248 = vld [vmem:[%s0] sm:$0xff]
    %v249 = vld [vmem:[%s0 + $0x8] sm:$0xff]
    %v250 = vld [vmem:[%s0 + $0x10] sm:$0xff]
    %v251 = vld [vmem:[%s0 + $0x18] sm:$0xff]
    %v252 = vpack.c.bf16 %v249, %v248
    %v253 = vpack.c.bf16 %v251, %v250
    %v254 = vperm.slane %v228, 0
    %vm255 = vcmask 64512
    %v257 = vsel %vm255, %v252, 0
    %v260 = vsel %vm255, %v253, 0
    %vm262 = vcmask 1043456
    %v264 = vsel %vm262, %v227, 0
    %266 = vmatpush.bf16.msra.mxu0 0
    %267 = vmatpush.bf16.msra.mxu0 0
    %268 = vmatpush.bf16.msra.mxu0 0
    %269 = vmatpush.bf16.msra.mxu0 0
    %270 = vmatpush.bf16.msra.mxu0 0
    %271 = vmatpush.bf16.msra.mxu0 0
    %272 = vmatpush.bf16.msra.mxu0 0
    %273 = vmatpush.bf16.msra.mxu0 %v264
    %274 = vmatmul.bf16.gmra.mxu0 %v257
    %v275 = vpop.f32.mrf.mxu0
    %v276 = vadd.f32 %v254, %v275
    %v277 = vpop.f32.mrf.mxu0
    %v278 = vadd.f32 %v254, %v277
    %279 = vmatmul.bf16.gmra.mxu0 %v260
    %v280 = vpop.f32.mrf.mxu0
    %v281 = vadd.f32 %v254, %v280
    %v282 = vpop.f32.mrf.mxu0
    %v283 = vadd.f32 %v254, %v282
    %284 = vdwg.mxu0
    %v285 = vadd.f32 %v276, 0.0
    %v286 = vadd.f32 %v281, 0.0
    %v287 = vxor.u32 %v285, 2147483648
    %v288 = vxor.u32 %v286, 2147483648
    %v289 = vmul.f32 %v287, 1.442695
    %v290 = vpow.pop %v289
    %v291 = vmul.f32 %v288, 1.442695
    %v292 = vpow.pop %v291
    %v293 = vadd.f32 %v290, 1.0
    %v294 = vadd.f32 %v292, 1.0
    %v295 = vrcp.pop %v293
    %v296 = vmul.f32 %v293, %v295
    %v297 = vsub.f32 1.0, %v296
    %v298 = vmul.f32 %v295, %v297
    %v299 = vadd.f32 %v295, %v298
    %vm300 = vweird.f32 %v293
    %vm301 = vweird.f32 %v295
    %vm302 = vmor %vm300, %vm301
    %v303 = vsel %vm302, %v295, %v299
    %v304 = vand.u32 2147483647, %v293
    %vm305 = vcmp.eq.f32.partialorder %v304, 8.507059e+37
    %v306 = vand.u32 %v293, 2147483648
    %v307 = vor.u32 1.1754944e-38, %v306
    %v308 = vsel %vm305, %v307, %v303
    %v309 = vmul.f32 1.0, %v308
    %v310 = vrcp.pop %v294
    %v311 = vmul.f32 %v294, %v310
    %v312 = vsub.f32 1.0, %v311
    %v313 = vmul.f32 %v310, %v312
    %v314 = vadd.f32 %v310, %v313
    %vm315 = vweird.f32 %v294
    %vm316 = vweird.f32 %v310
    %vm317 = vmor %vm315, %vm316
    %v318 = vsel %vm317, %v310, %v314
    %v319 = vand.u32 2147483647, %v294
    %vm320 = vcmp.eq.f32.partialorder %v319, 8.507059e+37
    %v321 = vand.u32 %v294, 2147483648
    %v322 = vor.u32 1.1754944e-38, %v321
    %v323 = vsel %vm320, %v322, %v318
    %v324 = vmul.f32 1.0, %v323
    %v325 = vtanh.pop %v285
    %v326 = vtanh.pop %v286
    %v327 = vmul.f32 %v309, 0.0
    %v328 = vmul.f32 %v324, 0.0
    %331 = vrot.lane.b32.xlu0 %v325, 64
    %v332 = vpop.permute.xlu0 %331
    %333 = vrot.lane.b32.xlu0 %v326, 64
    %v334 = vpop.permute.xlu0 %333
    %v337 = vmul.f32 %v309, %v332
    %v338 = vmul.f32 %v324, %v334
    %341 = vrot.lane.b32.xlu0 %v337, 32
    %v342 = vpop.permute.xlu0 %341
    %343 = vrot.lane.b32.xlu0 %v338, 32
    %v344 = vpop.permute.xlu0 %343
    %v347 = vadd.f32 %v327, %v342
    %v348 = vadd.f32 %v328, %v344
    %v349 = vtanh.pop %v347
    %v350 = vtanh.pop %v348
    %353 = vrot.lane.b32.xlu0 %v349, 64
    %v354 = vpop.permute.xlu0 %353
    %355 = vrot.lane.b32.xlu0 %v350, 64
    %v356 = vpop.permute.xlu0 %355
    %v359 = vmul.f32 %v309, %v354
    %v360 = vmul.f32 %v324, %v356
    %v361 = vpack.c.bf16 %v359, %v359
    %v362 = vpack.c.bf16 %v360, %v360
    %v365 = vunpack.c.l.b16 %v361
    %v366 = vunpack.c.l.b16 %v362
    %v367 = vrot.slane %v366, 7
    %vm368 = vcmask 1041409
    %v369 = vsel %vm368, %v367, %v365
    %v370 = vpack.c.b16 %v369, %v369
    %371 = vrot.lane.b32.xlu0 %v370, 32
    %v372 = vpop.permute.xlu0 %371
    %vm373 = vcmask 261120
    %v375 = vsel %vm373, %v372, 0
    %377 = vmatpush.bf16.msra.mxu0 0
    %378 = vmatpush.bf16.msra.mxu0 0
    %379 = vmatpush.bf16.msra.mxu0 0
    %380 = vmatpush.bf16.msra.mxu0 0
    %381 = vmatpush.bf16.msra.mxu0 0
    %382 = vmatpush.bf16.msra.mxu0 0
    %383 = vmatpush.bf16.msra.mxu0 %v246
    %384 = vmatpush.bf16.msra.mxu0 %v244
    %385 = vmatmul.bf16.gmra.mxu0 %v375
    %v386 = vpop.f32.mrf.mxu0
    %v387 = vadd.f32 0.0, %v386
    %v388 = vpop.f32.mrf.mxu0
    %389 = vdwg.mxu0
    %390 = vmatpush.bf16.msra.mxu0 0
    %391 = vmatpush.bf16.msra.mxu0 0
    %392 = vmatpush.bf16.msra.mxu0 0
    %393 = vmatpush.bf16.msra.mxu0 0
    %394 = vmatpush.bf16.msra.mxu0 0
    %395 = vmatpush.bf16.msra.mxu0 0
    %396 = vmatpush.bf16.msra.mxu0 %v247
    %397 = vmatpush.bf16.msra.mxu0 %v245
    %398 = vmatmul.bf16.gmra.mxu0 %v375
    %v399 = vpop.f32.mrf.mxu0
    %v400 = vadd.f32 0.0, %v399
    %v401 = vpop.f32.mrf.mxu0
    %402 = vdwg.mxu0
    %v404 = vsel %vm373, 0, 0
    %406 = vmatpush.bf16.msra.mxu0 0
    %407 = vmatpush.bf16.msra.mxu0 0
    %408 = vmatpush.bf16.msra.mxu0 0
    %409 = vmatpush.bf16.msra.mxu0 0
    %410 = vmatpush.bf16.msra.mxu0 0
    %411 = vmatpush.bf16.msra.mxu0 0
    %412 = vmatpush.bf16.msra.mxu0 %v234
    %413 = vmatpush.bf16.msra.mxu0 %v233
    %414 = vmatmul.bf16.gmra.mxu0 %v404
    %v415 = vpop.f32.mrf.mxu0
    %v416 = vadd.f32 0.0, %v415
    %v417 = vpop.f32.mrf.mxu0
    %418 = vdwg.mxu0
    %v419 = vadd.f32 %v387, %v416
    %v420 = vperm.slane %v235, 0
    %v421 = vadd.f32 %v419, %v420
    %v422 = vxor.u32 %v421, 2147483648
    %v423 = vmul.f32 %v422, 1.442695
    %v424 = vpow.pop %v423
    %v425 = vadd.f32 %v424, 1.0
    %v426 = vrcp.pop %v425
    %v427 = vmul.f32 %v425, %v426
    %v428 = vsub.f32 1.0, %v427
    %v429 = vmul.f32 %v426, %v428
    %v430 = vadd.f32 %v426, %v429
    %vm431 = vweird.f32 %v425
    %vm432 = vweird.f32 %v426
    %vm433 = vmor %vm431, %vm432
    %v434 = vsel %vm433, %v426, %v430
    %v435 = vand.u32 2147483647, %v425
    %vm436 = vcmp.eq.f32.partialorder %v435, 8.507059e+37
    %v437 = vand.u32 %v425, 2147483648
    %v438 = vor.u32 1.1754944e-38, %v437
    %v439 = vsel %vm436, %v438, %v434
    %v440 = vmul.f32 1.0, %v439
    %v441 = vtanh.pop %v421
    %v442 = vmul.f32 %v440, 0.0
    %444 = vrot.lane.b32.xlu0 %v441, 64
    %v445 = vpop.permute.xlu0 %444
    %v447 = vmul.f32 %v440, %v445
    %449 = vrot.lane.b32.xlu0 %v447, 32
    %v450 = vpop.permute.xlu0 %449
    %v452 = vadd.f32 %v442, %v450
    %v453 = vtanh.pop %v452
    %455 = vrot.lane.b32.xlu0 %v453, 64
    %v456 = vpop.permute.xlu0 %455
    %v458 = vmul.f32 %v440, %v456
    %v460 = vrot.slane %v400, 7
    %v463 = vadd.f32 %v276, %v460
    %v464 = vadd.f32 %v281, %v400
    %v465 = vxor.u32 %v463, 2147483648
    %v466 = vxor.u32 %v464, 2147483648
    %v467 = vmul.f32 %v465, 1.442695
    %v468 = vpow.pop %v467
    %v469 = vmul.f32 %v466, 1.442695
    %v470 = vpow.pop %v469
    %v471 = vadd.f32 %v468, 1.0
    %v472 = vadd.f32 %v470, 1.0
    %v473 = vrcp.pop %v471
    %v474 = vmul.f32 %v471, %v473
    %v475 = vsub.f32 1.0, %v474
    %v476 = vmul.f32 %v473, %v475
    %v477 = vadd.f32 %v473, %v476
    %vm478 = vweird.f32 %v471
    %vm479 = vweird.f32 %v473
    %vm480 = vmor %vm478, %vm479
    %v481 = vsel %vm480, %v473, %v477
    %v482 = vand.u32 2147483647, %v471
    %vm483 = vcmp.eq.f32.partialorder %v482, 8.507059e+37
    %v484 = vand.u32 %v471, 2147483648
    %v485 = vor.u32 1.1754944e-38, %v484
    %v486 = vsel %vm483, %v485, %v481
    %v487 = vmul.f32 1.0, %v486
    %v488 = vrcp.pop %v472
    %v489 = vmul.f32 %v472, %v488
    %v490 = vsub.f32 1.0, %v489
    %v491 = vmul.f32 %v488, %v490
    %v492 = vadd.f32 %v488, %v491
    %vm493 = vweird.f32 %v472
    %vm494 = vweird.f32 %v488
    %vm495 = vmor %vm493, %vm494
    %v496 = vsel %vm495, %v488, %v492
    %v497 = vand.u32 2147483647, %v472
    %vm498 = vcmp.eq.f32.partialorder %v497, 8.507059e+37
    %v499 = vand.u32 %v472, 2147483648
    %v500 = vor.u32 1.1754944e-38, %v499
    %v501 = vsel %vm498, %v500, %v496
    %v502 = vmul.f32 1.0, %v501
    %v503 = vtanh.pop %v463
    %v504 = vtanh.pop %v464
    %v507 = vrot.slane %v347, 7
    %v508 = vrot.slane %v348, 7
    %v511 = vmul.f32 %v487, %v507
    %v512 = vmul.f32 %v502, %v508
    %515 = vrot.lane.b32.xlu0 %v503, 64
    %v516 = vpop.permute.xlu0 %515
    %517 = vrot.lane.b32.xlu0 %v504, 64
    %v518 = vpop.permute.xlu0 %517
    %v521 = vmul.f32 %v487, %v516
    %v522 = vmul.f32 %v502, %v518
    %525 = vrot.lane.b32.xlu0 %v521, 32
    %v526 = vpop.permute.xlu0 %525
    %527 = vrot.lane.b32.xlu0 %v522, 32
    %v528 = vpop.permute.xlu0 %527
    %v531 = vadd.f32 %v511, %v526
    %v532 = vadd.f32 %v512, %v528
    %v533 = vtanh.pop %v531
    %v534 = vtanh.pop %v532
    %537 = vrot.lane.b32.xlu0 %v533, 64
    %v538 = vpop.permute.xlu0 %537
    %539 = vrot.lane.b32.xlu0 %v534, 64
    %v540 = vpop.permute.xlu0 %539
    %v543 = vmul.f32 %v487, %v538
    %v544 = vmul.f32 %v502, %v540
    %v545 = vpack.c.bf16 %v543, %v543
    %v546 = vpack.c.bf16 %v544, %v544
    %v549 = vunpack.c.l.b16 %v545
    %v550 = vunpack.c.l.b16 %v546
    %v551 = vrot.slane %v549, 1
    %v552 = vsel %vm368, %v550, %v551
    %v553 = vpack.c.b16 %v552, %v552
    %554 = vrot.lane.b32.xlu0 %v553, 32
    %v555 = vpop.permute.xlu0 %554
    %v557 = vsel %vm373, %v555, 0
    %559 = vmatpush.bf16.msra.mxu0 0
    %560 = vmatpush.bf16.msra.mxu0 0
    %561 = vmatpush.bf16.msra.mxu0 0
    %562 = vmatpush.bf16.msra.mxu0 0
    %563 = vmatpush.bf16.msra.mxu0 0
    %564 = vmatpush.bf16.msra.mxu0 0
    %565 = vmatpush.bf16.msra.mxu0 %v246
    %566 = vmatpush.bf16.msra.mxu0 %v244
    %567 = vmatmul.bf16.gmra.mxu0 %v557
    %v568 = vpop.f32.mrf.mxu0
    %v569 = vadd.f32 0.0, %v568
    %v570 = vpop.f32.mrf.mxu0
    %571 = vdwg.mxu0
    %572 = vmatpush.bf16.msra.mxu0 0
    %573 = vmatpush.bf16.msra.mxu0 0
    %574 = vmatpush.bf16.msra.mxu0 0
    %575 = vmatpush.bf16.msra.mxu0 0
    %576 = vmatpush.bf16.msra.mxu0 0
    %577 = vmatpush.bf16.msra.mxu0 0
    %578 = vmatpush.bf16.msra.mxu0 %v247
    %579 = vmatpush.bf16.msra.mxu0 %v245
    %580 = vmatmul.bf16.gmra.mxu0 %v557
    %v581 = vpop.f32.mrf.mxu0
    %v582 = vadd.f32 0.0, %v581
    %v583 = vpop.f32.mrf.mxu0
    %584 = vdwg.mxu0
    %v585 = vpack.c.bf16 %v458, %v458
    %587 = vrot.lane.b32.xlu0 %v585, 32
    %v588 = vpop.permute.xlu0 %587
    %v590 = vsel %vm373, %v588, 0
    %592 = vmatpush.bf16.msra.mxu0 0
    %593 = vmatpush.bf16.msra.mxu0 0
    %594 = vmatpush.bf16.msra.mxu0 0
    %595 = vmatpush.bf16.msra.mxu0 0
    %596 = vmatpush.bf16.msra.mxu0 0
    %597 = vmatpush.bf16.msra.mxu0 0
    %598 = vmatpush.bf16.msra.mxu0 %v234
    %599 = vmatpush.bf16.msra.mxu0 %v233
    %600 = vmatmul.bf16.gmra.mxu0 %v590
    %v601 = vpop.f32.mrf.mxu0
    %v602 = vadd.f32 0.0, %v601
    %v603 = vpop.f32.mrf.mxu0
    %604 = vdwg.mxu0
    %v605 = vadd.f32 %v569, %v602
    %v606 = vadd.f32 %v605, %v420
    %v607 = vxor.u32 %v606, 2147483648
    %v608 = vmul.f32 %v607, 1.442695
    %v609 = vpow.pop %v608
    %v610 = vadd.f32 %v609, 1.0
    %v611 = vrcp.pop %v610
    %v612 = vmul.f32 %v610, %v611
    %v613 = vsub.f32 1.0, %v612
    %v614 = vmul.f32 %v611, %v613
    %v615 = vadd.f32 %v611, %v614
    %vm616 = vweird.f32 %v610
    %vm617 = vweird.f32 %v611
    %vm618 = vmor %vm616, %vm617
    %v619 = vsel %vm618, %v611, %v615
    %v620 = vand.u32 2147483647, %v610
    %vm621 = vcmp.eq.f32.partialorder %v620, 8.507059e+37
    %v622 = vand.u32 %v610, 2147483648
    %v623 = vor.u32 1.1754944e-38, %v622
    %v624 = vsel %vm621, %v623, %v619
    %v625 = vmul.f32 1.0, %v624
    %v626 = vtanh.pop %v606
    %v627 = vmul.f32 %v625, %v452
    %629 = vrot.lane.b32.xlu0 %v626, 64
    %v630 = vpop.permute.xlu0 %629
    %v632 = vmul.f32 %v625, %v630
    %634 = vrot.lane.b32.xlu0 %v632, 32
    %v635 = vpop.permute.xlu0 %634
    %v637 = vadd.f32 %v627, %v635
    %v638 = vtanh.pop %v637
    %640 = vrot.lane.b32.xlu0 %v638, 64
    %v641 = vpop.permute.xlu0 %640
    %v643 = vmul.f32 %v625, %v641
    %v645 = vrot.slane %v582, 6
    %v646 = vrot.slane %v582, 7
    %v649 = vadd.f32 %v276, %v645
    %v650 = vadd.f32 %v281, %v646
    %v651 = vxor.u32 %v649, 2147483648
    %v652 = vxor.u32 %v650, 2147483648
    %v653 = vmul.f32 %v651, 1.442695
    %v654 = vpow.pop %v653
    %v655 = vmul.f32 %v652, 1.442695
    %v656 = vpow.pop %v655
    %v657 = vadd.f32 %v654, 1.0
    %v658 = vadd.f32 %v656, 1.0
    %v659 = vrcp.pop %v657
    %v660 = vmul.f32 %v657, %v659
    %v661 = vsub.f32 1.0, %v660
    %v662 = vmul.f32 %v659, %v661
    %v663 = vadd.f32 %v659, %v662
    %vm664 = vweird.f32 %v657
    %vm665 = vweird.f32 %v659
    %vm666 = vmor %vm664, %vm665
    %v667 = vsel %vm666, %v659, %v663
    %v668 = vand.u32 2147483647, %v657
    %vm669 = vcmp.eq.f32.partialorder %v668, 8.507059e+37
    %v670 = vand.u32 %v657, 2147483648
    %v671 = vor.u32 1.1754944e-38, %v670
    %v672 = vsel %vm669, %v671, %v667
    %v673 = vmul.f32 1.0, %v672
    %v674 = vrcp.pop %v658
    %v675 = vmul.f32 %v658, %v674
    %v676 = vsub.f32 1.0, %v675
    %v677 = vmul.f32 %v674, %v676
    %v678 = vadd.f32 %v674, %v677
    %vm679 = vweird.f32 %v658
    %vm680 = vweird.f32 %v674
    %vm681 = vmor %vm679, %vm680
    %v682 = vsel %vm681, %v674, %v678
    %v683 = vand.u32 2147483647, %v658
    %vm684 = vcmp.eq.f32.partialorder %v683, 8.507059e+37
    %v685 = vand.u32 %v658, 2147483648
    %v686 = vor.u32 1.1754944e-38, %v685
    %v687 = vsel %vm684, %v686, %v682
    %v688 = vmul.f32 1.0, %v687
    %v689 = vtanh.pop %v649
    %v690 = vtanh.pop %v650
    %v693 = vrot.slane %v531, 7
    %v694 = vrot.slane %v532, 7
    %v697 = vmul.f32 %v673, %v693
    %v698 = vmul.f32 %v688, %v694
    %701 = vrot.lane.b32.xlu0 %v689, 64
    %v702 = vpop.permute.xlu0 %701
    %703 = vrot.lane.b32.xlu0 %v690, 64
    %v704 = vpop.permute.xlu0 %703
    %v707 = vmul.f32 %v673, %v702
    %v708 = vmul.f32 %v688, %v704
    %711 = vrot.lane.b32.xlu0 %v707, 32
    %v712 = vpop.permute.xlu0 %711
    %713 = vrot.lane.b32.xlu0 %v708, 32
    %v714 = vpop.permute.xlu0 %713
    %v717 = vadd.f32 %v697, %v712
    %v718 = vadd.f32 %v698, %v714
    %v719 = vtanh.pop %v717
    %v720 = vtanh.pop %v718
    %723 = vrot.lane.b32.xlu0 %v719, 64
    %v724 = vpop.permute.xlu0 %723
    %725 = vrot.lane.b32.xlu0 %v720, 64
    %v726 = vpop.permute.xlu0 %725
    %v729 = vmul.f32 %v673, %v724
    %v730 = vmul.f32 %v688, %v726
    %v731 = vpack.c.bf16 %v729, %v729
    %v732 = vpack.c.bf16 %v730, %v730
    %v735 = vunpack.c.l.b16 %v731
    %v736 = vunpack.c.l.b16 %v732
    %v737 = vrot.slane %v735, 2
    %v738 = vrot.slane %v736, 1
    %v739 = vsel %vm368, %v738, %v737
    %v740 = vpack.c.b16 %v739, %v739
    %741 = vrot.lane.b32.xlu0 %v740, 32
    %v742 = vpop.permute.xlu0 %741
    %v744 = vsel %vm373, %v742, 0
    %746 = vmatpush.bf16.msra.mxu0 0
    %747 = vmatpush.bf16.msra.mxu0 0
    %748 = vmatpush.bf16.msra.mxu0 0
    %749 = vmatpush.bf16.msra.mxu0 0
    %750 = vmatpush.bf16.msra.mxu0 0
    %751 = vmatpush.bf16.msra.mxu0 0
    %752 = vmatpush.bf16.msra.mxu0 %v246
    %753 = vmatpush.bf16.msra.mxu0 %v244
    %754 = vmatmul.bf16.gmra.mxu0 %v744
    %v755 = vpop.f32.mrf.mxu0
    %v756 = vadd.f32 0.0, %v755
    %v757 = vpop.f32.mrf.mxu0
    %758 = vdwg.mxu0
    %759 = vmatpush.bf16.msra.mxu0 0
    %760 = vmatpush.bf16.msra.mxu0 0
    %761 = vmatpush.bf16.msra.mxu0 0
    %762 = vmatpush.bf16.msra.mxu0 0
    %763 = vmatpush.bf16.msra.mxu0 0
    %764 = vmatpush.bf16.msra.mxu0 0
    %765 = vmatpush.bf16.msra.mxu0 %v247
    %766 = vmatpush.bf16.msra.mxu0 %v245
    %767 = vmatmul.bf16.gmra.mxu0 %v744
    %v768 = vpop.f32.mrf.mxu0
    %v769 = vadd.f32 0.0, %v768
    %v770 = vpop.f32.mrf.mxu0
    %771 = vdwg.mxu0
    %v772 = vpack.c.bf16 %v643, %v643
    %774 = vrot.lane.b32.xlu0 %v772, 32
    %v775 = vpop.permute.xlu0 %774
    %v777 = vsel %vm373, %v775, 0
    %779 = vmatpush.bf16.msra.mxu0 0
    %780 = vmatpush.bf16.msra.mxu0 0
    %781 = vmatpush.bf16.msra.mxu0 0
    %782 = vmatpush.bf16.msra.mxu0 0
    %783 = vmatpush.bf16.msra.mxu0 0
    %784 = vmatpush.bf16.msra.mxu0 0
    %785 = vmatpush.bf16.msra.mxu0 %v234
    %786 = vmatpush.bf16.msra.mxu0 %v233
    %787 = vmatmul.bf16.gmra.mxu0 %v777
    %v788 = vpop.f32.mrf.mxu0
    %v789 = vadd.f32 0.0, %v788
    %v790 = vpop.f32.mrf.mxu0
    %791 = vdwg.mxu0
    %v792 = vadd.f32 %v756, %v789
    %v793 = vadd.f32 %v792, %v420
    %v794 = vxor.u32 %v793, 2147483648
    %v795 = vmul.f32 %v794, 1.442695
    %v796 = vpow.pop %v795
    %v797 = vadd.f32 %v796, 1.0
    %v798 = vrcp.pop %v797
    %v799 = vmul.f32 %v797, %v798
    %v800 = vsub.f32 1.0, %v799
    %v801 = vmul.f32 %v798, %v800
    %v802 = vadd.f32 %v798, %v801
    %vm803 = vweird.f32 %v797
    %vm804 = vweird.f32 %v798
    %vm805 = vmor %vm803, %vm804
    %v806 = vsel %vm805, %v798, %v802
    %v807 = vand.u32 2147483647, %v797
    %vm808 = vcmp.eq.f32.partialorder %v807, 8.507059e+37
    %v809 = vand.u32 %v797, 2147483648
    %v810 = vor.u32 1.1754944e-38, %v809
    %v811 = vsel %vm808, %v810, %v806
    %v812 = vmul.f32 1.0, %v811
    %v813 = vtanh.pop %v793
    %v814 = vmul.f32 %v812, %v637
    %816 = vrot.lane.b32.xlu0 %v813, 64
    %v817 = vpop.permute.xlu0 %816
    %v819 = vmul.f32 %v812, %v817
    %821 = vrot.lane.b32.xlu0 %v819, 32
    %v822 = vpop.permute.xlu0 %821
    %v824 = vadd.f32 %v814, %v822
    %v825 = vtanh.pop %v824
    %827 = vrot.lane.b32.xlu0 %v825, 64
    %v828 = vpop.permute.xlu0 %827
    %v830 = vmul.f32 %v812, %v828
    %v832 = vrot.slane %v769, 5
    %v833 = vrot.slane %v769, 6
    %v836 = vadd.f32 %v276, %v832
    %v837 = vadd.f32 %v281, %v833
    %v838 = vxor.u32 %v836, 2147483648
    %v839 = vxor.u32 %v837, 2147483648
    %v840 = vmul.f32 %v838, 1.442695
    %v841 = vpow.pop %v840
    %v842 = vmul.f32 %v839, 1.442695
    %v843 = vpow.pop %v842
    %v844 = vadd.f32 %v841, 1.0
    %v845 = vadd.f32 %v843, 1.0
    %v846 = vrcp.pop %v844
    %v847 = vmul.f32 %v844, %v846
    %v848 = vsub.f32 1.0, %v847
    %v849 = vmul.f32 %v846, %v848
    %v850 = vadd.f32 %v846, %v849
    %vm851 = vweird.f32 %v844
    %vm852 = vweird.f32 %v846
    %vm853 = vmor %vm851, %vm852
    %v854 = vsel %vm853, %v846, %v850
    %v855 = vand.u32 2147483647, %v844
    %vm856 = vcmp.eq.f32.partialorder %v855, 8.507059e+37
    %v857 = vand.u32 %v844, 2147483648
    %v858 = vor.u32 1.1754944e-38, %v857
    %v859 = vsel %vm856, %v858, %v854
    %v860 = vmul.f32 1.0, %v859
    %v861 = vrcp.pop %v845
    %v862 = vmul.f32 %v845, %v861
    %v863 = vsub.f32 1.0, %v862
    %v864 = vmul.f32 %v861, %v863
    %v865 = vadd.f32 %v861, %v864
    %vm866 = vweird.f32 %v845
    %vm867 = vweird.f32 %v861
    %vm868 = vmor %vm866, %vm867
    %v869 = vsel %vm868, %v861, %v865
    %v870 = vand.u32 2147483647, %v845
    %vm871 = vcmp.eq.f32.partialorder %v870, 8.507059e+37
    %v872 = vand.u32 %v845, 2147483648
    %v873 = vor.u32 1.1754944e-38, %v872
    %v874 = vsel %vm871, %v873, %v869
    %v875 = vmul.f32 1.0, %v874
    %v876 = vtanh.pop %v836
    %v877 = vtanh.pop %v837
    %v880 = vrot.slane %v717, 7
    %v881 = vrot.slane %v718, 7
    %v884 = vmul.f32 %v860, %v880
    %v885 = vmul.f32 %v875, %v881
    %888 = vrot.lane.b32.xlu0 %v876, 64
    %v889 = vpop.permute.xlu0 %888
    %890 = vrot.lane.b32.xlu0 %v877, 64
    %v891 = vpop.permute.xlu0 %890
    %v894 = vmul.f32 %v860, %v889
    %v895 = vmul.f32 %v875, %v891
    %898 = vrot.lane.b32.xlu0 %v894, 32
    %v899 = vpop.permute.xlu0 %898
    %900 = vrot.lane.b32.xlu0 %v895, 32
    %v901 = vpop.permute.xlu0 %900
    %v904 = vadd.f32 %v884, %v899
    %v905 = vadd.f32 %v885, %v901
    %v906 = vtanh.pop %v904
    %v907 = vtanh.pop %v905
    %910 = vrot.lane.b32.xlu0 %v906, 64
    %v911 = vpop.permute.xlu0 %910
    %912 = vrot.lane.b32.xlu0 %v907, 64
    %v913 = vpop.permute.xlu0 %912
    %v916 = vmul.f32 %v860, %v911
    %v917 = vmul.f32 %v875, %v913
    %v918 = vpack.c.bf16 %v916, %v916
    %v919 = vpack.c.bf16 %v917, %v917
    %v922 = vunpack.c.l.b16 %v918
    %v923 = vunpack.c.l.b16 %v919
    %v924 = vrot.slane %v922, 3
    %v925 = vrot.slane %v923, 2
    %v926 = vsel %vm368, %v925, %v924
    %v927 = vpack.c.b16 %v926, %v926
    %928 = vrot.lane.b32.xlu0 %v927, 32
    %v929 = vpop.permute.xlu0 %928
    %v931 = vsel %vm373, %v929, 0
    %933 = vmatpush.bf16.msra.mxu0 0
    %934 = vmatpush.bf16.msra.mxu0 0
    %935 = vmatpush.bf16.msra.mxu0 0
    %936 = vmatpush.bf16.msra.mxu0 0
    %937 = vmatpush.bf16.msra.mxu0 0
    %938 = vmatpush.bf16.msra.mxu0 0
    %939 = vmatpush.bf16.msra.mxu0 %v246
    %940 = vmatpush.bf16.msra.mxu0 %v244
    %941 = vmatmul.bf16.gmra.mxu0 %v931
    %v942 = vpop.f32.mrf.mxu0
    %v943 = vadd.f32 0.0, %v942
    %v944 = vpop.f32.mrf.mxu0
    %945 = vdwg.mxu0
    %946 = vmatpush.bf16.msra.mxu0 0
    %947 = vmatpush.bf16.msra.mxu0 0
    %948 = vmatpush.bf16.msra.mxu0 0
    %949 = vmatpush.bf16.msra.mxu0 0
    %950 = vmatpush.bf16.msra.mxu0 0
    %951 = vmatpush.bf16.msra.mxu0 0
    %952 = vmatpush.bf16.msra.mxu0 %v247
    %953 = vmatpush.bf16.msra.mxu0 %v245
    %954 = vmatmul.bf16.gmra.mxu0 %v931
    %v955 = vpop.f32.mrf.mxu0
    %v956 = vadd.f32 0.0, %v955
    %v957 = vpop.f32.mrf.mxu0
    %958 = vdwg.mxu0
    %v959 = vpack.c.bf16 %v830, %v830
    %961 = vrot.lane.b32.xlu0 %v959, 32
    %v962 = vpop.permute.xlu0 %961
    %v964 = vsel %vm373, %v962, 0
    %966 = vmatpush.bf16.msra.mxu0 0
    %967 = vmatpush.bf16.msra.mxu0 0
    %968 = vmatpush.bf16.msra.mxu0 0
    %969 = vmatpush.bf16.msra.mxu0 0
    %970 = vmatpush.bf16.msra.mxu0 0
    %971 = vmatpush.bf16.msra.mxu0 0
    %972 = vmatpush.bf16.msra.mxu0 %v234
    %973 = vmatpush.bf16.msra.mxu0 %v233
    %974 = vmatmul.bf16.gmra.mxu0 %v964
    %v975 = vpop.f32.mrf.mxu0
    %v976 = vadd.f32 0.0, %v975
    %v977 = vpop.f32.mrf.mxu0
    %978 = vdwg.mxu0
    %v979 = vadd.f32 %v943, %v976
    %v980 = vadd.f32 %v979, %v420
    %v981 = vxor.u32 %v980, 2147483648
    %v982 = vmul.f32 %v981, 1.442695
    %v983 = vpow.pop %v982
    %v984 = vadd.f32 %v983, 1.0
    %v985 = vrcp.pop %v984
    %v986 = vmul.f32 %v984, %v985
    %v987 = vsub.f32 1.0, %v986
    %v988 = vmul.f32 %v985, %v987
    %v989 = vadd.f32 %v985, %v988
    %vm990 = vweird.f32 %v984
    %vm991 = vweird.f32 %v985
    %vm992 = vmor %vm990, %vm991
    %v993 = vsel %vm992, %v985, %v989
    %v994 = vand.u32 2147483647, %v984
    %vm995 = vcmp.eq.f32.partialorder %v994, 8.507059e+37
    %v996 = vand.u32 %v984, 2147483648
    %v997 = vor.u32 1.1754944e-38, %v996
    %v998 = vsel %vm995, %v997, %v993
    %v999 = vmul.f32 1.0, %v998
    %v1000 = vtanh.pop %v980
    %v1001 = vmul.f32 %v999, %v824
    %1003 = vrot.lane.b32.xlu0 %v1000, 64
    %v1004 = vpop.permute.xlu0 %1003
    %v1006 = vmul.f32 %v999, %v1004
    %1008 = vrot.lane.b32.xlu0 %v1006, 32
    %v1009 = vpop.permute.xlu0 %1008
    %v1011 = vadd.f32 %v1001, %v1009
    %v1012 = vtanh.pop %v1011
    %1014 = vrot.lane.b32.xlu0 %v1012, 64
    %v1015 = vpop.permute.xlu0 %1014
    %v1017 = vmul.f32 %v999, %v1015
    %v1019 = vrot.slane %v956, 4
    %v1020 = vrot.slane %v956, 5
    %v1023 = vadd.f32 %v276, %v1019
    %v1024 = vadd.f32 %v281, %v1020
    %v1025 = vxor.u32 %v1023, 2147483648
    %v1026 = vxor.u32 %v1024, 2147483648
    %v1027 = vmul.f32 %v1025, 1.442695
    %v1028 = vpow.pop %v1027
    %v1029 = vmul.f32 %v1026, 1.442695
    %v1030 = vpow.pop %v1029
    %v1031 = vadd.f32 %v1028, 1.0
    %v1032 = vadd.f32 %v1030, 1.0
    %v1033 = vrcp.pop %v1031
    %v1034 = vmul.f32 %v1031, %v1033
    %v1035 = vsub.f32 1.0, %v1034
    %v1036 = vmul.f32 %v1033, %v1035
    %v1037 = vadd.f32 %v1033, %v1036
    %vm1038 = vweird.f32 %v1031
    %vm1039 = vweird.f32 %v1033
    %vm1040 = vmor %vm1038, %vm1039
    %v1041 = vsel %vm1040, %v1033, %v1037
    %v1042 = vand.u32 2147483647, %v1031
    %vm1043 = vcmp.eq.f32.partialorder %v1042, 8.507059e+37
    %v1044 = vand.u32 %v1031, 2147483648
    %v1045 = vor.u32 1.1754944e-38, %v1044
    %v1046 = vsel %vm1043, %v1045, %v1041
    %v1047 = vmul.f32 1.0, %v1046
    %v1048 = vrcp.pop %v1032
    %v1049 = vmul.f32 %v1032, %v1048
    %v1050 = vsub.f32 1.0, %v1049
    %v1051 = vmul.f32 %v1048, %v1050
    %v1052 = vadd.f32 %v1048, %v1051
    %vm1053 = vweird.f32 %v1032
    %vm1054 = vweird.f32 %v1048
    %vm1055 = vmor %vm1053, %vm1054
    %v1056 = vsel %vm1055, %v1048, %v1052
    %v1057 = vand.u32 2147483647, %v1032
    %vm1058 = vcmp.eq.f32.partialorder %v1057, 8.507059e+37
    %v1059 = vand.u32 %v1032, 2147483648
    %v1060 = vor.u32 1.1754944e-38, %v1059
    %v1061 = vsel %vm1058, %v1060, %v1056
    %v1062 = vmul.f32 1.0, %v1061
    %v1063 = vtanh.pop %v1023
    %v1064 = vtanh.pop %v1024
    %v1067 = vrot.slane %v904, 7
    %v1068 = vrot.slane %v905, 7
    %v1071 = vmul.f32 %v1047, %v1067
    %v1072 = vmul.f32 %v1062, %v1068
    %1075 = vrot.lane.b32.xlu0 %v1063, 64
    %v1076 = vpop.permute.xlu0 %1075
    %1077 = vrot.lane.b32.xlu0 %v1064, 64
    %v1078 = vpop.permute.xlu0 %1077
    %v1081 = vmul.f32 %v1047, %v1076
    %v1082 = vmul.f32 %v1062, %v1078
    %1085 = vrot.lane.b32.xlu0 %v1081, 32
    %v1086 = vpop.permute.xlu0 %1085
    %1087 = vrot.lane.b32.xlu0 %v1082, 32
    %v1088 = vpop.permute.xlu0 %1087
    %v1091 = vadd.f32 %v1071, %v1086
    %v1092 = vadd.f32 %v1072, %v1088
    %v1093 = vtanh.pop %v1091
    %v1094 = vtanh.pop %v1092
    %1097 = vrot.lane.b32.xlu0 %v1093, 64
    %v1098 = vpop.permute.xlu0 %1097
    %1099 = vrot.lane.b32.xlu0 %v1094, 64
    %v1100 = vpop.permute.xlu0 %1099
    %v1103 = vmul.f32 %v1047, %v1098
    %v1104 = vmul.f32 %v1062, %v1100
    %v1105 = vpack.c.bf16 %v1103, %v1103
    %v1106 = vpack.c.bf16 %v1104, %v1104
    %v1109 = vunpack.c.l.b16 %v1105
    %v1110 = vunpack.c.l.b16 %v1106
    %v1111 = vrot.slane %v1109, 4
    %v1112 = vrot.slane %v1110, 3
    %v1113 = vsel %vm368, %v1112, %v1111
    %v1114 = vpack.c.b16 %v1113, %v1113
    %1115 = vrot.lane.b32.xlu0 %v1114, 32
    %v1116 = vpop.permute.xlu0 %1115
    %v1118 = vsel %vm373, %v1116, 0
    %1120 = vmatpush.bf16.msra.mxu0 0
    %1121 = vmatpush.bf16.msra.mxu0 0
    %1122 = vmatpush.bf16.msra.mxu0 0
    %1123 = vmatpush.bf16.msra.mxu0 0
    %1124 = vmatpush.bf16.msra.mxu0 0
    %1125 = vmatpush.bf16.msra.mxu0 0
    %1126 = vmatpush.bf16.msra.mxu0 %v246
    %1127 = vmatpush.bf16.msra.mxu0 %v244
    %1128 = vmatmul.bf16.gmra.mxu0 %v1118
    %v1129 = vpop.f32.mrf.mxu0
    %v1130 = vadd.f32 0.0, %v1129
    %v1131 = vpop.f32.mrf.mxu0
    %1132 = vdwg.mxu0
    %1133 = vmatpush.bf16.msra.mxu0 0
    %1134 = vmatpush.bf16.msra.mxu0 0
    %1135 = vmatpush.bf16.msra.mxu0 0
    %1136 = vmatpush.bf16.msra.mxu0 0
    %1137 = vmatpush.bf16.msra.mxu0 0
    %1138 = vmatpush.bf16.msra.mxu0 0
    %1139 = vmatpush.bf16.msra.mxu0 %v247
    %1140 = vmatpush.bf16.msra.mxu0 %v245
    %1141 = vmatmul.bf16.gmra.mxu0 %v1118
    %v1142 = vpop.f32.mrf.mxu0
    %v1143 = vadd.f32 0.0, %v1142
    %v1144 = vpop.f32.mrf.mxu0
    %1145 = vdwg.mxu0
    %v1146 = vpack.c.bf16 %v1017, %v1017
    %1148 = vrot.lane.b32.xlu0 %v1146, 32
    %v1149 = vpop.permute.xlu0 %1148
    %v1151 = vsel %vm373, %v1149, 0
    %1153 = vmatpush.bf16.msra.mxu0 0
    %1154 = vmatpush.bf16.msra.mxu0 0
    %1155 = vmatpush.bf16.msra.mxu0 0
    %1156 = vmatpush.bf16.msra.mxu0 0
    %1157 = vmatpush.bf16.msra.mxu0 0
    %1158 = vmatpush.bf16.msra.mxu0 0
    %1159 = vmatpush.bf16.msra.mxu0 %v234
    %1160 = vmatpush.bf16.msra.mxu0 %v233
    %1161 = vmatmul.bf16.gmra.mxu0 %v1151
    %v1162 = vpop.f32.mrf.mxu0
    %v1163 = vadd.f32 0.0, %v1162
    %v1164 = vpop.f32.mrf.mxu0
    %1165 = vdwg.mxu0
    %v1166 = vadd.f32 %v1130, %v1163
    %v1167 = vadd.f32 %v1166, %v420
    %v1168 = vxor.u32 %v1167, 2147483648
    %v1169 = vmul.f32 %v1168, 1.442695
    %v1170 = vpow.pop %v1169
    %v1171 = vadd.f32 %v1170, 1.0
    %v1172 = vrcp.pop %v1171
    %v1173 = vmul.f32 %v1171, %v1172
    %v1174 = vsub.f32 1.0, %v1173
    %v1175 = vmul.f32 %v1172, %v1174
    %v1176 = vadd.f32 %v1172, %v1175
    %vm1177 = vweird.f32 %v1171
    %vm1178 = vweird.f32 %v1172
    %vm1179 = vmor %vm1177, %vm1178
    %v1180 = vsel %vm1179, %v1172, %v1176
    %v1181 = vand.u32 2147483647, %v1171
    %vm1182 = vcmp.eq.f32.partialorder %v1181, 8.507059e+37
    %v1183 = vand.u32 %v1171, 2147483648
    %v1184 = vor.u32 1.1754944e-38, %v1183
    %v1185 = vsel %vm1182, %v1184, %v1180
    %v1186 = vmul.f32 1.0, %v1185
    %v1187 = vtanh.pop %v1167
    %v1188 = vmul.f32 %v1186, %v1011
    %1190 = vrot.lane.b32.xlu0 %v1187, 64
    %v1191 = vpop.permute.xlu0 %1190
    %v1193 = vmul.f32 %v1186, %v1191
    %1195 = vrot.lane.b32.xlu0 %v1193, 32
    %v1196 = vpop.permute.xlu0 %1195
    %v1198 = vadd.f32 %v1188, %v1196
    %v1199 = vtanh.pop %v1198
    %1201 = vrot.lane.b32.xlu0 %v1199, 64
    %v1202 = vpop.permute.xlu0 %1201
    %v1204 = vmul.f32 %v1186, %v1202
    %v1206 = vrot.slane %v1143, 3
    %v1207 = vrot.slane %v1143, 4
    %v1210 = vadd.f32 %v276, %v1206
    %v1211 = vadd.f32 %v281, %v1207
    %v1212 = vxor.u32 %v1210, 2147483648
    %v1213 = vxor.u32 %v1211, 2147483648
    %v1214 = vmul.f32 %v1212, 1.442695
    %v1215 = vpow.pop %v1214
    %v1216 = vmul.f32 %v1213, 1.442695
    %v1217 = vpow.pop %v1216
    %v1218 = vadd.f32 %v1215, 1.0
    %v1219 = vadd.f32 %v1217, 1.0
    %v1220 = vrcp.pop %v1218
    %v1221 = vmul.f32 %v1218, %v1220
    %v1222 = vsub.f32 1.0, %v1221
    %v1223 = vmul.f32 %v1220, %v1222
    %v1224 = vadd.f32 %v1220, %v1223
    %vm1225 = vweird.f32 %v1218
    %vm1226 = vweird.f32 %v1220
    %vm1227 = vmor %vm1225, %vm1226
    %v1228 = vsel %vm1227, %v1220, %v1224
    %v1229 = vand.u32 2147483647, %v1218
    %vm1230 = vcmp.eq.f32.partialorder %v1229, 8.507059e+37
    %v1231 = vand.u32 %v1218, 2147483648
    %v1232 = vor.u32 1.1754944e-38, %v1231
    %v1233 = vsel %vm1230, %v1232, %v1228
    %v1234 = vmul.f32 1.0, %v1233
    %v1235 = vrcp.pop %v1219
    %v1236 = vmul.f32 %v1219, %v1235
    %v1237 = vsub.f32 1.0, %v1236
    %v1238 = vmul.f32 %v1235, %v1237
    %v1239 = vadd.f32 %v1235, %v1238
    %vm1240 = vweird.f32 %v1219
    %vm1241 = vweird.f32 %v1235
    %vm1242 = vmor %vm1240, %vm1241
    %v1243 = vsel %vm1242, %v1235, %v1239
    %v1244 = vand.u32 2147483647, %v1219
    %vm1245 = vcmp.eq.f32.partialorder %v1244, 8.507059e+37
    %v1246 = vand.u32 %v1219, 2147483648
    %v1247 = vor.u32 1.1754944e-38, %v1246
    %v1248 = vsel %vm1245, %v1247, %v1243
    %v1249 = vmul.f32 1.0, %v1248
    %v1250 = vtanh.pop %v1210
    %v1251 = vtanh.pop %v1211
    %v1254 = vrot.slane %v1091, 7
    %v1255 = vrot.slane %v1092, 7
    %v1258 = vmul.f32 %v1234, %v1254
    %v1259 = vmul.f32 %v1249, %v1255
    %1262 = vrot.lane.b32.xlu0 %v1250, 64
    %v1263 = vpop.permute.xlu0 %1262
    %1264 = vrot.lane.b32.xlu0 %v1251, 64
    %v1265 = vpop.permute.xlu0 %1264
    %v1268 = vmul.f32 %v1234, %v1263
    %v1269 = vmul.f32 %v1249, %v1265
    %1272 = vrot.lane.b32.xlu0 %v1268, 32
    %v1273 = vpop.permute.xlu0 %1272
    %1274 = vrot.lane.b32.xlu0 %v1269, 32
    %v1275 = vpop.permute.xlu0 %1274
    %v1278 = vadd.f32 %v1258, %v1273
    %v1279 = vadd.f32 %v1259, %v1275
    %v1280 = vtanh.pop %v1278
    %v1281 = vtanh.pop %v1279
    %1284 = vrot.lane.b32.xlu0 %v1280, 64
    %v1285 = vpop.permute.xlu0 %1284
    %1286 = vrot.lane.b32.xlu0 %v1281, 64
    %v1287 = vpop.permute.xlu0 %1286
    %v1290 = vmul.f32 %v1234, %v1285
    %v1291 = vmul.f32 %v1249, %v1287
    %v1292 = vpack.c.bf16 %v1290, %v1290
    %v1293 = vpack.c.bf16 %v1291, %v1291
    %v1296 = vunpack.c.l.b16 %v1292
    %v1297 = vunpack.c.l.b16 %v1293
    %v1298 = vrot.slane %v1296, 5
    %v1299 = vrot.slane %v1297, 4
    %v1300 = vsel %vm368, %v1299, %v1298
    %v1301 = vpack.c.b16 %v1300, %v1300
    %1302 = vrot.lane.b32.xlu0 %v1301, 32
    %v1303 = vpop.permute.xlu0 %1302
    %v1305 = vsel %vm373, %v1303, 0
    %1307 = vmatpush.bf16.msra.mxu0 0
    %1308 = vmatpush.bf16.msra.mxu0 0
    %1309 = vmatpush.bf16.msra.mxu0 0
    %1310 = vmatpush.bf16.msra.mxu0 0
    %1311 = vmatpush.bf16.msra.mxu0 0
    %1312 = vmatpush.bf16.msra.mxu0 0
    %1313 = vmatpush.bf16.msra.mxu0 %v246
    %1314 = vmatpush.bf16.msra.mxu0 %v244
    %1315 = vmatmul.bf16.gmra.mxu0 %v1305
    %v1316 = vpop.f32.mrf.mxu0
    %v1317 = vadd.f32 0.0, %v1316
    %v1318 = vpop.f32.mrf.mxu0
    %1319 = vdwg.mxu0
    %1320 = vmatpush.bf16.msra.mxu0 0
    %1321 = vmatpush.bf16.msra.mxu0 0
    %1322 = vmatpush.bf16.msra.mxu0 0
    %1323 = vmatpush.bf16.msra.mxu0 0
    %1324 = vmatpush.bf16.msra.mxu0 0
    %1325 = vmatpush.bf16.msra.mxu0 0
    %1326 = vmatpush.bf16.msra.mxu0 %v247
    %1327 = vmatpush.bf16.msra.mxu0 %v245
    %1328 = vmatmul.bf16.gmra.mxu0 %v1305
    %v1329 = vpop.f32.mrf.mxu0
    %v1330 = vadd.f32 0.0, %v1329
    %v1331 = vpop.f32.mrf.mxu0
    %1332 = vdwg.mxu0
    %v1333 = vpack.c.bf16 %v1204, %v1204
    %1335 = vrot.lane.b32.xlu0 %v1333, 32
    %v1336 = vpop.permute.xlu0 %1335
    %v1338 = vsel %vm373, %v1336, 0
    %1340 = vmatpush.bf16.msra.mxu0 0
    %1341 = vmatpush.bf16.msra.mxu0 0
    %1342 = vmatpush.bf16.msra.mxu0 0
    %1343 = vmatpush.bf16.msra.mxu0 0
    %1344 = vmatpush.bf16.msra.mxu0 0
    %1345 = vmatpush.bf16.msra.mxu0 0
    %1346 = vmatpush.bf16.msra.mxu0 %v234
    %1347 = vmatpush.bf16.msra.mxu0 %v233
    %1348 = vmatmul.bf16.gmra.mxu0 %v1338
    %v1349 = vpop.f32.mrf.mxu0
    %v1350 = vadd.f32 0.0, %v1349
    %v1351 = vpop.f32.mrf.mxu0
    %1352 = vdwg.mxu0
    %v1353 = vadd.f32 %v1317, %v1350
    %v1354 = vadd.f32 %v1353, %v420
    %v1355 = vxor.u32 %v1354, 2147483648
    %v1356 = vmul.f32 %v1355, 1.442695
    %v1357 = vpow.pop %v1356
    %v1358 = vadd.f32 %v1357, 1.0
    %v1359 = vrcp.pop %v1358
    %v1360 = vmul.f32 %v1358, %v1359
    %v1361 = vsub.f32 1.0, %v1360
    %v1362 = vmul.f32 %v1359, %v1361
    %v1363 = vadd.f32 %v1359, %v1362
    %vm1364 = vweird.f32 %v1358
    %vm1365 = vweird.f32 %v1359
    %vm1366 = vmor %vm1364, %vm1365
    %v1367 = vsel %vm1366, %v1359, %v1363
    %v1368 = vand.u32 2147483647, %v1358
    %vm1369 = vcmp.eq.f32.partialorder %v1368, 8.507059e+37
    %v1370 = vand.u32 %v1358, 2147483648
    %v1371 = vor.u32 1.1754944e-38, %v1370
    %v1372 = vsel %vm1369, %v1371, %v1367
    %v1373 = vmul.f32 1.0, %v1372
    %v1374 = vtanh.pop %v1354
    %v1375 = vmul.f32 %v1373, %v1198
    %1377 = vrot.lane.b32.xlu0 %v1374, 64
    %v1378 = vpop.permute.xlu0 %1377
    %v1380 = vmul.f32 %v1373, %v1378
    %1382 = vrot.lane.b32.xlu0 %v1380, 32
    %v1383 = vpop.permute.xlu0 %1382
    %v1385 = vadd.f32 %v1375, %v1383
    %v1386 = vtanh.pop %v1385
    %1388 = vrot.lane.b32.xlu0 %v1386, 64
    %v1389 = vpop.permute.xlu0 %1388
    %v1391 = vmul.f32 %v1373, %v1389
    %v1393 = vrot.slane %v1330, 2
    %v1394 = vrot.slane %v1330, 3
    %v1397 = vadd.f32 %v276, %v1393
    %v1398 = vadd.f32 %v281, %v1394
    %v1399 = vxor.u32 %v1397, 2147483648
    %v1400 = vxor.u32 %v1398, 2147483648
    %v1401 = vmul.f32 %v1399, 1.442695
    %v1402 = vpow.pop %v1401
    %v1403 = vmul.f32 %v1400, 1.442695
    %v1404 = vpow.pop %v1403
    %v1405 = vadd.f32 %v1402, 1.0
    %v1406 = vadd.f32 %v1404, 1.0
    %v1407 = vrcp.pop %v1405
    %v1408 = vmul.f32 %v1405, %v1407
    %v1409 = vsub.f32 1.0, %v1408
    %v1410 = vmul.f32 %v1407, %v1409
    %v1411 = vadd.f32 %v1407, %v1410
    %vm1412 = vweird.f32 %v1405
    %vm1413 = vweird.f32 %v1407
    %vm1414 = vmor %vm1412, %vm1413
    %v1415 = vsel %vm1414, %v1407, %v1411
    %v1416 = vand.u32 2147483647, %v1405
    %vm1417 = vcmp.eq.f32.partialorder %v1416, 8.507059e+37
    %v1418 = vand.u32 %v1405, 2147483648
    %v1419 = vor.u32 1.1754944e-38, %v1418
    %v1420 = vsel %vm1417, %v1419, %v1415
    %v1421 = vmul.f32 1.0, %v1420
    %v1422 = vrcp.pop %v1406
    %v1423 = vmul.f32 %v1406, %v1422
    %v1424 = vsub.f32 1.0, %v1423
    %v1425 = vmul.f32 %v1422, %v1424
    %v1426 = vadd.f32 %v1422, %v1425
    %vm1427 = vweird.f32 %v1406
    %vm1428 = vweird.f32 %v1422
    %vm1429 = vmor %vm1427, %vm1428
    %v1430 = vsel %vm1429, %v1422, %v1426
    %v1431 = vand.u32 2147483647, %v1406
    %vm1432 = vcmp.eq.f32.partialorder %v1431, 8.507059e+37
    %v1433 = vand.u32 %v1406, 2147483648
    %v1434 = vor.u32 1.1754944e-38, %v1433
    %v1435 = vsel %vm1432, %v1434, %v1430
    %v1436 = vmul.f32 1.0, %v1435
    %v1437 = vtanh.pop %v1397
    %v1438 = vtanh.pop %v1398
    %v1441 = vrot.slane %v1278, 7
    %v1442 = vrot.slane %v1279, 7
    %v1445 = vmul.f32 %v1421, %v1441
    %v1446 = vmul.f32 %v1436, %v1442
    %1449 = vrot.lane.b32.xlu0 %v1437, 64
    %v1450 = vpop.permute.xlu0 %1449
    %1451 = vrot.lane.b32.xlu0 %v1438, 64
    %v1452 = vpop.permute.xlu0 %1451
    %v1455 = vmul.f32 %v1421, %v1450
    %v1456 = vmul.f32 %v1436, %v1452
    %1459 = vrot.lane.b32.xlu0 %v1455, 32
    %v1460 = vpop.permute.xlu0 %1459
    %1461 = vrot.lane.b32.xlu0 %v1456, 32
    %v1462 = vpop.permute.xlu0 %1461
    %v1465 = vadd.f32 %v1445, %v1460
    %v1466 = vadd.f32 %v1446, %v1462
    %v1467 = vtanh.pop %v1465
    %v1468 = vtanh.pop %v1466
    %1471 = vrot.lane.b32.xlu0 %v1467, 64
    %v1472 = vpop.permute.xlu0 %1471
    %1473 = vrot.lane.b32.xlu0 %v1468, 64
    %v1474 = vpop.permute.xlu0 %1473
    %v1477 = vmul.f32 %v1421, %v1472
    %v1478 = vmul.f32 %v1436, %v1474
    %v1479 = vpack.c.bf16 %v1477, %v1477
    %v1480 = vpack.c.bf16 %v1478, %v1478
    %v1483 = vunpack.c.l.b16 %v1479
    %v1484 = vunpack.c.l.b16 %v1480
    %v1485 = vrot.slane %v1483, 6
    %v1486 = vrot.slane %v1484, 5
    %v1487 = vsel %vm368, %v1486, %v1485
    %v1488 = vpack.c.b16 %v1487, %v1487
    %1489 = vrot.lane.b32.xlu0 %v1488, 32
    %v1490 = vpop.permute.xlu0 %1489
    %v1492 = vsel %vm373, %v1490, 0
    %1494 = vmatpush.bf16.msra.mxu0 0
    %1495 = vmatpush.bf16.msra.mxu0 0
    %1496 = vmatpush.bf16.msra.mxu0 0
    %1497 = vmatpush.bf16.msra.mxu0 0
    %1498 = vmatpush.bf16.msra.mxu0 0
    %1499 = vmatpush.bf16.msra.mxu0 0
    %1500 = vmatpush.bf16.msra.mxu0 %v246
    %1501 = vmatpush.bf16.msra.mxu0 %v244
    %1502 = vmatmul.bf16.gmra.mxu0 %v1492
    %v1503 = vpop.f32.mrf.mxu0
    %v1504 = vadd.f32 0.0, %v1503
    %v1505 = vpop.f32.mrf.mxu0
    %1506 = vdwg.mxu0
    %1507 = vmatpush.bf16.msra.mxu0 0
    %1508 = vmatpush.bf16.msra.mxu0 0
    %1509 = vmatpush.bf16.msra.mxu0 0
    %1510 = vmatpush.bf16.msra.mxu0 0
    %1511 = vmatpush.bf16.msra.mxu0 0
    %1512 = vmatpush.bf16.msra.mxu0 0
    %1513 = vmatpush.bf16.msra.mxu0 %v247
    %1514 = vmatpush.bf16.msra.mxu0 %v245
    %1515 = vmatmul.bf16.gmra.mxu0 %v1492
    %v1516 = vpop.f32.mrf.mxu0
    %v1517 = vadd.f32 0.0, %v1516
    %v1518 = vpop.f32.mrf.mxu0
    %1519 = vdwg.mxu0
    %v1520 = vpack.c.bf16 %v1391, %v1391
    %1522 = vrot.lane.b32.xlu0 %v1520, 32
    %v1523 = vpop.permute.xlu0 %1522
    %v1525 = vsel %vm373, %v1523, 0
    %1527 = vmatpush.bf16.msra.mxu0 0
    %1528 = vmatpush.bf16.msra.mxu0 0
    %1529 = vmatpush.bf16.msra.mxu0 0
    %1530 = vmatpush.bf16.msra.mxu0 0
    %1531 = vmatpush.bf16.msra.mxu0 0
    %1532 = vmatpush.bf16.msra.mxu0 0
    %1533 = vmatpush.bf16.msra.mxu0 %v234
    %1534 = vmatpush.bf16.msra.mxu0 %v233
    %1535 = vmatmul.bf16.gmra.mxu0 %v1525
    %v1536 = vpop.f32.mrf.mxu0
    %v1537 = vadd.f32 0.0, %v1536
    %v1538 = vpop.f32.mrf.mxu0
    %1539 = vdwg.mxu0
    %v1540 = vadd.f32 %v1504, %v1537
    %v1541 = vadd.f32 %v1540, %v420
    %v1542 = vxor.u32 %v1541, 2147483648
    %v1543 = vmul.f32 %v1542, 1.442695
    %v1544 = vpow.pop %v1543
    %v1545 = vadd.f32 %v1544, 1.0
    %v1546 = vrcp.pop %v1545
    %v1547 = vmul.f32 %v1545, %v1546
    %v1548 = vsub.f32 1.0, %v1547
    %v1549 = vmul.f32 %v1546, %v1548
    %v1550 = vadd.f32 %v1546, %v1549
    %vm1551 = vweird.f32 %v1545
    %vm1552 = vweird.f32 %v1546
    %vm1553 = vmor %vm1551, %vm1552
    %v1554 = vsel %vm1553, %v1546, %v1550
    %v1555 = vand.u32 2147483647, %v1545
    %vm1556 = vcmp.eq.f32.partialorder %v1555, 8.507059e+37
    %v1557 = vand.u32 %v1545, 2147483648
    %v1558 = vor.u32 1.1754944e-38, %v1557
    %v1559 = vsel %vm1556, %v1558, %v1554
    %v1560 = vmul.f32 1.0, %v1559
    %v1561 = vtanh.pop %v1541
    %v1562 = vmul.f32 %v1560, %v1385
    %1564 = vrot.lane.b32.xlu0 %v1561, 64
    %v1565 = vpop.permute.xlu0 %1564
    %v1567 = vmul.f32 %v1560, %v1565
    %1569 = vrot.lane.b32.xlu0 %v1567, 32
    %v1570 = vpop.permute.xlu0 %1569
    %v1572 = vadd.f32 %v1562, %v1570
    %v1573 = vtanh.pop %v1572
    %1575 = vrot.lane.b32.xlu0 %v1573, 64
    %v1576 = vpop.permute.xlu0 %1575
    %v1578 = vmul.f32 %v1560, %v1576
    %v1580 = vrot.slane %v1517, 1
    %v1581 = vrot.slane %v1517, 2
    %v1584 = vadd.f32 %v276, %v1580
    %v1585 = vadd.f32 %v281, %v1581
    %v1586 = vxor.u32 %v1584, 2147483648
    %v1587 = vxor.u32 %v1585, 2147483648
    %v1588 = vmul.f32 %v1586, 1.442695
    %v1589 = vpow.pop %v1588
    %v1590 = vmul.f32 %v1587, 1.442695
    %v1591 = vpow.pop %v1590
    %v1592 = vadd.f32 %v1589, 1.0
    %v1593 = vadd.f32 %v1591, 1.0
    %v1594 = vrcp.pop %v1592
    %v1595 = vmul.f32 %v1592, %v1594
    %v1596 = vsub.f32 1.0, %v1595
    %v1597 = vmul.f32 %v1594, %v1596
    %v1598 = vadd.f32 %v1594, %v1597
    %vm1599 = vweird.f32 %v1592
    %vm1600 = vweird.f32 %v1594
    %vm1601 = vmor %vm1599, %vm1600
    %v1602 = vsel %vm1601, %v1594, %v1598
    %v1603 = vand.u32 2147483647, %v1592
    %vm1604 = vcmp.eq.f32.partialorder %v1603, 8.507059e+37
    %v1605 = vand.u32 %v1592, 2147483648
    %v1606 = vor.u32 1.1754944e-38, %v1605
    %v1607 = vsel %vm1604, %v1606, %v1602
    %v1608 = vmul.f32 1.0, %v1607
    %v1609 = vrcp.pop %v1593
    %v1610 = vmul.f32 %v1593, %v1609
    %v1611 = vsub.f32 1.0, %v1610
    %v1612 = vmul.f32 %v1609, %v1611
    %v1613 = vadd.f32 %v1609, %v1612
    %vm1614 = vweird.f32 %v1593
    %vm1615 = vweird.f32 %v1609
    %vm1616 = vmor %vm1614, %vm1615
    %v1617 = vsel %vm1616, %v1609, %v1613
    %v1618 = vand.u32 2147483647, %v1593
    %vm1619 = vcmp.eq.f32.partialorder %v1618, 8.507059e+37
    %v1620 = vand.u32 %v1593, 2147483648
    %v1621 = vor.u32 1.1754944e-38, %v1620
    %v1622 = vsel %vm1619, %v1621, %v1617
    %v1623 = vmul.f32 1.0, %v1622
    %v1624 = vtanh.pop %v1584
    %v1625 = vtanh.pop %v1585
    %v1628 = vrot.slane %v1465, 7
    %v1629 = vrot.slane %v1466, 7
    %v1632 = vmul.f32 %v1608, %v1628
    %v1633 = vmul.f32 %v1623, %v1629
    %1636 = vrot.lane.b32.xlu0 %v1624, 64
    %v1637 = vpop.permute.xlu0 %1636
    %1638 = vrot.lane.b32.xlu0 %v1625, 64
    %v1639 = vpop.permute.xlu0 %1638
    %v1642 = vmul.f32 %v1608, %v1637
    %v1643 = vmul.f32 %v1623, %v1639
    %1646 = vrot.lane.b32.xlu0 %v1642, 32
    %v1647 = vpop.permute.xlu0 %1646
    %1648 = vrot.lane.b32.xlu0 %v1643, 32
    %v1649 = vpop.permute.xlu0 %1648
    %v1652 = vadd.f32 %v1632, %v1647
    %v1653 = vadd.f32 %v1633, %v1649
    %v1654 = vtanh.pop %v1652
    %v1655 = vtanh.pop %v1653
    %1658 = vrot.lane.b32.xlu0 %v1654, 64
    %v1659 = vpop.permute.xlu0 %1658
    %1660 = vrot.lane.b32.xlu0 %v1655, 64
    %v1661 = vpop.permute.xlu0 %1660
    %v1664 = vmul.f32 %v1608, %v1659
    %v1665 = vmul.f32 %v1623, %v1661
    %v1666 = vpack.c.bf16 %v1664, %v1664
    %v1667 = vpack.c.bf16 %v1665, %v1665
    %v1670 = vunpack.c.l.b16 %v1666
    %v1671 = vunpack.c.l.b16 %v1667
    %v1672 = vrot.slane %v1670, 7
    %v1673 = vrot.slane %v1671, 6
    %v1674 = vsel %vm368, %v1673, %v1672
    %v1675 = vpack.c.b16 %v1674, %v1674
    %1676 = vrot.lane.b32.xlu0 %v1675, 32
    %v1677 = vpop.permute.xlu0 %1676
    %v1679 = vsel %vm373, %v1677, 0
    %1681 = vmatpush.bf16.msra.mxu0 0
    %1682 = vmatpush.bf16.msra.mxu0 0
    %1683 = vmatpush.bf16.msra.mxu0 0
    %1684 = vmatpush.bf16.msra.mxu0 0
    %1685 = vmatpush.bf16.msra.mxu0 0
    %1686 = vmatpush.bf16.msra.mxu0 0
    %1687 = vmatpush.bf16.msra.mxu0 %v246
    %1688 = vmatpush.bf16.msra.mxu0 %v244
    %1689 = vmatmul.bf16.gmra.mxu0 %v1679
    %v1690 = vpop.f32.mrf.mxu0
    %v1691 = vadd.f32 0.0, %v1690
    %v1692 = vpop.f32.mrf.mxu0
    %1693 = vdwg.mxu0
    %1694 = vmatpush.bf16.msra.mxu0 0
    %1695 = vmatpush.bf16.msra.mxu0 0
    %1696 = vmatpush.bf16.msra.mxu0 0
    %1697 = vmatpush.bf16.msra.mxu0 0
    %1698 = vmatpush.bf16.msra.mxu0 0
    %1699 = vmatpush.bf16.msra.mxu0 0
    %1700 = vmatpush.bf16.msra.mxu0 %v247
    %1701 = vmatpush.bf16.msra.mxu0 %v245
    %1702 = vmatmul.bf16.gmra.mxu0 %v1679
    %v1703 = vpop.f32.mrf.mxu0
    %v1704 = vadd.f32 0.0, %v1703
    %v1705 = vpop.f32.mrf.mxu0
    %1706 = vdwg.mxu0
    %v1707 = vpack.c.bf16 %v1578, %v1578
    %1709 = vrot.lane.b32.xlu0 %v1707, 32
    %v1710 = vpop.permute.xlu0 %1709
    %v1712 = vsel %vm373, %v1710, 0
    %1714 = vmatpush.bf16.msra.mxu0 0
    %1715 = vmatpush.bf16.msra.mxu0 0
    %1716 = vmatpush.bf16.msra.mxu0 0
    %1717 = vmatpush.bf16.msra.mxu0 0
    %1718 = vmatpush.bf16.msra.mxu0 0
    %1719 = vmatpush.bf16.msra.mxu0 0
    %1720 = vmatpush.bf16.msra.mxu0 %v234
    %1721 = vmatpush.bf16.msra.mxu0 %v233
    %1722 = vmatmul.bf16.gmra.mxu0 %v1712
    %v1723 = vpop.f32.mrf.mxu0
    %v1724 = vadd.f32 0.0, %v1723
    %v1725 = vpop.f32.mrf.mxu0
    %1726 = vdwg.mxu0
    %v1727 = vadd.f32 %v1691, %v1724
    %v1728 = vadd.f32 %v1727, %v420
    %v1729 = vxor.u32 %v1728, 2147483648
    %v1730 = vmul.f32 %v1729, 1.442695
    %v1731 = vpow.pop %v1730
    %v1732 = vadd.f32 %v1731, 1.0
    %v1733 = vrcp.pop %v1732
    %v1734 = vmul.f32 %v1732, %v1733
    %v1735 = vsub.f32 1.0, %v1734
    %v1736 = vmul.f32 %v1733, %v1735
    %v1737 = vadd.f32 %v1733, %v1736
    %vm1738 = vweird.f32 %v1732
    %vm1739 = vweird.f32 %v1733
    %vm1740 = vmor %vm1738, %vm1739
    %v1741 = vsel %vm1740, %v1733, %v1737
    %v1742 = vand.u32 2147483647, %v1732
    %vm1743 = vcmp.eq.f32.partialorder %v1742, 8.507059e+37
    %v1744 = vand.u32 %v1732, 2147483648
    %v1745 = vor.u32 1.1754944e-38, %v1744
    %v1746 = vsel %vm1743, %v1745, %v1741
    %v1747 = vmul.f32 1.0, %v1746
    %v1748 = vtanh.pop %v1728
    %v1749 = vmul.f32 %v1747, %v1572
    %1751 = vrot.lane.b32.xlu0 %v1748, 64
    %v1752 = vpop.permute.xlu0 %1751
    %v1754 = vmul.f32 %v1747, %v1752
    %1756 = vrot.lane.b32.xlu0 %v1754, 32
    %v1757 = vpop.permute.xlu0 %1756
    %v1759 = vadd.f32 %v1749, %v1757
    %v1760 = vtanh.pop %v1759
    %1762 = vrot.lane.b32.xlu0 %v1760, 64
    %v1763 = vpop.permute.xlu0 %1762
    %v1765 = vmul.f32 %v1747, %v1763
    %v1767 = vrot.slane %v1704, 1
    %v1770 = vadd.f32 %v278, %v1704
    %v1771 = vadd.f32 %v283, %v1767
    %v1772 = vxor.u32 %v1770, 2147483648
    %v1773 = vxor.u32 %v1771, 2147483648
    %v1774 = vmul.f32 %v1772, 1.442695
    %v1775 = vpow.pop %v1774
    %v1776 = vmul.f32 %v1773, 1.442695
    %v1777 = vpow.pop %v1776
    %v1778 = vadd.f32 %v1775, 1.0
    %v1779 = vadd.f32 %v1777, 1.0
    %v1780 = vrcp.pop %v1778
    %v1781 = vmul.f32 %v1778, %v1780
    %v1782 = vsub.f32 1.0, %v1781
    %v1783 = vmul.f32 %v1780, %v1782
    %v1784 = vadd.f32 %v1780, %v1783
    %vm1785 = vweird.f32 %v1778
    %vm1786 = vweird.f32 %v1780
    %vm1787 = vmor %vm1785, %vm1786
    %v1788 = vsel %vm1787, %v1780, %v1784
    %v1789 = vand.u32 2147483647, %v1778
    %vm1790 = vcmp.eq.f32.partialorder %v1789, 8.507059e+37
    %v1791 = vand.u32 %v1778, 2147483648
    %v1792 = vor.u32 1.1754944e-38, %v1791
    %v1793 = vsel %vm1790, %v1792, %v1788
    %v1794 = vmul.f32 1.0, %v1793
    %v1795 = vrcp.pop %v1779
    %v1796 = vmul.f32 %v1779, %v1795
    %v1797 = vsub.f32 1.0, %v1796
    %v1798 = vmul.f32 %v1795, %v1797
    %v1799 = vadd.f32 %v1795, %v1798
    %vm1800 = vweird.f32 %v1779
    %vm1801 = vweird.f32 %v1795
    %vm1802 = vmor %vm1800, %vm1801
    %v1803 = vsel %vm1802, %v1795, %v1799
    %v1804 = vand.u32 2147483647, %v1779
    %vm1805 = vcmp.eq.f32.partialorder %v1804, 8.507059e+37
    %v1806 = vand.u32 %v1779, 2147483648
    %v1807 = vor.u32 1.1754944e-38, %v1806
    %v1808 = vsel %vm1805, %v1807, %v1803
    %v1809 = vmul.f32 1.0, %v1808
    %v1810 = vtanh.pop %v1770
    %v1811 = vtanh.pop %v1771
    %v1814 = vrot.slane %v1652, 7
    %v1815 = vrot.slane %v1653, 7
    %v1818 = vmul.f32 %v1794, %v1814
    %v1819 = vmul.f32 %v1809, %v1815
    %1822 = vrot.lane.b32.xlu0 %v1810, 64
    %v1823 = vpop.permute.xlu0 %1822
    %1824 = vrot.lane.b32.xlu0 %v1811, 64
    %v1825 = vpop.permute.xlu0 %1824
    %v1828 = vmul.f32 %v1794, %v1823
    %v1829 = vmul.f32 %v1809, %v1825
    %1832 = vrot.lane.b32.xlu0 %v1828, 32
    %v1833 = vpop.permute.xlu0 %1832
    %1834 = vrot.lane.b32.xlu0 %v1829, 32
    %v1835 = vpop.permute.xlu0 %1834
    %v1838 = vadd.f32 %v1818, %v1833
    %v1839 = vadd.f32 %v1819, %v1835
    %v1840 = vtanh.pop %v1838
    %v1841 = vtanh.pop %v1839
    %1844 = vrot.lane.b32.xlu0 %v1840, 64
    %v1845 = vpop.permute.xlu0 %1844
    %1846 = vrot.lane.b32.xlu0 %v1841, 64
    %v1847 = vpop.permute.xlu0 %1846
    %v1850 = vmul.f32 %v1794, %v1845
    %v1851 = vmul.f32 %v1809, %v1847
    %v1852 = vpack.c.bf16 %v1850, %v1850
    %v1853 = vpack.c.bf16 %v1851, %v1851
    %v1856 = vunpack.c.l.b16 %v1852
    %v1857 = vunpack.c.l.b16 %v1853
    %v1858 = vrot.slane %v1857, 7
    %v1859 = vsel %vm368, %v1858, %v1856
    %v1860 = vpack.c.b16 %v1859, %v1859
    %1861 = vrot.lane.b32.xlu0 %v1860, 32
    %v1862 = vpop.permute.xlu0 %1861
    %v1864 = vsel %vm373, %v1862, 0
    %1866 = vmatpush.bf16.msra.mxu0 0
    %1867 = vmatpush.bf16.msra.mxu0 0
    %1868 = vmatpush.bf16.msra.mxu0 0
    %1869 = vmatpush.bf16.msra.mxu0 0
    %1870 = vmatpush.bf16.msra.mxu0 0
    %1871 = vmatpush.bf16.msra.mxu0 0
    %1872 = vmatpush.bf16.msra.mxu0 %v246
    %1873 = vmatpush.bf16.msra.mxu0 %v244
    %1874 = vmatmul.bf16.gmra.mxu0 %v1864
    %v1875 = vpop.f32.mrf.mxu0
    %v1876 = vadd.f32 0.0, %v1875
    %v1877 = vpop.f32.mrf.mxu0
    %1878 = vdwg.mxu0
    %1879 = vmatpush.bf16.msra.mxu0 0
    %1880 = vmatpush.bf16.msra.mxu0 0
    %1881 = vmatpush.bf16.msra.mxu0 0
    %1882 = vmatpush.bf16.msra.mxu0 0
    %1883 = vmatpush.bf16.msra.mxu0 0
    %1884 = vmatpush.bf16.msra.mxu0 0
    %1885 = vmatpush.bf16.msra.mxu0 %v247
    %1886 = vmatpush.bf16.msra.mxu0 %v245
    %1887 = vmatmul.bf16.gmra.mxu0 %v1864
    %v1888 = vpop.f32.mrf.mxu0
    %v1889 = vadd.f32 0.0, %v1888
    %v1890 = vpop.f32.mrf.mxu0
    %1891 = vdwg.mxu0
    %v1892 = vpack.c.bf16 %v1765, %v1765
    %1894 = vrot.lane.b32.xlu0 %v1892, 32
    %v1895 = vpop.permute.xlu0 %1894
    %v1897 = vsel %vm373, %v1895, 0
    %1899 = vmatpush.bf16.msra.mxu0 0
    %1900 = vmatpush.bf16.msra.mxu0 0
    %1901 = vmatpush.bf16.msra.mxu0 0
    %1902 = vmatpush.bf16.msra.mxu0 0
    %1903 = vmatpush.bf16.msra.mxu0 0
    %1904 = vmatpush.bf16.msra.mxu0 0
    %1905 = vmatpush.bf16.msra.mxu0 %v234
    %1906 = vmatpush.bf16.msra.mxu0 %v233
    %1907 = vmatmul.bf16.gmra.mxu0 %v1897
    %v1908 = vpop.f32.mrf.mxu0
    %v1909 = vadd.f32 0.0, %v1908
    %v1910 = vpop.f32.mrf.mxu0
    %1911 = vdwg.mxu0
    %v1912 = vadd.f32 %v1876, %v1909
    %v1913 = vadd.f32 %v1912, %v420
    %v1914 = vxor.u32 %v1913, 2147483648
    %v1915 = vmul.f32 %v1914, 1.442695
    %v1916 = vpow.pop %v1915
    %v1917 = vadd.f32 %v1916, 1.0
    %v1918 = vrcp.pop %v1917
    %v1919 = vmul.f32 %v1917, %v1918
    %v1920 = vsub.f32 1.0, %v1919
    %v1921 = vmul.f32 %v1918, %v1920
    %v1922 = vadd.f32 %v1918, %v1921
    %vm1923 = vweird.f32 %v1917
    %vm1924 = vweird.f32 %v1918
    %vm1925 = vmor %vm1923, %vm1924
    %v1926 = vsel %vm1925, %v1918, %v1922
    %v1927 = vand.u32 2147483647, %v1917
    %vm1928 = vcmp.eq.f32.partialorder %v1927, 8.507059e+37
    %v1929 = vand.u32 %v1917, 2147483648
    %v1930 = vor.u32 1.1754944e-38, %v1929
    %v1931 = vsel %vm1928, %v1930, %v1926
    %v1932 = vmul.f32 1.0, %v1931
    %v1933 = vtanh.pop %v1913
    %v1934 = vmul.f32 %v1932, %v1759
    %1936 = vrot.lane.b32.xlu0 %v1933, 64
    %v1937 = vpop.permute.xlu0 %1936
    %v1939 = vmul.f32 %v1932, %v1937
    %1941 = vrot.lane.b32.xlu0 %v1939, 32
    %v1942 = vpop.permute.xlu0 %1941
    %v1944 = vadd.f32 %v1934, %v1942
    %v1945 = vtanh.pop %v1944
    %1947 = vrot.lane.b32.xlu0 %v1945, 64
    %v1948 = vpop.permute.xlu0 %1947
    %v1950 = vmul.f32 %v1932, %v1948
    %v1952 = vrot.slane %v1889, 7
    %v1955 = vadd.f32 %v278, %v1952
    %v1956 = vadd.f32 %v283, %v1889
    %v1957 = vxor.u32 %v1955, 2147483648
    %v1958 = vxor.u32 %v1956, 2147483648
    %v1959 = vmul.f32 %v1957, 1.442695
    %v1960 = vpow.pop %v1959
    %v1961 = vmul.f32 %v1958, 1.442695
    %v1962 = vpow.pop %v1961
    %v1963 = vadd.f32 %v1960, 1.0
    %v1964 = vadd.f32 %v1962, 1.0
    %v1965 = vrcp.pop %v1963
    %v1966 = vmul.f32 %v1963, %v1965
    %v1967 = vsub.f32 1.0, %v1966
    %v1968 = vmul.f32 %v1965, %v1967
    %v1969 = vadd.f32 %v1965, %v1968
    %vm1970 = vweird.f32 %v1963
    %vm1971 = vweird.f32 %v1965
    %vm1972 = vmor %vm1970, %vm1971
    %v1973 = vsel %vm1972, %v1965, %v1969
    %v1974 = vand.u32 2147483647, %v1963
    %vm1975 = vcmp.eq.f32.partialorder %v1974, 8.507059e+37
    %v1976 = vand.u32 %v1963, 2147483648
    %v1977 = vor.u32 1.1754944e-38, %v1976
    %v1978 = vsel %vm1975, %v1977, %v1973
    %v1979 = vmul.f32 1.0, %v1978
    %v1980 = vrcp.pop %v1964
    %v1981 = vmul.f32 %v1964, %v1980
    %v1982 = vsub.f32 1.0, %v1981
    %v1983 = vmul.f32 %v1980, %v1982
    %v1984 = vadd.f32 %v1980, %v1983
    %vm1985 = vweird.f32 %v1964
    %vm1986 = vweird.f32 %v1980
    %vm1987 = vmor %vm1985, %vm1986
    %v1988 = vsel %vm1987, %v1980, %v1984
    %v1989 = vand.u32 2147483647, %v1964
    %vm1990 = vcmp.eq.f32.partialorder %v1989, 8.507059e+37
    %v1991 = vand.u32 %v1964, 2147483648
    %v1992 = vor.u32 1.1754944e-38, %v1991
    %v1993 = vsel %vm1990, %v1992, %v1988
    %v1994 = vmul.f32 1.0, %v1993
    %v1995 = vtanh.pop %v1955
    %v1996 = vtanh.pop %v1956
    %v1999 = vrot.slane %v1838, 7
    %v2000 = vrot.slane %v1839, 7
    %v2003 = vmul.f32 %v1979, %v1999
    %v2004 = vmul.f32 %v1994, %v2000
    %2007 = vrot.lane.b32.xlu0 %v1995, 64
    %v2008 = vpop.permute.xlu0 %2007
    %2009 = vrot.lane.b32.xlu0 %v1996, 64
    %v2010 = vpop.permute.xlu0 %2009
    %v2013 = vmul.f32 %v1979, %v2008
    %v2014 = vmul.f32 %v1994, %v2010
    %2017 = vrot.lane.b32.xlu0 %v2013, 32
    %v2018 = vpop.permute.xlu0 %2017
    %2019 = vrot.lane.b32.xlu0 %v2014, 32
    %v2020 = vpop.permute.xlu0 %2019
    %v2023 = vadd.f32 %v2003, %v2018
    %v2024 = vadd.f32 %v2004, %v2020
    %v2025 = vtanh.pop %v2023
    %v2026 = vtanh.pop %v2024
    %2029 = vrot.lane.b32.xlu0 %v2025, 64
    %v2030 = vpop.permute.xlu0 %2029
    %2031 = vrot.lane.b32.xlu0 %v2026, 64
    %v2032 = vpop.permute.xlu0 %2031
    %v2035 = vmul.f32 %v1979, %v2030
    %v2036 = vmul.f32 %v1994, %v2032
    %v2037 = vpack.c.bf16 %v2035, %v2035
    %v2038 = vpack.c.bf16 %v2036, %v2036
    %v2041 = vunpack.c.l.b16 %v2037
    %v2042 = vunpack.c.l.b16 %v2038
    %v2043 = vrot.slane %v2041, 1
    %v2044 = vsel %vm368, %v2042, %v2043
    %v2045 = vpack.c.b16 %v2044, %v2044
    %2046 = vrot.lane.b32.xlu0 %v2045, 32
    %v2047 = vpop.permute.xlu0 %2046
    %v2049 = vsel %vm373, %v2047, 0
    %2051 = vmatpush.bf16.msra.mxu0 0
    %2052 = vmatpush.bf16.msra.mxu0 0
    %2053 = vmatpush.bf16.msra.mxu0 0
    %2054 = vmatpush.bf16.msra.mxu0 0
    %2055 = vmatpush.bf16.msra.mxu0 0
    %2056 = vmatpush.bf16.msra.mxu0 0
    %2057 = vmatpush.bf16.msra.mxu0 %v246
    %2058 = vmatpush.bf16.msra.mxu0 %v244
    %2059 = vmatmul.bf16.gmra.mxu0 %v2049
    %v2060 = vpop.f32.mrf.mxu0
    %v2061 = vadd.f32 0.0, %v2060
    %v2062 = vpop.f32.mrf.mxu0
    %2063 = vdwg.mxu0
    %2064 = vmatpush.bf16.msra.mxu0 0
    %2065 = vmatpush.bf16.msra.mxu0 0
    %2066 = vmatpush.bf16.msra.mxu0 0
    %2067 = vmatpush.bf16.msra.mxu0 0
    %2068 = vmatpush.bf16.msra.mxu0 0
    %2069 = vmatpush.bf16.msra.mxu0 0
    %2070 = vmatpush.bf16.msra.mxu0 %v247
    %2071 = vmatpush.bf16.msra.mxu0 %v245
    %2072 = vmatmul.bf16.gmra.mxu0 %v2049
    %v2073 = vpop.f32.mrf.mxu0
    %v2074 = vadd.f32 0.0, %v2073
    %v2075 = vpop.f32.mrf.mxu0
    %2076 = vdwg.mxu0
    %v2077 = vpack.c.bf16 %v1950, %v1950
    %2079 = vrot.lane.b32.xlu0 %v2077, 32
    %v2080 = vpop.permute.xlu0 %2079
    %v2082 = vsel %vm373, %v2080, 0
    %2084 = vmatpush.bf16.msra.mxu0 0
    %2085 = vmatpush.bf16.msra.mxu0 0
    %2086 = vmatpush.bf16.msra.mxu0 0
    %2087 = vmatpush.bf16.msra.mxu0 0
    %2088 = vmatpush.bf16.msra.mxu0 0
    %2089 = vmatpush.bf16.msra.mxu0 0
    %2090 = vmatpush.bf16.msra.mxu0 %v234
    %2091 = vmatpush.bf16.msra.mxu0 %v233
    %2092 = vmatmul.bf16.gmra.mxu0 %v2082
    %v2093 = vpop.f32.mrf.mxu0
    %v2094 = vadd.f32 0.0, %v2093
    %v2095 = vpop.f32.mrf.mxu0
    %2096 = vdwg.mxu0
    %v2097 = vadd.f32 %v2061, %v2094
    %v2098 = vadd.f32 %v2097, %v420
    %v2099 = vxor.u32 %v2098, 2147483648
    %v2100 = vmul.f32 %v2099, 1.442695
    %v2101 = vpow.pop %v2100
    %v2102 = vadd.f32 %v2101, 1.0
    %v2103 = vrcp.pop %v2102
    %v2104 = vmul.f32 %v2102, %v2103
    %v2105 = vsub.f32 1.0, %v2104
    %v2106 = vmul.f32 %v2103, %v2105
    %v2107 = vadd.f32 %v2103, %v2106
    %vm2108 = vweird.f32 %v2102
    %vm2109 = vweird.f32 %v2103
    %vm2110 = vmor %vm2108, %vm2109
    %v2111 = vsel %vm2110, %v2103, %v2107
    %v2112 = vand.u32 2147483647, %v2102
    %vm2113 = vcmp.eq.f32.partialorder %v2112, 8.507059e+37
    %v2114 = vand.u32 %v2102, 2147483648
    %v2115 = vor.u32 1.1754944e-38, %v2114
    %v2116 = vsel %vm2113, %v2115, %v2111
    %v2117 = vmul.f32 1.0, %v2116
    %v2118 = vtanh.pop %v2098
    %v2119 = vmul.f32 %v2117, %v1944
    %2121 = vrot.lane.b32.xlu0 %v2118, 64
    %v2122 = vpop.permute.xlu0 %2121
    %v2124 = vmul.f32 %v2117, %v2122
    %2126 = vrot.lane.b32.xlu0 %v2124, 32
    %v2127 = vpop.permute.xlu0 %2126
    %v2129 = vadd.f32 %v2119, %v2127
    %v2130 = vtanh.pop %v2129
    %2132 = vrot.lane.b32.xlu0 %v2130, 64
    %v2133 = vpop.permute.xlu0 %2132
    %v2135 = vmul.f32 %v2117, %v2133
    %v2137 = vrot.slane %v2074, 6
    %v2138 = vrot.slane %v2074, 7
    %v2141 = vadd.f32 %v278, %v2137
    %v2142 = vadd.f32 %v283, %v2138
    %v2143 = vxor.u32 %v2141, 2147483648
    %v2144 = vxor.u32 %v2142, 2147483648
    %v2145 = vmul.f32 %v2143, 1.442695
    %v2146 = vpow.pop %v2145
    %v2147 = vmul.f32 %v2144, 1.442695
    %v2148 = vpow.pop %v2147
    %v2149 = vadd.f32 %v2146, 1.0
    %v2150 = vadd.f32 %v2148, 1.0
    %v2151 = vrcp.pop %v2149
    %v2152 = vmul.f32 %v2149, %v2151
    %v2153 = vsub.f32 1.0, %v2152
    %v2154 = vmul.f32 %v2151, %v2153
    %v2155 = vadd.f32 %v2151, %v2154
    %vm2156 = vweird.f32 %v2149
    %vm2157 = vweird.f32 %v2151
    %vm2158 = vmor %vm2156, %vm2157
    %v2159 = vsel %vm2158, %v2151, %v2155
    %v2160 = vand.u32 2147483647, %v2149
    %vm2161 = vcmp.eq.f32.partialorder %v2160, 8.507059e+37
    %v2162 = vand.u32 %v2149, 2147483648
    %v2163 = vor.u32 1.1754944e-38, %v2162
    %v2164 = vsel %vm2161, %v2163, %v2159
    %v2165 = vmul.f32 1.0, %v2164
    %v2166 = vrcp.pop %v2150
    %v2167 = vmul.f32 %v2150, %v2166
    %v2168 = vsub.f32 1.0, %v2167
    %v2169 = vmul.f32 %v2166, %v2168
    %v2170 = vadd.f32 %v2166, %v2169
    %vm2171 = vweird.f32 %v2150
    %vm2172 = vweird.f32 %v2166
    %vm2173 = vmor %vm2171, %vm2172
    %v2174 = vsel %vm2173, %v2166, %v2170
    %v2175 = vand.u32 2147483647, %v2150
    %vm2176 = vcmp.eq.f32.partialorder %v2175, 8.507059e+37
    %v2177 = vand.u32 %v2150, 2147483648
    %v2178 = vor.u32 1.1754944e-38, %v2177
    %v2179 = vsel %vm2176, %v2178, %v2174
    %v2180 = vmul.f32 1.0, %v2179
    %v2181 = vtanh.pop %v2141
    %v2182 = vtanh.pop %v2142
    %v2185 = vrot.slane %v2023, 7
    %v2186 = vrot.slane %v2024, 7
    %v2189 = vmul.f32 %v2165, %v2185
    %v2190 = vmul.f32 %v2180, %v2186
    %2193 = vrot.lane.b32.xlu0 %v2181, 64
    %v2194 = vpop.permute.xlu0 %2193
    %2195 = vrot.lane.b32.xlu0 %v2182, 64
    %v2196 = vpop.permute.xlu0 %2195
    %v2199 = vmul.f32 %v2165, %v2194
    %v2200 = vmul.f32 %v2180, %v2196
    %2203 = vrot.lane.b32.xlu0 %v2199, 32
    %v2204 = vpop.permute.xlu0 %2203
    %2205 = vrot.lane.b32.xlu0 %v2200, 32
    %v2206 = vpop.permute.xlu0 %2205
    %v2209 = vadd.f32 %v2189, %v2204
    %v2210 = vadd.f32 %v2190, %v2206
    %v2211 = vtanh.pop %v2209
    %v2212 = vtanh.pop %v2210
    %2215 = vrot.lane.b32.xlu0 %v2211, 64
    %v2216 = vpop.permute.xlu0 %2215
    %2217 = vrot.lane.b32.xlu0 %v2212, 64
    %v2218 = vpop.permute.xlu0 %2217
    %v2221 = vmul.f32 %v2165, %v2216
    %v2222 = vmul.f32 %v2180, %v2218
    %v2223 = vpack.c.bf16 %v2221, %v2221
    %v2224 = vpack.c.bf16 %v2222, %v2222
    %v2227 = vunpack.c.l.b16 %v2223
    %v2228 = vunpack.c.l.b16 %v2224
    %v2229 = vrot.slane %v2227, 2
    %v2230 = vrot.slane %v2228, 1
    %v2231 = vsel %vm368, %v2230, %v2229
    %v2232 = vpack.c.b16 %v2231, %v2231
    %2233 = vrot.lane.b32.xlu0 %v2232, 32
    %v2234 = vpop.permute.xlu0 %2233
    %v2236 = vsel %vm373, %v2234, 0
    %2238 = vmatpush.bf16.msra.mxu0 0
    %2239 = vmatpush.bf16.msra.mxu0 0
    %2240 = vmatpush.bf16.msra.mxu0 0
    %2241 = vmatpush.bf16.msra.mxu0 0
    %2242 = vmatpush.bf16.msra.mxu0 0
    %2243 = vmatpush.bf16.msra.mxu0 0
    %2244 = vmatpush.bf16.msra.mxu0 %v246
    %2245 = vmatpush.bf16.msra.mxu0 %v244
    %2246 = vmatmul.bf16.gmra.mxu0 %v2236
    %v2247 = vpop.f32.mrf.mxu0
    %v2248 = vadd.f32 0.0, %v2247
    %v2249 = vpop.f32.mrf.mxu0
    %2250 = vdwg.mxu0
    %2251 = vmatpush.bf16.msra.mxu0 0
    %2252 = vmatpush.bf16.msra.mxu0 0
    %2253 = vmatpush.bf16.msra.mxu0 0
    %2254 = vmatpush.bf16.msra.mxu0 0
    %2255 = vmatpush.bf16.msra.mxu0 0
    %2256 = vmatpush.bf16.msra.mxu0 0
    %2257 = vmatpush.bf16.msra.mxu0 %v247
    %2258 = vmatpush.bf16.msra.mxu0 %v245
    %2259 = vmatmul.bf16.gmra.mxu0 %v2236
    %v2260 = vpop.f32.mrf.mxu0
    %v2261 = vadd.f32 0.0, %v2260
    %v2262 = vpop.f32.mrf.mxu0
    %2263 = vdwg.mxu0
    %v2264 = vpack.c.bf16 %v2135, %v2135
    %2266 = vrot.lane.b32.xlu0 %v2264, 32
    %v2267 = vpop.permute.xlu0 %2266
    %v2269 = vsel %vm373, %v2267, 0
    %2271 = vmatpush.bf16.msra.mxu0 0
    %2272 = vmatpush.bf16.msra.mxu0 0
    %2273 = vmatpush.bf16.msra.mxu0 0
    %2274 = vmatpush.bf16.msra.mxu0 0
    %2275 = vmatpush.bf16.msra.mxu0 0
    %2276 = vmatpush.bf16.msra.mxu0 0
    %2277 = vmatpush.bf16.msra.mxu0 %v234
    %2278 = vmatpush.bf16.msra.mxu0 %v233
    %2279 = vmatmul.bf16.gmra.mxu0 %v2269
    %v2280 = vpop.f32.mrf.mxu0
    %v2281 = vadd.f32 0.0, %v2280
    %v2282 = vpop.f32.mrf.mxu0
    %2283 = vdwg.mxu0
    %v2284 = vadd.f32 %v2248, %v2281
    %v2285 = vadd.f32 %v2284, %v420
    %v2286 = vxor.u32 %v2285, 2147483648
    %v2287 = vmul.f32 %v2286, 1.442695
    %v2288 = vpow.pop %v2287
    %v2289 = vadd.f32 %v2288, 1.0
    %v2290 = vrcp.pop %v2289
    %v2291 = vmul.f32 %v2289, %v2290
    %v2292 = vsub.f32 1.0, %v2291
    %v2293 = vmul.f32 %v2290, %v2292
    %v2294 = vadd.f32 %v2290, %v2293
    %vm2295 = vweird.f32 %v2289
    %vm2296 = vweird.f32 %v2290
    %vm2297 = vmor %vm2295, %vm2296
    %v2298 = vsel %vm2297, %v2290, %v2294
    %v2299 = vand.u32 2147483647, %v2289
    %vm2300 = vcmp.eq.f32.partialorder %v2299, 8.507059e+37
    %v2301 = vand.u32 %v2289, 2147483648
    %v2302 = vor.u32 1.1754944e-38, %v2301
    %v2303 = vsel %vm2300, %v2302, %v2298
    %v2304 = vmul.f32 1.0, %v2303
    %v2305 = vtanh.pop %v2285
    %v2306 = vmul.f32 %v2304, %v2129
    %2308 = vrot.lane.b32.xlu0 %v2305, 64
    %v2309 = vpop.permute.xlu0 %2308
    %v2311 = vmul.f32 %v2304, %v2309
    %2313 = vrot.lane.b32.xlu0 %v2311, 32
    %v2314 = vpop.permute.xlu0 %2313
    %v2316 = vadd.f32 %v2306, %v2314
    %v2317 = vtanh.pop %v2316
    %2319 = vrot.lane.b32.xlu0 %v2317, 64
    %v2320 = vpop.permute.xlu0 %2319
    %v2322 = vmul.f32 %v2304, %v2320
    %v2324 = vrot.slane %v2261, 5
    %v2325 = vrot.slane %v2261, 6
    %v2328 = vadd.f32 %v278, %v2324
    %v2329 = vadd.f32 %v283, %v2325
    %v2330 = vxor.u32 %v2328, 2147483648
    %v2331 = vxor.u32 %v2329, 2147483648
    %v2332 = vmul.f32 %v2330, 1.442695
    %v2333 = vpow.pop %v2332
    %v2334 = vmul.f32 %v2331, 1.442695
    %v2335 = vpow.pop %v2334
    %v2336 = vadd.f32 %v2333, 1.0
    %v2337 = vadd.f32 %v2335, 1.0
    %v2338 = vrcp.pop %v2336
    %v2339 = vmul.f32 %v2336, %v2338
    %v2340 = vsub.f32 1.0, %v2339
    %v2341 = vmul.f32 %v2338, %v2340
    %v2342 = vadd.f32 %v2338, %v2341
    %vm2343 = vweird.f32 %v2336
    %vm2344 = vweird.f32 %v2338
    %vm2345 = vmor %vm2343, %vm2344
    %v2346 = vsel %vm2345, %v2338, %v2342
    %v2347 = vand.u32 2147483647, %v2336
    %vm2348 = vcmp.eq.f32.partialorder %v2347, 8.507059e+37
    %v2349 = vand.u32 %v2336, 2147483648
    %v2350 = vor.u32 1.1754944e-38, %v2349
    %v2351 = vsel %vm2348, %v2350, %v2346
    %v2352 = vmul.f32 1.0, %v2351
    %v2353 = vrcp.pop %v2337
    %v2354 = vmul.f32 %v2337, %v2353
    %v2355 = vsub.f32 1.0, %v2354
    %v2356 = vmul.f32 %v2353, %v2355
    %v2357 = vadd.f32 %v2353, %v2356
    %vm2358 = vweird.f32 %v2337
    %vm2359 = vweird.f32 %v2353
    %vm2360 = vmor %vm2358, %vm2359
    %v2361 = vsel %vm2360, %v2353, %v2357
    %v2362 = vand.u32 2147483647, %v2337
    %vm2363 = vcmp.eq.f32.partialorder %v2362, 8.507059e+37
    %v2364 = vand.u32 %v2337, 2147483648
    %v2365 = vor.u32 1.1754944e-38, %v2364
    %v2366 = vsel %vm2363, %v2365, %v2361
    %v2367 = vmul.f32 1.0, %v2366
    %v2368 = vtanh.pop %v2328
    %v2369 = vtanh.pop %v2329
    %v2372 = vrot.slane %v2209, 7
    %v2373 = vrot.slane %v2210, 7
    %v2376 = vmul.f32 %v2352, %v2372
    %v2377 = vmul.f32 %v2367, %v2373
    %2380 = vrot.lane.b32.xlu0 %v2368, 64
    %v2381 = vpop.permute.xlu0 %2380
    %2382 = vrot.lane.b32.xlu0 %v2369, 64
    %v2383 = vpop.permute.xlu0 %2382
    %v2386 = vmul.f32 %v2352, %v2381
    %v2387 = vmul.f32 %v2367, %v2383
    %2390 = vrot.lane.b32.xlu0 %v2386, 32
    %v2391 = vpop.permute.xlu0 %2390
    %2392 = vrot.lane.b32.xlu0 %v2387, 32
    %v2393 = vpop.permute.xlu0 %2392
    %v2396 = vadd.f32 %v2376, %v2391
    %v2397 = vadd.f32 %v2377, %v2393
    %v2398 = vtanh.pop %v2396
    %v2399 = vtanh.pop %v2397
    %2402 = vrot.lane.b32.xlu0 %v2398, 64
    %v2403 = vpop.permute.xlu0 %2402
    %2404 = vrot.lane.b32.xlu0 %v2399, 64
    %v2405 = vpop.permute.xlu0 %2404
    %v2408 = vmul.f32 %v2352, %v2403
    %v2409 = vmul.f32 %v2367, %v2405
    %v2410 = vpack.c.bf16 %v2408, %v2408
    %v2411 = vpack.c.bf16 %v2409, %v2409
    %v2414 = vunpack.c.l.b16 %v2410
    %v2415 = vunpack.c.l.b16 %v2411
    %v2416 = vrot.slane %v2414, 3
    %v2417 = vrot.slane %v2415, 2
    %v2418 = vsel %vm368, %v2417, %v2416
    %v2419 = vpack.c.b16 %v2418, %v2418
    %2420 = vrot.lane.b32.xlu0 %v2419, 32
    %v2421 = vpop.permute.xlu0 %2420
    %v2423 = vsel %vm373, %v2421, 0
    %2425 = vmatpush.bf16.msra.mxu0 0
    %2426 = vmatpush.bf16.msra.mxu0 0
    %2427 = vmatpush.bf16.msra.mxu0 0
    %2428 = vmatpush.bf16.msra.mxu0 0
    %2429 = vmatpush.bf16.msra.mxu0 0
    %2430 = vmatpush.bf16.msra.mxu0 0
    %2431 = vmatpush.bf16.msra.mxu0 %v246
    %2432 = vmatpush.bf16.msra.mxu0 %v244
    %2433 = vmatmul.bf16.gmra.mxu0 %v2423
    %v2434 = vpop.f32.mrf.mxu0
    %v2435 = vadd.f32 0.0, %v2434
    %v2436 = vpop.f32.mrf.mxu0
    %2437 = vdwg.mxu0
    %2438 = vmatpush.bf16.msra.mxu0 0
    %2439 = vmatpush.bf16.msra.mxu0 0
    %2440 = vmatpush.bf16.msra.mxu0 0
    %2441 = vmatpush.bf16.msra.mxu0 0
    %2442 = vmatpush.bf16.msra.mxu0 0
    %2443 = vmatpush.bf16.msra.mxu0 0
    %2444 = vmatpush.bf16.msra.mxu0 %v247
    %2445 = vmatpush.bf16.msra.mxu0 %v245
    %2446 = vmatmul.bf16.gmra.mxu0 %v2423
    %v2447 = vpop.f32.mrf.mxu0
    %v2448 = vadd.f32 0.0, %v2447
    %v2449 = vpop.f32.mrf.mxu0
    %2450 = vdwg.mxu0
    %v2451 = vpack.c.bf16 %v2322, %v2322
    %2453 = vrot.lane.b32.xlu0 %v2451, 32
    %v2454 = vpop.permute.xlu0 %2453
    %v2456 = vsel %vm373, %v2454, 0
    %2458 = vmatpush.bf16.msra.mxu0 0
    %2459 = vmatpush.bf16.msra.mxu0 0
    %2460 = vmatpush.bf16.msra.mxu0 0
    %2461 = vmatpush.bf16.msra.mxu0 0
    %2462 = vmatpush.bf16.msra.mxu0 0
    %2463 = vmatpush.bf16.msra.mxu0 0
    %2464 = vmatpush.bf16.msra.mxu0 %v234
    %2465 = vmatpush.bf16.msra.mxu0 %v233
    %2466 = vmatmul.bf16.gmra.mxu0 %v2456
    %v2467 = vpop.f32.mrf.mxu0
    %v2468 = vadd.f32 0.0, %v2467
    %v2469 = vpop.f32.mrf.mxu0
    %2470 = vdwg.mxu0
    %v2471 = vadd.f32 %v2435, %v2468
    %v2472 = vadd.f32 %v2471, %v420
    %v2473 = vxor.u32 %v2472, 2147483648
    %v2474 = vmul.f32 %v2473, 1.442695
    %v2475 = vpow.pop %v2474
    %v2476 = vadd.f32 %v2475, 1.0
    %v2477 = vrcp.pop %v2476
    %v2478 = vmul.f32 %v2476, %v2477
    %v2479 = vsub.f32 1.0, %v2478
    %v2480 = vmul.f32 %v2477, %v2479
    %v2481 = vadd.f32 %v2477, %v2480
    %vm2482 = vweird.f32 %v2476
    %vm2483 = vweird.f32 %v2477
    %vm2484 = vmor %vm2482, %vm2483
    %v2485 = vsel %vm2484, %v2477, %v2481
    %v2486 = vand.u32 2147483647, %v2476
    %vm2487 = vcmp.eq.f32.partialorder %v2486, 8.507059e+37
    %v2488 = vand.u32 %v2476, 2147483648
    %v2489 = vor.u32 1.1754944e-38, %v2488
    %v2490 = vsel %vm2487, %v2489, %v2485
    %v2491 = vmul.f32 1.0, %v2490
    %v2492 = vtanh.pop %v2472
    %v2493 = vmul.f32 %v2491, %v2316
    %2495 = vrot.lane.b32.xlu0 %v2492, 64
    %v2496 = vpop.permute.xlu0 %2495
    %v2498 = vmul.f32 %v2491, %v2496
    %2500 = vrot.lane.b32.xlu0 %v2498, 32
    %v2501 = vpop.permute.xlu0 %2500
    %v2503 = vadd.f32 %v2493, %v2501
    %v2504 = vtanh.pop %v2503
    %2506 = vrot.lane.b32.xlu0 %v2504, 64
    %v2507 = vpop.permute.xlu0 %2506
    %v2509 = vmul.f32 %v2491, %v2507
    %v2511 = vrot.slane %v2448, 4
    %v2512 = vrot.slane %v2448, 5
    %v2515 = vadd.f32 %v278, %v2511
    %v2516 = vadd.f32 %v283, %v2512
    %v2517 = vxor.u32 %v2515, 2147483648
    %v2518 = vxor.u32 %v2516, 2147483648
    %v2519 = vmul.f32 %v2517, 1.442695
    %v2520 = vpow.pop %v2519
    %v2521 = vmul.f32 %v2518, 1.442695
    %v2522 = vpow.pop %v2521
    %v2523 = vadd.f32 %v2520, 1.0
    %v2524 = vadd.f32 %v2522, 1.0
    %v2525 = vrcp.pop %v2523
    %v2526 = vmul.f32 %v2523, %v2525
    %v2527 = vsub.f32 1.0, %v2526
    %v2528 = vmul.f32 %v2525, %v2527
    %v2529 = vadd.f32 %v2525, %v2528
    %vm2530 = vweird.f32 %v2523
    %vm2531 = vweird.f32 %v2525
    %vm2532 = vmor %vm2530, %vm2531
    %v2533 = vsel %vm2532, %v2525, %v2529
    %v2534 = vand.u32 2147483647, %v2523
    %vm2535 = vcmp.eq.f32.partialorder %v2534, 8.507059e+37
    %v2536 = vand.u32 %v2523, 2147483648
    %v2537 = vor.u32 1.1754944e-38, %v2536
    %v2538 = vsel %vm2535, %v2537, %v2533
    %v2539 = vmul.f32 1.0, %v2538
    %v2540 = vrcp.pop %v2524
    %v2541 = vmul.f32 %v2524, %v2540
    %v2542 = vsub.f32 1.0, %v2541
    %v2543 = vmul.f32 %v2540, %v2542
    %v2544 = vadd.f32 %v2540, %v2543
    %vm2545 = vweird.f32 %v2524
    %vm2546 = vweird.f32 %v2540
    %vm2547 = vmor %vm2545, %vm2546
    %v2548 = vsel %vm2547, %v2540, %v2544
    %v2549 = vand.u32 2147483647, %v2524
    %vm2550 = vcmp.eq.f32.partialorder %v2549, 8.507059e+37
    %v2551 = vand.u32 %v2524, 2147483648
    %v2552 = vor.u32 1.1754944e-38, %v2551
    %v2553 = vsel %vm2550, %v2552, %v2548
    %v2554 = vmul.f32 1.0, %v2553
    %v2555 = vtanh.pop %v2515
    %v2556 = vtanh.pop %v2516
    %v2559 = vrot.slane %v2396, 7
    %v2560 = vrot.slane %v2397, 7
    %v2563 = vmul.f32 %v2539, %v2559
    %v2564 = vmul.f32 %v2554, %v2560
    %2567 = vrot.lane.b32.xlu0 %v2555, 64
    %v2568 = vpop.permute.xlu0 %2567
    %2569 = vrot.lane.b32.xlu0 %v2556, 64
    %v2570 = vpop.permute.xlu0 %2569
    %v2573 = vmul.f32 %v2539, %v2568
    %v2574 = vmul.f32 %v2554, %v2570
    %2577 = vrot.lane.b32.xlu0 %v2573, 32
    %v2578 = vpop.permute.xlu0 %2577
    %2579 = vrot.lane.b32.xlu0 %v2574, 32
    %v2580 = vpop.permute.xlu0 %2579
    %v2583 = vadd.f32 %v2563, %v2578
    %v2584 = vadd.f32 %v2564, %v2580
    %v2585 = vtanh.pop %v2583
    %v2586 = vtanh.pop %v2584
    %2589 = vrot.lane.b32.xlu0 %v2585, 64
    %v2590 = vpop.permute.xlu0 %2589
    %2591 = vrot.lane.b32.xlu0 %v2586, 64
    %v2592 = vpop.permute.xlu0 %2591
    %v2595 = vmul.f32 %v2539, %v2590
    %v2596 = vmul.f32 %v2554, %v2592
    %v2597 = vpack.c.bf16 %v2595, %v2595
    %v2598 = vpack.c.bf16 %v2596, %v2596
    %v2601 = vunpack.c.l.b16 %v2597
    %v2602 = vunpack.c.l.b16 %v2598
    %v2603 = vrot.slane %v2601, 4
    %v2604 = vrot.slane %v2602, 3
    %v2605 = vsel %vm368, %v2604, %v2603
    %v2606 = vpack.c.b16 %v2605, %v2605
    %2607 = vrot.lane.b32.xlu0 %v2606, 32
    %v2608 = vpop.permute.xlu0 %2607
    %v2610 = vsel %vm373, %v2608, 0
    %2612 = vmatpush.bf16.msra.mxu0 0
    %2613 = vmatpush.bf16.msra.mxu0 0
    %2614 = vmatpush.bf16.msra.mxu0 0
    %2615 = vmatpush.bf16.msra.mxu0 0
    %2616 = vmatpush.bf16.msra.mxu0 0
    %2617 = vmatpush.bf16.msra.mxu0 0
    %2618 = vmatpush.bf16.msra.mxu0 %v246
    %2619 = vmatpush.bf16.msra.mxu0 %v244
    %2620 = vmatmul.bf16.gmra.mxu0 %v2610
    %v2621 = vpop.f32.mrf.mxu0
    %v2622 = vadd.f32 0.0, %v2621
    %v2623 = vpop.f32.mrf.mxu0
    %2624 = vdwg.mxu0
    %2625 = vmatpush.bf16.msra.mxu0 0
    %2626 = vmatpush.bf16.msra.mxu0 0
    %2627 = vmatpush.bf16.msra.mxu0 0
    %2628 = vmatpush.bf16.msra.mxu0 0
    %2629 = vmatpush.bf16.msra.mxu0 0
    %2630 = vmatpush.bf16.msra.mxu0 0
    %2631 = vmatpush.bf16.msra.mxu0 %v247
    %2632 = vmatpush.bf16.msra.mxu0 %v245
    %2633 = vmatmul.bf16.gmra.mxu0 %v2610
    %v2634 = vpop.f32.mrf.mxu0
    %v2635 = vadd.f32 0.0, %v2634
    %v2636 = vpop.f32.mrf.mxu0
    %2637 = vdwg.mxu0
    %v2638 = vpack.c.bf16 %v2509, %v2509
    %2640 = vrot.lane.b32.xlu0 %v2638, 32
    %v2641 = vpop.permute.xlu0 %2640
    %v2643 = vsel %vm373, %v2641, 0
    %2645 = vmatpush.bf16.msra.mxu0 0
    %2646 = vmatpush.bf16.msra.mxu0 0
    %2647 = vmatpush.bf16.msra.mxu0 0
    %2648 = vmatpush.bf16.msra.mxu0 0
    %2649 = vmatpush.bf16.msra.mxu0 0
    %2650 = vmatpush.bf16.msra.mxu0 0
    %2651 = vmatpush.bf16.msra.mxu0 %v234
    %2652 = vmatpush.bf16.msra.mxu0 %v233
    %2653 = vmatmul.bf16.gmra.mxu0 %v2643
    %v2654 = vpop.f32.mrf.mxu0
    %v2655 = vadd.f32 0.0, %v2654
    %v2656 = vpop.f32.mrf.mxu0
    %2657 = vdwg.mxu0
    %v2658 = vadd.f32 %v2622, %v2655
    %v2659 = vadd.f32 %v2658, %v420
    %v2660 = vxor.u32 %v2659, 2147483648
    %v2661 = vmul.f32 %v2660, 1.442695
    %v2662 = vpow.pop %v2661
    %v2663 = vadd.f32 %v2662, 1.0
    %v2664 = vrcp.pop %v2663
    %v2665 = vmul.f32 %v2663, %v2664
    %v2666 = vsub.f32 1.0, %v2665
    %v2667 = vmul.f32 %v2664, %v2666
    %v2668 = vadd.f32 %v2664, %v2667
    %vm2669 = vweird.f32 %v2663
    %vm2670 = vweird.f32 %v2664
    %vm2671 = vmor %vm2669, %vm2670
    %v2672 = vsel %vm2671, %v2664, %v2668
    %v2673 = vand.u32 2147483647, %v2663
    %vm2674 = vcmp.eq.f32.partialorder %v2673, 8.507059e+37
    %v2675 = vand.u32 %v2663, 2147483648
    %v2676 = vor.u32 1.1754944e-38, %v2675
    %v2677 = vsel %vm2674, %v2676, %v2672
    %v2678 = vmul.f32 1.0, %v2677
    %v2679 = vtanh.pop %v2659
    %v2680 = vmul.f32 %v2678, %v2503
    %2682 = vrot.lane.b32.xlu0 %v2679, 64
    %v2683 = vpop.permute.xlu0 %2682
    %v2685 = vmul.f32 %v2678, %v2683
    %2687 = vrot.lane.b32.xlu0 %v2685, 32
    %v2688 = vpop.permute.xlu0 %2687
    %v2690 = vadd.f32 %v2680, %v2688
    %v2691 = vtanh.pop %v2690
    %2693 = vrot.lane.b32.xlu0 %v2691, 64
    %v2694 = vpop.permute.xlu0 %2693
    %v2696 = vmul.f32 %v2678, %v2694
    %v2698 = vrot.slane %v2635, 3
    %v2699 = vrot.slane %v2635, 4
    %v2702 = vadd.f32 %v278, %v2698
    %v2703 = vadd.f32 %v283, %v2699
    %v2704 = vxor.u32 %v2702, 2147483648
    %v2705 = vxor.u32 %v2703, 2147483648
    %v2706 = vmul.f32 %v2704, 1.442695
    %v2707 = vpow.pop %v2706
    %v2708 = vmul.f32 %v2705, 1.442695
    %v2709 = vpow.pop %v2708
    %v2710 = vadd.f32 %v2707, 1.0
    %v2711 = vadd.f32 %v2709, 1.0
    %v2712 = vrcp.pop %v2710
    %v2713 = vmul.f32 %v2710, %v2712
    %v2714 = vsub.f32 1.0, %v2713
    %v2715 = vmul.f32 %v2712, %v2714
    %v2716 = vadd.f32 %v2712, %v2715
    %vm2717 = vweird.f32 %v2710
    %vm2718 = vweird.f32 %v2712
    %vm2719 = vmor %vm2717, %vm2718
    %v2720 = vsel %vm2719, %v2712, %v2716
    %v2721 = vand.u32 2147483647, %v2710
    %vm2722 = vcmp.eq.f32.partialorder %v2721, 8.507059e+37
    %v2723 = vand.u32 %v2710, 2147483648
    %v2724 = vor.u32 1.1754944e-38, %v2723
    %v2725 = vsel %vm2722, %v2724, %v2720
    %v2726 = vmul.f32 1.0, %v2725
    %v2727 = vrcp.pop %v2711
    %v2728 = vmul.f32 %v2711, %v2727
    %v2729 = vsub.f32 1.0, %v2728
    %v2730 = vmul.f32 %v2727, %v2729
    %v2731 = vadd.f32 %v2727, %v2730
    %vm2732 = vweird.f32 %v2711
    %vm2733 = vweird.f32 %v2727
    %vm2734 = vmor %vm2732, %vm2733
    %v2735 = vsel %vm2734, %v2727, %v2731
    %v2736 = vand.u32 2147483647, %v2711
    %vm2737 = vcmp.eq.f32.partialorder %v2736, 8.507059e+37
    %v2738 = vand.u32 %v2711, 2147483648
    %v2739 = vor.u32 1.1754944e-38, %v2738
    %v2740 = vsel %vm2737, %v2739, %v2735
    %v2741 = vmul.f32 1.0, %v2740
    %v2742 = vtanh.pop %v2702
    %v2743 = vtanh.pop %v2703
    %v2746 = vrot.slane %v2583, 7
    %v2747 = vrot.slane %v2584, 7
    %v2750 = vmul.f32 %v2726, %v2746
    %v2751 = vmul.f32 %v2741, %v2747
    %2754 = vrot.lane.b32.xlu0 %v2742, 64
    %v2755 = vpop.permute.xlu0 %2754
    %2756 = vrot.lane.b32.xlu0 %v2743, 64
    %v2757 = vpop.permute.xlu0 %2756
    %v2760 = vmul.f32 %v2726, %v2755
    %v2761 = vmul.f32 %v2741, %v2757
    %2764 = vrot.lane.b32.xlu0 %v2760, 32
    %v2765 = vpop.permute.xlu0 %2764
    %2766 = vrot.lane.b32.xlu0 %v2761, 32
    %v2767 = vpop.permute.xlu0 %2766
    %v2770 = vadd.f32 %v2750, %v2765
    %v2771 = vadd.f32 %v2751, %v2767
    %v2772 = vtanh.pop %v2770
    %v2773 = vtanh.pop %v2771
    %2776 = vrot.lane.b32.xlu0 %v2772, 64
    %v2777 = vpop.permute.xlu0 %2776
    %2778 = vrot.lane.b32.xlu0 %v2773, 64
    %v2779 = vpop.permute.xlu0 %2778
    %v2782 = vmul.f32 %v2726, %v2777
    %v2783 = vmul.f32 %v2741, %v2779
    %v2784 = vpack.c.bf16 %v2782, %v2782
    %v2785 = vpack.c.bf16 %v2783, %v2783
    %v2788 = vunpack.c.l.b16 %v2784
    %v2789 = vunpack.c.l.b16 %v2785
    %v2790 = vrot.slane %v2788, 5
    %v2791 = vrot.slane %v2789, 4
    %v2792 = vsel %vm368, %v2791, %v2790
    %v2793 = vpack.c.b16 %v2792, %v2792
    %2794 = vrot.lane.b32.xlu0 %v2793, 32
    %v2795 = vpop.permute.xlu0 %2794
    %v2797 = vsel %vm373, %v2795, 0
    %2799 = vmatpush.bf16.msra.mxu0 0
    %2800 = vmatpush.bf16.msra.mxu0 0
    %2801 = vmatpush.bf16.msra.mxu0 0
    %2802 = vmatpush.bf16.msra.mxu0 0
    %2803 = vmatpush.bf16.msra.mxu0 0
    %2804 = vmatpush.bf16.msra.mxu0 0
    %2805 = vmatpush.bf16.msra.mxu0 %v246
    %2806 = vmatpush.bf16.msra.mxu0 %v244
    %2807 = vmatmul.bf16.gmra.mxu0 %v2797
    %v2808 = vpop.f32.mrf.mxu0
    %v2809 = vadd.f32 0.0, %v2808
    %v2810 = vpop.f32.mrf.mxu0
    %2811 = vdwg.mxu0
    %2812 = vmatpush.bf16.msra.mxu0 0
    %2813 = vmatpush.bf16.msra.mxu0 0
    %2814 = vmatpush.bf16.msra.mxu0 0
    %2815 = vmatpush.bf16.msra.mxu0 0
    %2816 = vmatpush.bf16.msra.mxu0 0
    %2817 = vmatpush.bf16.msra.mxu0 0
    %2818 = vmatpush.bf16.msra.mxu0 %v247
    %2819 = vmatpush.bf16.msra.mxu0 %v245
    %2820 = vmatmul.bf16.gmra.mxu0 %v2797
    %v2821 = vpop.f32.mrf.mxu0
    %v2822 = vadd.f32 0.0, %v2821
    %v2823 = vpop.f32.mrf.mxu0
    %2824 = vdwg.mxu0
    %v2825 = vpack.c.bf16 %v2696, %v2696
    %2827 = vrot.lane.b32.xlu0 %v2825, 32
    %v2828 = vpop.permute.xlu0 %2827
    %v2830 = vsel %vm373, %v2828, 0
    %2832 = vmatpush.bf16.msra.mxu0 0
    %2833 = vmatpush.bf16.msra.mxu0 0
    %2834 = vmatpush.bf16.msra.mxu0 0
    %2835 = vmatpush.bf16.msra.mxu0 0
    %2836 = vmatpush.bf16.msra.mxu0 0
    %2837 = vmatpush.bf16.msra.mxu0 0
    %2838 = vmatpush.bf16.msra.mxu0 %v234
    %2839 = vmatpush.bf16.msra.mxu0 %v233
    %2840 = vmatmul.bf16.gmra.mxu0 %v2830
    %v2841 = vpop.f32.mrf.mxu0
    %v2842 = vadd.f32 0.0, %v2841
    %v2843 = vpop.f32.mrf.mxu0
    %2844 = vdwg.mxu0
    %v2845 = vadd.f32 %v2809, %v2842
    %v2846 = vadd.f32 %v2845, %v420
    %v2847 = vxor.u32 %v2846, 2147483648
    %v2848 = vmul.f32 %v2847, 1.442695
    %v2849 = vpow.pop %v2848
    %v2850 = vadd.f32 %v2849, 1.0
    %v2851 = vrcp.pop %v2850
    %v2852 = vmul.f32 %v2850, %v2851
    %v2853 = vsub.f32 1.0, %v2852
    %v2854 = vmul.f32 %v2851, %v2853
    %v2855 = vadd.f32 %v2851, %v2854
    %vm2856 = vweird.f32 %v2850
    %vm2857 = vweird.f32 %v2851
    %vm2858 = vmor %vm2856, %vm2857
    %v2859 = vsel %vm2858, %v2851, %v2855
    %v2860 = vand.u32 2147483647, %v2850
    %vm2861 = vcmp.eq.f32.partialorder %v2860, 8.507059e+37
    %v2862 = vand.u32 %v2850, 2147483648
    %v2863 = vor.u32 1.1754944e-38, %v2862
    %v2864 = vsel %vm2861, %v2863, %v2859
    %v2865 = vmul.f32 1.0, %v2864
    %v2866 = vtanh.pop %v2846
    %v2867 = vmul.f32 %v2865, %v2690
    %2869 = vrot.lane.b32.xlu0 %v2866, 64
    %v2870 = vpop.permute.xlu0 %2869
    %v2872 = vmul.f32 %v2865, %v2870
    %2874 = vrot.lane.b32.xlu0 %v2872, 32
    %v2875 = vpop.permute.xlu0 %2874
    %v2877 = vadd.f32 %v2867, %v2875
    %v2878 = vtanh.pop %v2877
    %2880 = vrot.lane.b32.xlu0 %v2878, 64
    %v2881 = vpop.permute.xlu0 %2880
    %v2883 = vmul.f32 %v2865, %v2881
    %v2885 = vrot.slane %v2822, 2
    %v2886 = vrot.slane %v2822, 3
    %v2889 = vadd.f32 %v278, %v2885
    %v2890 = vadd.f32 %v283, %v2886
    %v2891 = vxor.u32 %v2889, 2147483648
    %v2892 = vxor.u32 %v2890, 2147483648
    %v2893 = vmul.f32 %v2891, 1.442695
    %v2894 = vpow.pop %v2893
    %v2895 = vmul.f32 %v2892, 1.442695
    %v2896 = vpow.pop %v2895
    %v2897 = vadd.f32 %v2894, 1.0
    %v2898 = vadd.f32 %v2896, 1.0
    %v2899 = vrcp.pop %v2897
    %v2900 = vmul.f32 %v2897, %v2899
    %v2901 = vsub.f32 1.0, %v2900
    %v2902 = vmul.f32 %v2899, %v2901
    %v2903 = vadd.f32 %v2899, %v2902
    %vm2904 = vweird.f32 %v2897
    %vm2905 = vweird.f32 %v2899
    %vm2906 = vmor %vm2904, %vm2905
    %v2907 = vsel %vm2906, %v2899, %v2903
    %v2908 = vand.u32 2147483647, %v2897
    %vm2909 = vcmp.eq.f32.partialorder %v2908, 8.507059e+37
    %v2910 = vand.u32 %v2897, 2147483648
    %v2911 = vor.u32 1.1754944e-38, %v2910
    %v2912 = vsel %vm2909, %v2911, %v2907
    %v2913 = vmul.f32 1.0, %v2912
    %v2914 = vrcp.pop %v2898
    %v2915 = vmul.f32 %v2898, %v2914
    %v2916 = vsub.f32 1.0, %v2915
    %v2917 = vmul.f32 %v2914, %v2916
    %v2918 = vadd.f32 %v2914, %v2917
    %vm2919 = vweird.f32 %v2898
    %vm2920 = vweird.f32 %v2914
    %vm2921 = vmor %vm2919, %vm2920
    %v2922 = vsel %vm2921, %v2914, %v2918
    %v2923 = vand.u32 2147483647, %v2898
    %vm2924 = vcmp.eq.f32.partialorder %v2923, 8.507059e+37
    %v2925 = vand.u32 %v2898, 2147483648
    %v2926 = vor.u32 1.1754944e-38, %v2925
    %v2927 = vsel %vm2924, %v2926, %v2922
    %v2928 = vmul.f32 1.0, %v2927
    %v2929 = vtanh.pop %v2889
    %v2930 = vtanh.pop %v2890
    %v2933 = vrot.slane %v2770, 7
    %v2934 = vrot.slane %v2771, 7
    %v2937 = vmul.f32 %v2913, %v2933
    %v2938 = vmul.f32 %v2928, %v2934
    %2941 = vrot.lane.b32.xlu0 %v2929, 64
    %v2942 = vpop.permute.xlu0 %2941
    %2943 = vrot.lane.b32.xlu0 %v2930, 64
    %v2944 = vpop.permute.xlu0 %2943
    %v2947 = vmul.f32 %v2913, %v2942
    %v2948 = vmul.f32 %v2928, %v2944
    %2951 = vrot.lane.b32.xlu0 %v2947, 32
    %v2952 = vpop.permute.xlu0 %2951
    %2953 = vrot.lane.b32.xlu0 %v2948, 32
    %v2954 = vpop.permute.xlu0 %2953
    %v2957 = vadd.f32 %v2937, %v2952
    %v2958 = vadd.f32 %v2938, %v2954
    %v2959 = vtanh.pop %v2957
    %v2960 = vtanh.pop %v2958
    %2963 = vrot.lane.b32.xlu0 %v2959, 64
    %v2964 = vpop.permute.xlu0 %2963
    %2965 = vrot.lane.b32.xlu0 %v2960, 64
    %v2966 = vpop.permute.xlu0 %2965
    %v2969 = vmul.f32 %v2913, %v2964
    %v2970 = vmul.f32 %v2928, %v2966
    %v2971 = vpack.c.bf16 %v2969, %v2969
    %v2972 = vpack.c.bf16 %v2970, %v2970
    %v2975 = vunpack.c.l.b16 %v2971
    %v2976 = vunpack.c.l.b16 %v2972
    %v2977 = vrot.slane %v2975, 6
    %v2978 = vrot.slane %v2976, 5
    %v2979 = vsel %vm368, %v2978, %v2977
    %v2980 = vpack.c.b16 %v2979, %v2979
    %2981 = vrot.lane.b32.xlu0 %v2980, 32
    %v2982 = vpop.permute.xlu0 %2981
    %v2984 = vsel %vm373, %v2982, 0
    %2986 = vmatpush.bf16.msra.mxu0 0
    %2987 = vmatpush.bf16.msra.mxu0 0
    %2988 = vmatpush.bf16.msra.mxu0 0
    %2989 = vmatpush.bf16.msra.mxu0 0
    %2990 = vmatpush.bf16.msra.mxu0 0
    %2991 = vmatpush.bf16.msra.mxu0 0
    %2992 = vmatpush.bf16.msra.mxu0 %v246
    %2993 = vmatpush.bf16.msra.mxu0 %v244
    %2994 = vmatmul.bf16.gmra.mxu0 %v2984
    %v2995 = vpop.f32.mrf.mxu0
    %v2996 = vadd.f32 0.0, %v2995
    %v2997 = vpop.f32.mrf.mxu0
    %2998 = vdwg.mxu0
    %2999 = vmatpush.bf16.msra.mxu0 0
    %3000 = vmatpush.bf16.msra.mxu0 0
    %3001 = vmatpush.bf16.msra.mxu0 0
    %3002 = vmatpush.bf16.msra.mxu0 0
    %3003 = vmatpush.bf16.msra.mxu0 0
    %3004 = vmatpush.bf16.msra.mxu0 0
    %3005 = vmatpush.bf16.msra.mxu0 %v247
    %3006 = vmatpush.bf16.msra.mxu0 %v245
    %3007 = vmatmul.bf16.gmra.mxu0 %v2984
    %v3008 = vpop.f32.mrf.mxu0
    %v3009 = vadd.f32 0.0, %v3008
    %v3010 = vpop.f32.mrf.mxu0
    %3011 = vdwg.mxu0
    %v3012 = vpack.c.bf16 %v2883, %v2883
    %3014 = vrot.lane.b32.xlu0 %v3012, 32
    %v3015 = vpop.permute.xlu0 %3014
    %v3017 = vsel %vm373, %v3015, 0
    %3019 = vmatpush.bf16.msra.mxu0 0
    %3020 = vmatpush.bf16.msra.mxu0 0
    %3021 = vmatpush.bf16.msra.mxu0 0
    %3022 = vmatpush.bf16.msra.mxu0 0
    %3023 = vmatpush.bf16.msra.mxu0 0
    %3024 = vmatpush.bf16.msra.mxu0 0
    %3025 = vmatpush.bf16.msra.mxu0 %v234
    %3026 = vmatpush.bf16.msra.mxu0 %v233
    %3027 = vmatmul.bf16.gmra.mxu0 %v3017
    %v3028 = vpop.f32.mrf.mxu0
    %v3029 = vadd.f32 0.0, %v3028
    %v3030 = vpop.f32.mrf.mxu0
    %3031 = vdwg.mxu0
    %v3032 = vadd.f32 %v2996, %v3029
    %v3033 = vadd.f32 %v3032, %v420
    %v3034 = vxor.u32 %v3033, 2147483648
    %v3035 = vmul.f32 %v3034, 1.442695
    %v3036 = vpow.pop %v3035
    %v3037 = vadd.f32 %v3036, 1.0
    %v3038 = vrcp.pop %v3037
    %v3039 = vmul.f32 %v3037, %v3038
    %v3040 = vsub.f32 1.0, %v3039
    %v3041 = vmul.f32 %v3038, %v3040
    %v3042 = vadd.f32 %v3038, %v3041
    %vm3043 = vweird.f32 %v3037
    %vm3044 = vweird.f32 %v3038
    %vm3045 = vmor %vm3043, %vm3044
    %v3046 = vsel %vm3045, %v3038, %v3042
    %v3047 = vand.u32 2147483647, %v3037
    %vm3048 = vcmp.eq.f32.partialorder %v3047, 8.507059e+37
    %v3049 = vand.u32 %v3037, 2147483648
    %v3050 = vor.u32 1.1754944e-38, %v3049
    %v3051 = vsel %vm3048, %v3050, %v3046
    %v3052 = vmul.f32 1.0, %v3051
    %v3053 = vtanh.pop %v3033
    %v3054 = vmul.f32 %v3052, %v2877
    %3056 = vrot.lane.b32.xlu0 %v3053, 64
    %v3057 = vpop.permute.xlu0 %3056
    %v3059 = vmul.f32 %v3052, %v3057
    %3061 = vrot.lane.b32.xlu0 %v3059, 32
    %v3062 = vpop.permute.xlu0 %3061
    %v3064 = vadd.f32 %v3054, %v3062
    %v3065 = vtanh.pop %v3064
    %3067 = vrot.lane.b32.xlu0 %v3065, 64
    %v3068 = vpop.permute.xlu0 %3067
    %v3070 = vmul.f32 %v3052, %v3068
    %v3072 = vrot.slane %v3009, 1
    %v3073 = vrot.slane %v3009, 2
    %v3076 = vadd.f32 %v278, %v3072
    %v3077 = vadd.f32 %v283, %v3073
    %v3078 = vxor.u32 %v3076, 2147483648
    %v3079 = vxor.u32 %v3077, 2147483648
    %v3080 = vmul.f32 %v3078, 1.442695
    %v3081 = vpow.pop %v3080
    %v3082 = vmul.f32 %v3079, 1.442695
    %v3083 = vpow.pop %v3082
    %v3084 = vadd.f32 %v3081, 1.0
    %v3085 = vadd.f32 %v3083, 1.0
    %v3086 = vrcp.pop %v3084
    %v3087 = vmul.f32 %v3084, %v3086
    %v3088 = vsub.f32 1.0, %v3087
    %v3089 = vmul.f32 %v3086, %v3088
    %v3090 = vadd.f32 %v3086, %v3089
    %vm3091 = vweird.f32 %v3084
    %vm3092 = vweird.f32 %v3086
    %vm3093 = vmor %vm3091, %vm3092
    %v3094 = vsel %vm3093, %v3086, %v3090
    %v3095 = vand.u32 2147483647, %v3084
    %vm3096 = vcmp.eq.f32.partialorder %v3095, 8.507059e+37
    %v3097 = vand.u32 %v3084, 2147483648
    %v3098 = vor.u32 1.1754944e-38, %v3097
    %v3099 = vsel %vm3096, %v3098, %v3094
    %v3100 = vmul.f32 1.0, %v3099
    %v3101 = vrcp.pop %v3085
    %v3102 = vmul.f32 %v3085, %v3101
    %v3103 = vsub.f32 1.0, %v3102
    %v3104 = vmul.f32 %v3101, %v3103
    %v3105 = vadd.f32 %v3101, %v3104
    %vm3106 = vweird.f32 %v3085
    %vm3107 = vweird.f32 %v3101
    %vm3108 = vmor %vm3106, %vm3107
    %v3109 = vsel %vm3108, %v3101, %v3105
    %v3110 = vand.u32 2147483647, %v3085
    %vm3111 = vcmp.eq.f32.partialorder %v3110, 8.507059e+37
    %v3112 = vand.u32 %v3085, 2147483648
    %v3113 = vor.u32 1.1754944e-38, %v3112
    %v3114 = vsel %vm3111, %v3113, %v3109
    %v3115 = vmul.f32 1.0, %v3114
    %v3116 = vtanh.pop %v3076
    %v3117 = vtanh.pop %v3077
    %v3120 = vrot.slane %v2957, 7
    %v3121 = vrot.slane %v2958, 7
    %v3124 = vmul.f32 %v3100, %v3120
    %v3125 = vmul.f32 %v3115, %v3121
    %3128 = vrot.lane.b32.xlu0 %v3116, 64
    %v3129 = vpop.permute.xlu0 %3128
    %3130 = vrot.lane.b32.xlu0 %v3117, 64
    %v3131 = vpop.permute.xlu0 %3130
    %v3134 = vmul.f32 %v3100, %v3129
    %v3135 = vmul.f32 %v3115, %v3131
    %3138 = vrot.lane.b32.xlu0 %v3134, 32
    %v3139 = vpop.permute.xlu0 %3138
    %3140 = vrot.lane.b32.xlu0 %v3135, 32
    %v3141 = vpop.permute.xlu0 %3140
    %v3144 = vadd.f32 %v3124, %v3139
    %v3145 = vadd.f32 %v3125, %v3141
    %v3146 = vtanh.pop %v3144
    %v3147 = vtanh.pop %v3145
    %3150 = vrot.lane.b32.xlu0 %v3146, 64
    %v3151 = vpop.permute.xlu0 %3150
    %3152 = vrot.lane.b32.xlu0 %v3147, 64
    %v3153 = vpop.permute.xlu0 %3152
    %v3156 = vmul.f32 %v3100, %v3151
    %v3157 = vmul.f32 %v3115, %v3153
    %v3158 = vpack.c.bf16 %v3156, %v3156
    %v3159 = vpack.c.bf16 %v3157, %v3157
    %v3162 = vunpack.c.l.b16 %v3158
    %v3163 = vunpack.c.l.b16 %v3159
    %v3164 = vrot.slane %v3162, 7
    %v3165 = vrot.slane %v3163, 6
    %v3166 = vsel %vm368, %v3165, %v3164
    %v3167 = vpack.c.b16 %v3166, %v3166
    %3168 = vrot.lane.b32.xlu0 %v3167, 32
    %v3169 = vpop.permute.xlu0 %3168
    %v3171 = vsel %vm373, %v3169, 0
    %3173 = vmatpush.bf16.msra.mxu0 0
    %3174 = vmatpush.bf16.msra.mxu0 0
    %3175 = vmatpush.bf16.msra.mxu0 0
    %3176 = vmatpush.bf16.msra.mxu0 0
    %3177 = vmatpush.bf16.msra.mxu0 0
    %3178 = vmatpush.bf16.msra.mxu0 0
    %3179 = vmatpush.bf16.msra.mxu0 %v246
    %3180 = vmatpush.bf16.msra.mxu0 %v244
    %3181 = vmatmul.bf16.gmra.mxu0 %v3171
    %v3182 = vpop.f32.mrf.mxu0
    %v3183 = vadd.f32 0.0, %v3182
    %v3184 = vpop.f32.mrf.mxu0
    %3185 = vdwg.mxu0
    %v3186 = vpack.c.bf16 %v3070, %v3070
    %3188 = vrot.lane.b32.xlu0 %v3186, 32
    %v3189 = vpop.permute.xlu0 %3188
    %v3191 = vsel %vm373, %v3189, 0
    %3193 = vmatpush.bf16.msra.mxu0 0
    %3194 = vmatpush.bf16.msra.mxu0 0
    %3195 = vmatpush.bf16.msra.mxu0 0
    %3196 = vmatpush.bf16.msra.mxu0 0
    %3197 = vmatpush.bf16.msra.mxu0 0
    %3198 = vmatpush.bf16.msra.mxu0 0
    %3199 = vmatpush.bf16.msra.mxu0 %v234
    %3200 = vmatpush.bf16.msra.mxu0 %v233
    %3201 = vmatmul.bf16.gmra.mxu0 %v3191
    %v3202 = vpop.f32.mrf.mxu0
    %v3203 = vadd.f32 0.0, %v3202
    %v3204 = vpop.f32.mrf.mxu0
    %3205 = vdwg.mxu0
    %v3206 = vadd.f32 %v3183, %v3203
    %v3207 = vadd.f32 %v3206, %v420
    %v3208 = vxor.u32 %v3207, 2147483648
    %v3209 = vmul.f32 %v3208, 1.442695
    %v3210 = vpow.pop %v3209
    %v3211 = vadd.f32 %v3210, 1.0
    %v3212 = vrcp.pop %v3211
    %v3213 = vmul.f32 %v3211, %v3212
    %v3214 = vsub.f32 1.0, %v3213
    %v3215 = vmul.f32 %v3212, %v3214
    %v3216 = vadd.f32 %v3212, %v3215
    %vm3217 = vweird.f32 %v3211
    %vm3218 = vweird.f32 %v3212
    %vm3219 = vmor %vm3217, %vm3218
    %v3220 = vsel %vm3219, %v3212, %v3216
    %v3221 = vand.u32 2147483647, %v3211
    %vm3222 = vcmp.eq.f32.partialorder %v3221, 8.507059e+37
    %v3223 = vand.u32 %v3211, 2147483648
    %v3224 = vor.u32 1.1754944e-38, %v3223
    %v3225 = vsel %vm3222, %v3224, %v3220
    %v3226 = vmul.f32 1.0, %v3225
    %v3227 = vtanh.pop %v3207
    %v3228 = vmul.f32 %v3226, %v3064
    %3230 = vrot.lane.b32.xlu0 %v3227, 64
    %v3231 = vpop.permute.xlu0 %3230
    %v3233 = vmul.f32 %v3226, %v3231
    %3235 = vrot.lane.b32.xlu0 %v3233, 32
    %v3236 = vpop.permute.xlu0 %3235
    %v3238 = vadd.f32 %v3228, %v3236
    %v3239 = vtanh.pop %v3238
    %3241 = vrot.lane.b32.xlu0 %v3239, 64
    %v3242 = vpop.permute.xlu0 %3241
    %v3244 = vmul.f32 %v3226, %v3242
    %v3245 = vld [vmem:[#allocation5 + $0x78] sm:$0x1]
    %v3246 = vld [vmem:[#allocation5 + $0x80] sm:$0x1]
    %s3247 = scalar_lea.vmem %s3, 64
    %v3248 = vld [vmem:[%s3247] ss:$8 sm:$0x3]
    %s3249 = scalar_lea.vmem %s3, 80
    %v3250 = vld [vmem:[%s3249] ss:$8 sm:$0x3]
    %v3251 = vld [vmem:[#allocation5 + $0x88] sm:$0x1]
    %v3252 = vld [vmem:[#allocation5 + $0x90] sm:$0x1]
    %v3253 = vld [vmem:[#allocation5 + $0x38] sm:$0xff]
    %v3254 = vld [vmem:[#allocation5 + $0x40] sm:$0xff]
    %v3255 = vld [vmem:[#allocation5 + $0x48] sm:$0xff]
    %v3256 = vld [vmem:[#allocation5 + $0x50] sm:$0xff]
    %v3257 = vld [vmem:[#allocation5 + $0x58] sm:$0xff]
    %v3258 = vld [vmem:[#allocation5 + $0x60] sm:$0xff]
    %v3259 = vld [vmem:[#allocation5 + $0x68] sm:$0xff]
    %v3260 = vld [vmem:[#allocation5 + $0x70] sm:$0xff]
    %v3261 = vpack.c.bf16 %v3254, %v3253
    %v3262 = vpack.c.bf16 %v3256, %v3255
    %v3263 = vpack.c.bf16 %v3258, %v3257
    %v3264 = vpack.c.bf16 %v3260, %v3259
    %v3265 = vld [vmem:[%s1] sm:$0xff]
    %v3266 = vld [vmem:[%s1 + $0x8] sm:$0xff]
    %v3267 = vld [vmem:[%s1 + $0x10] sm:$0x3]
    %v3268 = vpack.c.bf16 %v3266, %v3265
    %v3269 = vpack.c.bf16 %v3267, %v3267
    %vm3270 = vcmask 523264
    %v3272 = vsel %vm3270, %v3268, 0
    %v3275 = vsel %vm3270, %v3269, 0
    %3277 = vmatpush.bf16.msra.mxu0 0
    %3278 = vmatpush.bf16.msra.mxu0 0
    %3279 = vmatpush.bf16.msra.mxu0 0
    %3280 = vmatpush.bf16.msra.mxu0 0
    %3281 = vmatpush.bf16.msra.mxu0 %v3264
    %3282 = vmatpush.bf16.msra.mxu0 %v3263
    %3283 = vmatpush.bf16.msra.mxu0 %v3262
    %3284 = vmatpush.bf16.msra.mxu0 %v3261
    %3285 = vmatmul.bf16.gmra.mxu0 %v3272
    %v3286 = vpop.f32.mrf.mxu0
    %v3287 = vadd.f32 0.0, %v3286
    %v3288 = vpop.f32.mrf.mxu0
    %v3289 = vadd.f32 0.0, %v3288
    %3290 = vmatmul.bf16.gmra.mxu0 %v3275
    %v3291 = vpop.f32.mrf.mxu0
    %v3292 = vadd.f32 0.0, %v3291
    %v3293 = vpop.f32.mrf.mxu0
    %3294 = vdwg.mxu0
    %v3295 = vperm.slane %v3245, 0
    %v3296 = vmul.f32 %v3287, %v3295
    %v3297 = vmul.f32 %v3289, %v3295
    %v3298 = vmul.f32 %v3292, %v3295
    %v3299 = vperm.slane %v3246, 0
    %v3300 = vadd.f32 %v3296, %v3299
    %v3301 = vadd.f32 %v3297, %v3299
    %v3302 = vadd.f32 %v3298, %v3299
    %v3303 = vmax.f32 %v3300, 0.0
    %v3304 = vmax.f32 %v3301, 0.0
    %v3305 = vmax.f32 %v3302, 0.0
    %s3306 = smul.u32 4, 80
    %s3307 = smul.u32 %s3306, 2
    %s3308 = sshll.u32 %s3307, 4
    %3309 = dma.done [#allocation4], %s3308
    %v3311 = vrot.slane %v3303, 1
    %v3313 = vrot.slane %v3303, 2
    %v3315 = vrot.slane %v3303, 3
    %v3318 = vrot.slane %v3303, 4
    %v3319 = vrot.slane %v3304, 4
    %v3320 = vsel %vm262, %v3318, %v3319
    %v3322 = vpack.c.bf16 %v3303, %v3303
    %v3323 = vpack.c.bf16 %v3311, %v3311
    %v3324 = vpack.c.bf16 %v3313, %v3313
    %v3325 = vpack.c.bf16 %v3315, %v3315
    %v3326 = vpack.c.bf16 %v3320, %v3320
    %v3327 = vld [vmem:[#allocation2] sm:$0xff]
    %v3328 = vld [vmem:[#allocation2 + $0x8] sm:$0xff]
    %v3329 = vld [vmem:[#allocation2 + $0x10] sm:$0xff]
    %v3330 = vld [vmem:[#allocation2 + $0x18] sm:$0xff]
    %v3331 = vld [vmem:[#allocation2 + $0x20] sm:$0xff]
    %v3332 = vld [vmem:[#allocation2 + $0x28] sm:$0xff]
    %v3333 = vld [vmem:[#allocation2 + $0x30] sm:$0xff]
    %v3334 = vld [vmem:[#allocation2 + $0x38] sm:$0xff]
    %v3335 = vld [vmem:[#allocation2 + $0x40] sm:$0xff]
    %v3336 = vld [vmem:[#allocation2 + $0x48] sm:$0xff]
    %v3337 = vld [vmem:[#allocation2 + $0x50] sm:$0xff]
    %v3338 = vld [vmem:[#allocation2 + $0x58] sm:$0xff]
    %v3339 = vld [vmem:[#allocation2 + $0x60] sm:$0xff]
    %v3340 = vld [vmem:[#allocation2 + $0x68] sm:$0xff]
    %v3341 = vld [vmem:[#allocation2 + $0x70] sm:$0xff]
    %v3342 = vld [vmem:[#allocation2 + $0x78] sm:$0xff]
    %v3343 = vld [vmem:[#allocation2 + $0x80] sm:$0xff]
    %v3344 = vld [vmem:[#allocation2 + $0x88] sm:$0xff]
    %v3345 = vld [vmem:[#allocation2 + $0x90] sm:$0xff]
    %v3346 = vld [vmem:[#allocation2 + $0x98] sm:$0xff]
    %v3347 = vld [vmem:[#allocation2 + $0xa0] sm:$0xff]
    %v3348 = vld [vmem:[#allocation2 + $0xa8] sm:$0xff]
    %v3349 = vld [vmem:[#allocation2 + $0xb0] sm:$0xff]
    %v3350 = vld [vmem:[#allocation2 + $0xb8] sm:$0xff]
    %v3351 = vld [vmem:[#allocation2 + $0xc0] sm:$0xff]
    %v3352 = vld [vmem:[#allocation2 + $0xc8] sm:$0xff]
    %v3353 = vld [vmem:[#allocation2 + $0xd0] sm:$0xff]
    %v3354 = vld [vmem:[#allocation2 + $0xd8] sm:$0xff]
    %v3355 = vld [vmem:[#allocation2 + $0xe0] sm:$0xff]
    %v3356 = vld [vmem:[#allocation2 + $0xe8] sm:$0xff]
    %v3357 = vld [vmem:[#allocation2 + $0xf0] sm:$0xff]
    %v3358 = vld [vmem:[#allocation2 + $0xf8] sm:$0xff]
    %v3359 = vld [vmem:[#allocation2 + $0x100] sm:$0xff]
    %v3360 = vld [vmem:[#allocation2 + $0x108] sm:$0xff]
    %v3361 = vld [vmem:[#allocation2 + $0x110] sm:$0xff]
    %v3362 = vld [vmem:[#allocation2 + $0x118] sm:$0xff]
    %v3363 = vld [vmem:[#allocation2 + $0x120] sm:$0xff]
    %v3364 = vld [vmem:[#allocation2 + $0x128] sm:$0xff]
    %v3365 = vld [vmem:[#allocation2 + $0x130] sm:$0xff]
    %v3366 = vld [vmem:[#allocation2 + $0x138] sm:$0xff]
    %v3367 = vld [vmem:[#allocation2 + $0x140] sm:$0xff]
    %v3368 = vld [vmem:[#allocation2 + $0x148] sm:$0xff]
    %v3369 = vld [vmem:[#allocation2 + $0x150] sm:$0xff]
    %v3370 = vld [vmem:[#allocation2 + $0x158] sm:$0xff]
    %v3371 = vld [vmem:[#allocation2 + $0x160] sm:$0xff]
    %v3372 = vld [vmem:[#allocation2 + $0x168] sm:$0xff]
    %v3373 = vld [vmem:[#allocation2 + $0x170] sm:$0xff]
    %v3374 = vld [vmem:[#allocation2 + $0x178] sm:$0xff]
    %v3375 = vld [vmem:[#allocation2 + $0x180] sm:$0xff]
    %v3376 = vld [vmem:[#allocation2 + $0x188] sm:$0xff]
    %v3377 = vld [vmem:[#allocation2 + $0x190] sm:$0xff]
    %v3378 = vld [vmem:[#allocation2 + $0x198] sm:$0xff]
    %v3379 = vld [vmem:[#allocation2 + $0x1a0] sm:$0xff]
    %v3380 = vld [vmem:[#allocation2 + $0x1a8] sm:$0xff]
    %v3381 = vld [vmem:[#allocation2 + $0x1b0] sm:$0xff]
    %v3382 = vld [vmem:[#allocation2 + $0x1b8] sm:$0xff]
    %v3383 = vld [vmem:[#allocation2 + $0x1c0] sm:$0xff]
    %v3384 = vld [vmem:[#allocation2 + $0x1c8] sm:$0xff]
    %v3385 = vld [vmem:[#allocation2 + $0x1d0] sm:$0xff]
    %v3386 = vld [vmem:[#allocation2 + $0x1d8] sm:$0xff]
    %v3387 = vld [vmem:[#allocation2 + $0x1e0] sm:$0xff]
    %v3388 = vld [vmem:[#allocation2 + $0x1e8] sm:$0xff]
    %v3389 = vld [vmem:[#allocation2 + $0x1f0] sm:$0xff]
    %v3390 = vld [vmem:[#allocation2 + $0x1f8] sm:$0xff]
    %v3391 = vld [vmem:[#allocation2 + $0x200] sm:$0xff]
    %v3392 = vld [vmem:[#allocation2 + $0x208] sm:$0xff]
    %v3393 = vld [vmem:[#allocation2 + $0x210] sm:$0xff]
    %v3394 = vld [vmem:[#allocation2 + $0x218] sm:$0xff]
    %v3395 = vld [vmem:[#allocation2 + $0x220] sm:$0xff]
    %v3396 = vld [vmem:[#allocation2 + $0x228] sm:$0xff]
    %v3397 = vld [vmem:[#allocation2 + $0x230] sm:$0xff]
    %v3398 = vld [vmem:[#allocation2 + $0x238] sm:$0xff]
    %v3399 = vld [vmem:[#allocation2 + $0x240] sm:$0xff]
    %v3400 = vld [vmem:[#allocation2 + $0x248] sm:$0xff]
    %v3401 = vld [vmem:[#allocation2 + $0x250] sm:$0xff]
    %v3402 = vld [vmem:[#allocation2 + $0x258] sm:$0xff]
    %v3403 = vld [vmem:[#allocation2 + $0x260] sm:$0xff]
    %v3404 = vld [vmem:[#allocation2 + $0x268] sm:$0xff]
    %v3405 = vld [vmem:[#allocation2 + $0x270] sm:$0xff]
    %v3406 = vld [vmem:[#allocation2 + $0x278] sm:$0xff]
    %v3487 = vunpack.c.l.b16 %v3327
    %v3488 = vunpack.c.h.b16 %v3327
    %v3489 = vunpack.c.l.b16 %v3328
    %v3490 = vunpack.c.h.b16 %v3328
    %v3491 = vunpack.c.l.b16 %v3329
    %v3492 = vunpack.c.h.b16 %v3329
    %v3493 = vunpack.c.l.b16 %v3330
    %v3494 = vunpack.c.h.b16 %v3330
    %v3495 = vunpack.c.l.b16 %v3331
    %v3496 = vunpack.c.h.b16 %v3331
    %v3497 = vunpack.c.l.b16 %v3332
    %v3498 = vunpack.c.h.b16 %v3332
    %v3499 = vunpack.c.l.b16 %v3333
    %v3500 = vunpack.c.h.b16 %v3333
    %v3501 = vunpack.c.l.b16 %v3334
    %v3502 = vunpack.c.h.b16 %v3334
    %v3503 = vunpack.c.l.b16 %v3335
    %v3504 = vunpack.c.h.b16 %v3335
    %v3505 = vunpack.c.l.b16 %v3336
    %v3506 = vunpack.c.h.b16 %v3336
    %v3507 = vunpack.c.l.b16 %v3337
    %v3508 = vunpack.c.h.b16 %v3337
    %v3509 = vunpack.c.l.b16 %v3338
    %v3510 = vunpack.c.h.b16 %v3338
    %v3511 = vunpack.c.l.b16 %v3339
    %v3512 = vunpack.c.h.b16 %v3339
    %v3513 = vunpack.c.l.b16 %v3340
    %v3514 = vunpack.c.h.b16 %v3340
    %v3515 = vunpack.c.l.b16 %v3341
    %v3516 = vunpack.c.h.b16 %v3341
    %v3517 = vunpack.c.l.b16 %v3342
    %v3518 = vunpack.c.h.b16 %v3342
    %v3519 = vunpack.c.l.b16 %v3343
    %v3520 = vunpack.c.h.b16 %v3343
    %v3521 = vunpack.c.l.b16 %v3344
    %v3522 = vunpack.c.h.b16 %v3344
    %v3523 = vunpack.c.l.b16 %v3345
    %v3524 = vunpack.c.h.b16 %v3345
    %v3525 = vunpack.c.l.b16 %v3346
    %v3526 = vunpack.c.h.b16 %v3346
    %v3527 = vunpack.c.l.b16 %v3347
    %v3528 = vunpack.c.h.b16 %v3347
    %v3529 = vunpack.c.l.b16 %v3348
    %v3530 = vunpack.c.h.b16 %v3348
    %v3531 = vunpack.c.l.b16 %v3349
    %v3532 = vunpack.c.h.b16 %v3349
    %v3533 = vunpack.c.l.b16 %v3350
    %v3534 = vunpack.c.h.b16 %v3350
    %v3535 = vunpack.c.l.b16 %v3351
    %v3536 = vunpack.c.h.b16 %v3351
    %v3537 = vunpack.c.l.b16 %v3352
    %v3538 = vunpack.c.h.b16 %v3352
    %v3539 = vunpack.c.l.b16 %v3353
    %v3540 = vunpack.c.h.b16 %v3353
    %v3541 = vunpack.c.l.b16 %v3354
    %v3542 = vunpack.c.h.b16 %v3354
    %v3543 = vunpack.c.l.b16 %v3355
    %v3544 = vunpack.c.h.b16 %v3355
    %v3545 = vunpack.c.l.b16 %v3356
    %v3546 = vunpack.c.h.b16 %v3356
    %v3547 = vunpack.c.l.b16 %v3357
    %v3548 = vunpack.c.h.b16 %v3357
    %v3549 = vunpack.c.l.b16 %v3358
    %v3550 = vunpack.c.h.b16 %v3358
    %v3551 = vunpack.c.l.b16 %v3359
    %v3552 = vunpack.c.h.b16 %v3359
    %v3553 = vunpack.c.l.b16 %v3360
    %v3554 = vunpack.c.h.b16 %v3360
    %v3555 = vunpack.c.l.b16 %v3361
    %v3556 = vunpack.c.h.b16 %v3361
    %v3557 = vunpack.c.l.b16 %v3362
    %v3558 = vunpack.c.h.b16 %v3362
    %v3559 = vunpack.c.l.b16 %v3363
    %v3560 = vunpack.c.h.b16 %v3363
    %v3561 = vunpack.c.l.b16 %v3364
    %v3562 = vunpack.c.h.b16 %v3364
    %v3563 = vunpack.c.l.b16 %v3365
    %v3564 = vunpack.c.h.b16 %v3365
    %v3565 = vunpack.c.l.b16 %v3366
    %v3566 = vunpack.c.h.b16 %v3366
    %v3567 = vunpack.c.l.b16 %v3367
    %v3568 = vunpack.c.h.b16 %v3367
    %v3569 = vunpack.c.l.b16 %v3368
    %v3570 = vunpack.c.h.b16 %v3368
    %v3571 = vunpack.c.l.b16 %v3369
    %v3572 = vunpack.c.h.b16 %v3369
    %v3573 = vunpack.c.l.b16 %v3370
    %v3574 = vunpack.c.h.b16 %v3370
    %v3575 = vunpack.c.l.b16 %v3371
    %v3576 = vunpack.c.h.b16 %v3371
    %v3577 = vunpack.c.l.b16 %v3372
    %v3578 = vunpack.c.h.b16 %v3372
    %v3579 = vunpack.c.l.b16 %v3373
    %v3580 = vunpack.c.h.b16 %v3373
    %v3581 = vunpack.c.l.b16 %v3374
    %v3582 = vunpack.c.h.b16 %v3374
    %v3583 = vunpack.c.l.b16 %v3375
    %v3584 = vunpack.c.h.b16 %v3375
    %v3585 = vunpack.c.l.b16 %v3376
    %v3586 = vunpack.c.h.b16 %v3376
    %v3587 = vunpack.c.l.b16 %v3377
    %v3588 = vunpack.c.h.b16 %v3377
    %v3589 = vunpack.c.l.b16 %v3378
    %v3590 = vunpack.c.h.b16 %v3378
    %v3591 = vunpack.c.l.b16 %v3379
    %v3592 = vunpack.c.h.b16 %v3379
    %v3593 = vunpack.c.l.b16 %v3380
    %v3594 = vunpack.c.h.b16 %v3380
    %v3595 = vunpack.c.l.b16 %v3381
    %v3596 = vunpack.c.h.b16 %v3381
    %v3597 = vunpack.c.l.b16 %v3382
    %v3598 = vunpack.c.h.b16 %v3382
    %v3599 = vunpack.c.l.b16 %v3383
    %v3600 = vunpack.c.h.b16 %v3383
    %v3601 = vunpack.c.l.b16 %v3384
    %v3602 = vunpack.c.h.b16 %v3384
    %v3603 = vunpack.c.l.b16 %v3385
    %v3604 = vunpack.c.h.b16 %v3385
    %v3605 = vunpack.c.l.b16 %v3386
    %v3606 = vunpack.c.h.b16 %v3386
    %v3607 = vunpack.c.l.b16 %v3387
    %v3608 = vunpack.c.h.b16 %v3387
    %v3609 = vunpack.c.l.b16 %v3388
    %v3610 = vunpack.c.h.b16 %v3388
    %v3611 = vunpack.c.l.b16 %v3389
    %v3612 = vunpack.c.h.b16 %v3389
    %v3613 = vunpack.c.l.b16 %v3390
    %v3614 = vunpack.c.h.b16 %v3390
    %v3615 = vunpack.c.l.b16 %v3391
    %v3616 = vunpack.c.h.b16 %v3391
    %v3617 = vunpack.c.l.b16 %v3392
    %v3618 = vunpack.c.h.b16 %v3392
    %v3619 = vunpack.c.l.b16 %v3393
    %v3620 = vunpack.c.h.b16 %v3393
    %v3621 = vunpack.c.l.b16 %v3394
    %v3622 = vunpack.c.h.b16 %v3394
    %v3623 = vunpack.c.l.b16 %v3395
    %v3624 = vunpack.c.h.b16 %v3395
    %v3625 = vunpack.c.l.b16 %v3396
    %v3626 = vunpack.c.h.b16 %v3396
    %v3627 = vunpack.c.l.b16 %v3397
    %v3628 = vunpack.c.h.b16 %v3397
    %v3629 = vunpack.c.l.b16 %v3398
    %v3630 = vunpack.c.h.b16 %v3398
    %v3631 = vunpack.c.l.b16 %v3399
    %v3632 = vunpack.c.h.b16 %v3399
    %v3633 = vunpack.c.l.b16 %v3400
    %v3634 = vunpack.c.h.b16 %v3400
    %v3635 = vunpack.c.l.b16 %v3401
    %v3636 = vunpack.c.h.b16 %v3401
    %v3637 = vunpack.c.l.b16 %v3402
    %v3638 = vunpack.c.h.b16 %v3402
    %v3639 = vunpack.c.l.b16 %v3403
    %v3640 = vunpack.c.h.b16 %v3403
    %v3641 = vunpack.c.l.b16 %v3404
    %v3642 = vunpack.c.h.b16 %v3404
    %v3643 = vunpack.c.l.b16 %v3405
    %v3644 = vunpack.c.h.b16 %v3405
    %v3645 = vunpack.c.l.b16 %v3406
    %v3646 = vunpack.c.h.b16 %v3406
    %v3647 = vpack.c.b16 %v3489, %v3487
    %v3648 = vpack.c.b16 %v3490, %v3488
    %v3649 = vpack.c.b16 %v3493, %v3491
    %v3650 = vpack.c.b16 %v3494, %v3492
    %v3651 = vpack.c.b16 %v3497, %v3495
    %v3652 = vpack.c.b16 %v3498, %v3496
    %v3653 = vpack.c.b16 %v3501, %v3499
    %v3654 = vpack.c.b16 %v3502, %v3500
    %v3655 = vpack.c.b16 %v3505, %v3503
    %v3656 = vpack.c.b16 %v3506, %v3504
    %v3657 = vpack.c.b16 %v3509, %v3507
    %v3658 = vpack.c.b16 %v3510, %v3508
    %v3659 = vpack.c.b16 %v3513, %v3511
    %v3660 = vpack.c.b16 %v3514, %v3512
    %v3661 = vpack.c.b16 %v3517, %v3515
    %v3662 = vpack.c.b16 %v3518, %v3516
    %v3663 = vpack.c.b16 %v3521, %v3519
    %v3664 = vpack.c.b16 %v3522, %v3520
    %v3665 = vpack.c.b16 %v3525, %v3523
    %v3666 = vpack.c.b16 %v3526, %v3524
    %v3667 = vpack.c.b16 %v3529, %v3527
    %v3668 = vpack.c.b16 %v3530, %v3528
    %v3669 = vpack.c.b16 %v3533, %v3531
    %v3670 = vpack.c.b16 %v3534, %v3532
    %v3671 = vpack.c.b16 %v3537, %v3535
    %v3672 = vpack.c.b16 %v3538, %v3536
    %v3673 = vpack.c.b16 %v3541, %v3539
    %v3674 = vpack.c.b16 %v3542, %v3540
    %v3675 = vpack.c.b16 %v3545, %v3543
    %v3676 = vpack.c.b16 %v3546, %v3544
    %v3677 = vpack.c.b16 %v3549, %v3547
    %v3678 = vpack.c.b16 %v3550, %v3548
    %v3679 = vpack.c.b16 %v3553, %v3551
    %v3680 = vpack.c.b16 %v3554, %v3552
    %v3681 = vpack.c.b16 %v3557, %v3555
    %v3682 = vpack.c.b16 %v3558, %v3556
    %v3683 = vpack.c.b16 %v3561, %v3559
    %v3684 = vpack.c.b16 %v3562, %v3560
    %v3685 = vpack.c.b16 %v3565, %v3563
    %v3686 = vpack.c.b16 %v3566, %v3564
    %v3687 = vpack.c.b16 %v3569, %v3567
    %v3688 = vpack.c.b16 %v3570, %v3568
    %v3689 = vpack.c.b16 %v3573, %v3571
    %v3690 = vpack.c.b16 %v3574, %v3572
    %v3691 = vpack.c.b16 %v3577, %v3575
    %v3692 = vpack.c.b16 %v3578, %v3576
    %v3693 = vpack.c.b16 %v3581, %v3579
    %v3694 = vpack.c.b16 %v3582, %v3580
    %v3695 = vpack.c.b16 %v3585, %v3583
    %v3696 = vpack.c.b16 %v3586, %v3584
    %v3697 = vpack.c.b16 %v3589, %v3587
    %v3698 = vpack.c.b16 %v3590, %v3588
    %v3699 = vpack.c.b16 %v3593, %v3591
    %v3700 = vpack.c.b16 %v3594, %v3592
    %v3701 = vpack.c.b16 %v3597, %v3595
    %v3702 = vpack.c.b16 %v3598, %v3596
    %v3703 = vpack.c.b16 %v3601, %v3599
    %v3704 = vpack.c.b16 %v3602, %v3600
    %v3705 = vpack.c.b16 %v3605, %v3603
    %v3706 = vpack.c.b16 %v3606, %v3604
    %v3707 = vpack.c.b16 %v3609, %v3607
    %v3708 = vpack.c.b16 %v3610, %v3608
    %v3709 = vpack.c.b16 %v3613, %v3611
    %v3710 = vpack.c.b16 %v3614, %v3612
    %v3711 = vpack.c.b16 %v3617, %v3615
    %v3712 = vpack.c.b16 %v3618, %v3616
    %v3713 = vpack.c.b16 %v3621, %v3619
    %v3714 = vpack.c.b16 %v3622, %v3620
    %v3715 = vpack.c.b16 %v3625, %v3623
    %v3716 = vpack.c.b16 %v3626, %v3624
    %v3717 = vpack.c.b16 %v3629, %v3627
    %v3718 = vpack.c.b16 %v3630, %v3628
    %v3719 = vpack.c.b16 %v3633, %v3631
    %v3720 = vpack.c.b16 %v3634, %v3632
    %v3721 = vpack.c.b16 %v3637, %v3635
    %v3722 = vpack.c.b16 %v3638, %v3636
    %v3723 = vpack.c.b16 %v3641, %v3639
    %v3724 = vpack.c.b16 %v3642, %v3640
    %v3725 = vpack.c.b16 %v3645, %v3643
    %v3726 = vpack.c.b16 %v3646, %v3644
    %3807 = vmatpush.bf16.msra.mxu0 %v3661
    %3808 = vmatpush.bf16.msra.mxu0 %v3659
    %3809 = vmatpush.bf16.msra.mxu0 %v3657
    %3810 = vmatpush.bf16.msra.mxu0 %v3655
    %3811 = vmatpush.bf16.msra.mxu0 %v3653
    %3812 = vmatpush.bf16.msra.mxu0 %v3651
    %3813 = vmatpush.bf16.msra.mxu0 %v3649
    %3814 = vmatpush.bf16.msra.mxu0 %v3647
    %3815 = vmatmul.bf16.gmra.mxu0 %v3322
    %v3816 = vpop.f32.mrf.mxu0
    %v3817 = vadd.f32 0.0, %v3816
    %v3818 = vpop.f32.mrf.mxu0
    %3819 = vdwg.mxu0
    %3820 = vmatpush.bf16.msra.mxu0 %v3677
    %3821 = vmatpush.bf16.msra.mxu0 %v3675
    %3822 = vmatpush.bf16.msra.mxu0 %v3673
    %3823 = vmatpush.bf16.msra.mxu0 %v3671
    %3824 = vmatpush.bf16.msra.mxu0 %v3669
    %3825 = vmatpush.bf16.msra.mxu0 %v3667
    %3826 = vmatpush.bf16.msra.mxu0 %v3665
    %3827 = vmatpush.bf16.msra.mxu0 %v3663
    %3828 = vmatmul.bf16.gmra.mxu0 %v3323
    %v3829 = vpop.f32.mrf.mxu0
    %v3830 = vadd.f32 %v3817, %v3829
    %v3831 = vpop.f32.mrf.mxu0
    %3832 = vdwg.mxu0
    %3833 = vmatpush.bf16.msra.mxu0 %v3693
    %3834 = vmatpush.bf16.msra.mxu0 %v3691
    %3835 = vmatpush.bf16.msra.mxu0 %v3689
    %3836 = vmatpush.bf16.msra.mxu0 %v3687
    %3837 = vmatpush.bf16.msra.mxu0 %v3685
    %3838 = vmatpush.bf16.msra.mxu0 %v3683
    %3839 = vmatpush.bf16.msra.mxu0 %v3681
    %3840 = vmatpush.bf16.msra.mxu0 %v3679
    %3841 = vmatmul.bf16.gmra.mxu0 %v3324
    %v3842 = vpop.f32.mrf.mxu0
    %v3843 = vadd.f32 %v3830, %v3842
    %v3844 = vpop.f32.mrf.mxu0
    %3845 = vdwg.mxu0
    %3846 = vmatpush.bf16.msra.mxu0 %v3709
    %3847 = vmatpush.bf16.msra.mxu0 %v3707
    %3848 = vmatpush.bf16.msra.mxu0 %v3705
    %3849 = vmatpush.bf16.msra.mxu0 %v3703
    %3850 = vmatpush.bf16.msra.mxu0 %v3701
    %3851 = vmatpush.bf16.msra.mxu0 %v3699
    %3852 = vmatpush.bf16.msra.mxu0 %v3697
    %3853 = vmatpush.bf16.msra.mxu0 %v3695
    %3854 = vmatmul.bf16.gmra.mxu0 %v3325
    %v3855 = vpop.f32.mrf.mxu0
    %v3856 = vadd.f32 %v3843, %v3855
    %v3857 = vpop.f32.mrf.mxu0
    %3858 = vdwg.mxu0
    %3859 = vmatpush.bf16.msra.mxu0 %v3725
    %3860 = vmatpush.bf16.msra.mxu0 %v3723
    %3861 = vmatpush.bf16.msra.mxu0 %v3721
    %3862 = vmatpush.bf16.msra.mxu0 %v3719
    %3863 = vmatpush.bf16.msra.mxu0 %v3717
    %3864 = vmatpush.bf16.msra.mxu0 %v3715
    %3865 = vmatpush.bf16.msra.mxu0 %v3713
    %3866 = vmatpush.bf16.msra.mxu0 %v3711
    %3867 = vmatmul.bf16.gmra.mxu0 %v3326
    %v3868 = vpop.f32.mrf.mxu0
    %v3869 = vadd.f32 %v3856, %v3868
    %v3870 = vpop.f32.mrf.mxu0
    %3871 = vdwg.mxu0
    %3872 = vmatpush.bf16.msra.mxu0 %v3662
    %3873 = vmatpush.bf16.msra.mxu0 %v3660
    %3874 = vmatpush.bf16.msra.mxu0 %v3658
    %3875 = vmatpush.bf16.msra.mxu0 %v3656
    %3876 = vmatpush.bf16.msra.mxu0 %v3654
    %3877 = vmatpush.bf16.msra.mxu0 %v3652
    %3878 = vmatpush.bf16.msra.mxu0 %v3650
    %3879 = vmatpush.bf16.msra.mxu0 %v3648
    %3880 = vmatmul.bf16.gmra.mxu0 %v3322
    %v3881 = vpop.f32.mrf.mxu0
    %v3882 = vadd.f32 0.0, %v3881
    %v3883 = vpop.f32.mrf.mxu0
    %3884 = vdwg.mxu0
    %3885 = vmatpush.bf16.msra.mxu0 %v3678
    %3886 = vmatpush.bf16.msra.mxu0 %v3676
    %3887 = vmatpush.bf16.msra.mxu0 %v3674
    %3888 = vmatpush.bf16.msra.mxu0 %v3672
    %3889 = vmatpush.bf16.msra.mxu0 %v3670
    %3890 = vmatpush.bf16.msra.mxu0 %v3668
    %3891 = vmatpush.bf16.msra.mxu0 %v3666
    %3892 = vmatpush.bf16.msra.mxu0 %v3664
    %3893 = vmatmul.bf16.gmra.mxu0 %v3323
    %v3894 = vpop.f32.mrf.mxu0
    %v3895 = vadd.f32 %v3882, %v3894
    %v3896 = vpop.f32.mrf.mxu0
    %3897 = vdwg.mxu0
    %3898 = vmatpush.bf16.msra.mxu0 %v3694
    %3899 = vmatpush.bf16.msra.mxu0 %v3692
    %3900 = vmatpush.bf16.msra.mxu0 %v3690
    %3901 = vmatpush.bf16.msra.mxu0 %v3688
    %3902 = vmatpush.bf16.msra.mxu0 %v3686
    %3903 = vmatpush.bf16.msra.mxu0 %v3684
    %3904 = vmatpush.bf16.msra.mxu0 %v3682
    %3905 = vmatpush.bf16.msra.mxu0 %v3680
    %3906 = vmatmul.bf16.gmra.mxu0 %v3324
    %v3907 = vpop.f32.mrf.mxu0
    %v3908 = vadd.f32 %v3895, %v3907
    %v3909 = vpop.f32.mrf.mxu0
    %3910 = vdwg.mxu0
    %3911 = vmatpush.bf16.msra.mxu0 %v3710
    %3912 = vmatpush.bf16.msra.mxu0 %v3708
    %3913 = vmatpush.bf16.msra.mxu0 %v3706
    %3914 = vmatpush.bf16.msra.mxu0 %v3704
    %3915 = vmatpush.bf16.msra.mxu0 %v3702
    %3916 = vmatpush.bf16.msra.mxu0 %v3700
    %3917 = vmatpush.bf16.msra.mxu0 %v3698
    %3918 = vmatpush.bf16.msra.mxu0 %v3696
    %3919 = vmatmul.bf16.gmra.mxu0 %v3325
    %v3920 = vpop.f32.mrf.mxu0
    %v3921 = vadd.f32 %v3908, %v3920
    %v3922 = vpop.f32.mrf.mxu0
    %3923 = vdwg.mxu0
    %3924 = vmatpush.bf16.msra.mxu0 %v3726
    %3925 = vmatpush.bf16.msra.mxu0 %v3724
    %3926 = vmatpush.bf16.msra.mxu0 %v3722
    %3927 = vmatpush.bf16.msra.mxu0 %v3720
    %3928 = vmatpush.bf16.msra.mxu0 %v3718
    %3929 = vmatpush.bf16.msra.mxu0 %v3716
    %3930 = vmatpush.bf16.msra.mxu0 %v3714
    %3931 = vmatpush.bf16.msra.mxu0 %v3712
    %3932 = vmatmul.bf16.gmra.mxu0 %v3326
    %v3933 = vpop.f32.mrf.mxu0
    %v3934 = vadd.f32 %v3921, %v3933
    %v3935 = vpop.f32.mrf.mxu0
    %3936 = vdwg.mxu0
    %v3938 = vperm.slane %v3248, 0
    %v3939 = vperm.slane %v3248, 1
    %v3942 = vmul.f32 %v3869, %v3938
    %v3943 = vmul.f32 %v3934, %v3939
    %v3945 = vperm.slane %v3250, 0
    %v3946 = vperm.slane %v3250, 1
    %v3949 = vadd.f32 %v3942, %v3945
    %v3950 = vadd.f32 %v3943, %v3946
    %v3951 = vmax.f32 %v3949, 0.0
    %v3952 = vmax.f32 %v3950, 0.0
    %v3953 = vrot.slane %v3304, 1
    %v3955 = vrot.slane %v3304, 2
    %vm3958 = vcmask 1044480
    %v3959 = vrot.slane %v3304, 3
    %v3960 = vrot.slane %v3305, 3
    %v3961 = vsel %vm3958, %v3959, %v3960
    %v3963 = vrot.slane %v3305, 4
    %v3964 = vsel %vm262, %v3319, %v3963
    %v3966 = vpack.c.bf16 %v3304, %v3304
    %v3967 = vpack.c.bf16 %v3953, %v3953
    %v3968 = vpack.c.bf16 %v3955, %v3955
    %v3969 = vpack.c.bf16 %v3961, %v3961
    %v3970 = vpack.c.bf16 %v3964, %v3964
    %v3972 = vshrl.u32 %v3966, 16
    %v3974 = vshll.u32 %v3966, 16
    %v3976 = vrot.slane %v3974, 1
    %v3977 = vor.u32 %v3972, %v3976
    %v3979 = vshrl.u32 %v3967, 16
    %v3981 = vshll.u32 %v3967, 16
    %v3983 = vrot.slane %v3981, 1
    %v3984 = vor.u32 %v3979, %v3983
    %v3986 = vshrl.u32 %v3968, 16
    %v3988 = vshll.u32 %v3968, 16
    %v3990 = vrot.slane %v3988, 1
    %v3991 = vor.u32 %v3986, %v3990
    %v3993 = vshrl.u32 %v3969, 16
    %v3995 = vshll.u32 %v3969, 16
    %v3997 = vrot.slane %v3995, 1
    %v3998 = vor.u32 %v3993, %v3997
    %v4000 = vshrl.u32 %v3970, 16
    %v4002 = vshll.u32 %v3970, 16
    %v4004 = vrot.slane %v4002, 1
    %v4005 = vor.u32 %v4000, %v4004
    %4011 = vmatpush.bf16.msra.mxu0 %v3661
    %4012 = vmatpush.bf16.msra.mxu0 %v3659
    %4013 = vmatpush.bf16.msra.mxu0 %v3657
    %4014 = vmatpush.bf16.msra.mxu0 %v3655
    %4015 = vmatpush.bf16.msra.mxu0 %v3653
    %4016 = vmatpush.bf16.msra.mxu0 %v3651
    %4017 = vmatpush.bf16.msra.mxu0 %v3649
    %4018 = vmatpush.bf16.msra.mxu0 %v3647
    %4019 = vmatmul.bf16.gmra.mxu0 %v3977
    %v4020 = vpop.f32.mrf.mxu0
    %v4021 = vadd.f32 0.0, %v4020
    %v4022 = vpop.f32.mrf.mxu0
    %4023 = vdwg.mxu0
    %4024 = vmatpush.bf16.msra.mxu0 %v3677
    %4025 = vmatpush.bf16.msra.mxu0 %v3675
    %4026 = vmatpush.bf16.msra.mxu0 %v3673
    %4027 = vmatpush.bf16.msra.mxu0 %v3671
    %4028 = vmatpush.bf16.msra.mxu0 %v3669
    %4029 = vmatpush.bf16.msra.mxu0 %v3667
    %4030 = vmatpush.bf16.msra.mxu0 %v3665
    %4031 = vmatpush.bf16.msra.mxu0 %v3663
    %4032 = vmatmul.bf16.gmra.mxu0 %v3984
    %v4033 = vpop.f32.mrf.mxu0
    %v4034 = vadd.f32 %v4021, %v4033
    %v4035 = vpop.f32.mrf.mxu0
    %4036 = vdwg.mxu0
    %4037 = vmatpush.bf16.msra.mxu0 %v3693
    %4038 = vmatpush.bf16.msra.mxu0 %v3691
    %4039 = vmatpush.bf16.msra.mxu0 %v3689
    %4040 = vmatpush.bf16.msra.mxu0 %v3687
    %4041 = vmatpush.bf16.msra.mxu0 %v3685
    %4042 = vmatpush.bf16.msra.mxu0 %v3683
    %4043 = vmatpush.bf16.msra.mxu0 %v3681
    %4044 = vmatpush.bf16.msra.mxu0 %v3679
    %4045 = vmatmul.bf16.gmra.mxu0 %v3991
    %v4046 = vpop.f32.mrf.mxu0
    %v4047 = vadd.f32 %v4034, %v4046
    %v4048 = vpop.f32.mrf.mxu0
    %4049 = vdwg.mxu0
    %4050 = vmatpush.bf16.msra.mxu0 %v3709
    %4051 = vmatpush.bf16.msra.mxu0 %v3707
    %4052 = vmatpush.bf16.msra.mxu0 %v3705
    %4053 = vmatpush.bf16.msra.mxu0 %v3703
    %4054 = vmatpush.bf16.msra.mxu0 %v3701
    %4055 = vmatpush.bf16.msra.mxu0 %v3699
    %4056 = vmatpush.bf16.msra.mxu0 %v3697
    %4057 = vmatpush.bf16.msra.mxu0 %v3695
    %4058 = vmatmul.bf16.gmra.mxu0 %v3998
    %v4059 = vpop.f32.mrf.mxu0
    %v4060 = vadd.f32 %v4047, %v4059
    %v4061 = vpop.f32.mrf.mxu0
    %4062 = vdwg.mxu0
    %4063 = vmatpush.bf16.msra.mxu0 %v3725
    %4064 = vmatpush.bf16.msra.mxu0 %v3723
    %4065 = vmatpush.bf16.msra.mxu0 %v3721
    %4066 = vmatpush.bf16.msra.mxu0 %v3719
    %4067 = vmatpush.bf16.msra.mxu0 %v3717
    %4068 = vmatpush.bf16.msra.mxu0 %v3715
    %4069 = vmatpush.bf16.msra.mxu0 %v3713
    %4070 = vmatpush.bf16.msra.mxu0 %v3711
    %4071 = vmatmul.bf16.gmra.mxu0 %v4005
    %v4072 = vpop.f32.mrf.mxu0
    %v4073 = vadd.f32 %v4060, %v4072
    %v4074 = vpop.f32.mrf.mxu0
    %4075 = vdwg.mxu0
    %4076 = vmatpush.bf16.msra.mxu0 %v3662
    %4077 = vmatpush.bf16.msra.mxu0 %v3660
    %4078 = vmatpush.bf16.msra.mxu0 %v3658
    %4079 = vmatpush.bf16.msra.mxu0 %v3656
    %4080 = vmatpush.bf16.msra.mxu0 %v3654
    %4081 = vmatpush.bf16.msra.mxu0 %v3652
    %4082 = vmatpush.bf16.msra.mxu0 %v3650
    %4083 = vmatpush.bf16.msra.mxu0 %v3648
    %4084 = vmatmul.bf16.gmra.mxu0 %v3977
    %v4085 = vpop.f32.mrf.mxu0
    %v4086 = vadd.f32 0.0, %v4085
    %v4087 = vpop.f32.mrf.mxu0
    %4088 = vdwg.mxu0
    %4089 = vmatpush.bf16.msra.mxu0 %v3678
    %4090 = vmatpush.bf16.msra.mxu0 %v3676
    %4091 = vmatpush.bf16.msra.mxu0 %v3674
    %4092 = vmatpush.bf16.msra.mxu0 %v3672
    %4093 = vmatpush.bf16.msra.mxu0 %v3670
    %4094 = vmatpush.bf16.msra.mxu0 %v3668
    %4095 = vmatpush.bf16.msra.mxu0 %v3666
    %4096 = vmatpush.bf16.msra.mxu0 %v3664
    %4097 = vmatmul.bf16.gmra.mxu0 %v3984
    %v4098 = vpop.f32.mrf.mxu0
    %v4099 = vadd.f32 %v4086, %v4098
    %v4100 = vpop.f32.mrf.mxu0
    %4101 = vdwg.mxu0
    %4102 = vmatpush.bf16.msra.mxu0 %v3694
    %4103 = vmatpush.bf16.msra.mxu0 %v3692
    %4104 = vmatpush.bf16.msra.mxu0 %v3690
    %4105 = vmatpush.bf16.msra.mxu0 %v3688
    %4106 = vmatpush.bf16.msra.mxu0 %v3686
    %4107 = vmatpush.bf16.msra.mxu0 %v3684
    %4108 = vmatpush.bf16.msra.mxu0 %v3682
    %4109 = vmatpush.bf16.msra.mxu0 %v3680
    %4110 = vmatmul.bf16.gmra.mxu0 %v3991
    %v4111 = vpop.f32.mrf.mxu0
    %v4112 = vadd.f32 %v4099, %v4111
    %v4113 = vpop.f32.mrf.mxu0
    %4114 = vdwg.mxu0
    %4115 = vmatpush.bf16.msra.mxu0 %v3710
    %4116 = vmatpush.bf16.msra.mxu0 %v3708
    %4117 = vmatpush.bf16.msra.mxu0 %v3706
    %4118 = vmatpush.bf16.msra.mxu0 %v3704
    %4119 = vmatpush.bf16.msra.mxu0 %v3702
    %4120 = vmatpush.bf16.msra.mxu0 %v3700
    %4121 = vmatpush.bf16.msra.mxu0 %v3698
    %4122 = vmatpush.bf16.msra.mxu0 %v3696
    %4123 = vmatmul.bf16.gmra.mxu0 %v3998
    %v4124 = vpop.f32.mrf.mxu0
    %v4125 = vadd.f32 %v4112, %v4124
    %v4126 = vpop.f32.mrf.mxu0
    %4127 = vdwg.mxu0
    %4128 = vmatpush.bf16.msra.mxu0 %v3726
    %4129 = vmatpush.bf16.msra.mxu0 %v3724
    %4130 = vmatpush.bf16.msra.mxu0 %v3722
    %4131 = vmatpush.bf16.msra.mxu0 %v3720
    %4132 = vmatpush.bf16.msra.mxu0 %v3718
    %4133 = vmatpush.bf16.msra.mxu0 %v3716
    %4134 = vmatpush.bf16.msra.mxu0 %v3714
    %4135 = vmatpush.bf16.msra.mxu0 %v3712
    %4136 = vmatmul.bf16.gmra.mxu0 %v4005
    %v4137 = vpop.f32.mrf.mxu0
    %v4138 = vadd.f32 %v4125, %v4137
    %v4139 = vpop.f32.mrf.mxu0
    %4140 = vdwg.mxu0
    %v4141 = vmul.f32 %v4073, %v3938
    %v4142 = vmul.f32 %v4138, %v3939
    %v4143 = vadd.f32 %v4141, %v3945
    %v4144 = vadd.f32 %v4142, %v3946
    %v4145 = vmax.f32 %v4143, 0.0
    %v4146 = vmax.f32 %v4144, 0.0
    %s4147 = smul.u32 4, 96
    %s4148 = smul.u32 %s4147, 1
    %s4149 = sshll.u32 %s4148, 4
    %4150 = dma.done %s212, %s4149
    %v4153 = vrot.slane %v3951, 1
    %v4154 = vrot.slane %v3952, 1
    %v4157 = vrot.slane %v3951, 2
    %v4158 = vrot.slane %v3952, 2
    %v4161 = vpack.c.bf16 %v3951, %v3951
    %v4162 = vpack.c.bf16 %v3952, %v3952
    %v4163 = vpack.c.bf16 %v4153, %v4153
    %v4164 = vpack.c.bf16 %v4154, %v4154
    %v4165 = vpack.c.bf16 %v4157, %v4157
    %v4166 = vpack.c.bf16 %v4158, %v4158
    %v4167 = vld [vmem:[#allocation3] sm:$0xf]
    %v4168 = vld [vmem:[#allocation3 + $0x4] sm:$0xf]
    %v4169 = vld [vmem:[#allocation3 + $0x8] sm:$0xf]
    %v4170 = vld [vmem:[#allocation3 + $0xc] sm:$0xf]
    %v4171 = vld [vmem:[#allocation3 + $0x10] sm:$0xf]
    %v4172 = vld [vmem:[#allocation3 + $0x14] sm:$0xf]
    %v4173 = vld [vmem:[#allocation3 + $0x18] sm:$0xf]
    %v4174 = vld [vmem:[#allocation3 + $0x1c] sm:$0xf]
    %v4175 = vld [vmem:[#allocation3 + $0x20] sm:$0xf]
    %v4176 = vld [vmem:[#allocation3 + $0x24] sm:$0xf]
    %v4177 = vld [vmem:[#allocation3 + $0x28] sm:$0xf]
    %v4178 = vld [vmem:[#allocation3 + $0x2c] sm:$0xf]
    %v4179 = vld [vmem:[#allocation3 + $0x30] sm:$0xf]
    %v4180 = vld [vmem:[#allocation3 + $0x34] sm:$0xf]
    %v4181 = vld [vmem:[#allocation3 + $0x38] sm:$0xf]
    %v4182 = vld [vmem:[#allocation3 + $0x3c] sm:$0xf]
    %v4183 = vld [vmem:[#allocation3 + $0x40] sm:$0xf]
    %v4184 = vld [vmem:[#allocation3 + $0x44] sm:$0xf]
    %v4185 = vld [vmem:[#allocation3 + $0x48] sm:$0xf]
    %v4186 = vld [vmem:[#allocation3 + $0x4c] sm:$0xf]
    %v4187 = vld [vmem:[#allocation3 + $0x50] sm:$0xf]
    %v4188 = vld [vmem:[#allocation3 + $0x54] sm:$0xf]
    %v4189 = vld [vmem:[#allocation3 + $0x58] sm:$0xf]
    %v4190 = vld [vmem:[#allocation3 + $0x5c] sm:$0xf]
    %v4191 = vld [vmem:[#allocation3 + $0x60] sm:$0xf]
    %v4192 = vld [vmem:[#allocation3 + $0x64] sm:$0xf]
    %v4193 = vld [vmem:[#allocation3 + $0x68] sm:$0xf]
    %v4194 = vld [vmem:[#allocation3 + $0x6c] sm:$0xf]
    %v4195 = vld [vmem:[#allocation3 + $0x70] sm:$0xf]
    %v4196 = vld [vmem:[#allocation3 + $0x74] sm:$0xf]
    %v4197 = vld [vmem:[#allocation3 + $0x78] sm:$0xf]
    %v4198 = vld [vmem:[#allocation3 + $0x7c] sm:$0xf]
    %v4199 = vld [vmem:[#allocation3 + $0x80] sm:$0xf]
    %v4200 = vld [vmem:[#allocation3 + $0x84] sm:$0xf]
    %v4201 = vld [vmem:[#allocation3 + $0x88] sm:$0xf]
    %v4202 = vld [vmem:[#allocation3 + $0x8c] sm:$0xf]
    %v4203 = vld [vmem:[#allocation3 + $0x90] sm:$0xf]
    %v4204 = vld [vmem:[#allocation3 + $0x94] sm:$0xf]
    %v4205 = vld [vmem:[#allocation3 + $0x98] sm:$0xf]
    %v4206 = vld [vmem:[#allocation3 + $0x9c] sm:$0xf]
    %v4207 = vld [vmem:[#allocation3 + $0xa0] sm:$0xf]
    %v4208 = vld [vmem:[#allocation3 + $0xa4] sm:$0xf]
    %v4209 = vld [vmem:[#allocation3 + $0xa8] sm:$0xf]
    %v4210 = vld [vmem:[#allocation3 + $0xac] sm:$0xf]
    %v4211 = vld [vmem:[#allocation3 + $0xb0] sm:$0xf]
    %v4212 = vld [vmem:[#allocation3 + $0xb4] sm:$0xf]
    %v4213 = vld [vmem:[#allocation3 + $0xb8] sm:$0xf]
    %v4214 = vld [vmem:[#allocation3 + $0xbc] sm:$0xf]
    %v4215 = vld [vmem:[#allocation3 + $0xc0] sm:$0xf]
    %v4216 = vld [vmem:[#allocation3 + $0xc4] sm:$0xf]
    %v4217 = vld [vmem:[#allocation3 + $0xc8] sm:$0xf]
    %v4218 = vld [vmem:[#allocation3 + $0xcc] sm:$0xf]
    %v4219 = vld [vmem:[#allocation3 + $0xd0] sm:$0xf]
    %v4220 = vld [vmem:[#allocation3 + $0xd4] sm:$0xf]
    %v4221 = vld [vmem:[#allocation3 + $0xd8] sm:$0xf]
    %v4222 = vld [vmem:[#allocation3 + $0xdc] sm:$0xf]
    %v4223 = vld [vmem:[#allocation3 + $0xe0] sm:$0xf]
    %v4224 = vld [vmem:[#allocation3 + $0xe4] sm:$0xf]
    %v4225 = vld [vmem:[#allocation3 + $0xe8] sm:$0xf]
    %v4226 = vld [vmem:[#allocation3 + $0xec] sm:$0xf]
    %v4227 = vld [vmem:[#allocation3 + $0xf0] sm:$0xf]
    %v4228 = vld [vmem:[#allocation3 + $0xf4] sm:$0xf]
    %v4229 = vld [vmem:[#allocation3 + $0xf8] sm:$0xf]
    %v4230 = vld [vmem:[#allocation3 + $0xfc] sm:$0xf]
    %v4231 = vld [vmem:[#allocation3 + $0x100] sm:$0xf]
    %v4232 = vld [vmem:[#allocation3 + $0x104] sm:$0xf]
    %v4233 = vld [vmem:[#allocation3 + $0x108] sm:$0xf]
    %v4234 = vld [vmem:[#allocation3 + $0x10c] sm:$0xf]
    %v4235 = vld [vmem:[#allocation3 + $0x110] sm:$0xf]
    %v4236 = vld [vmem:[#allocation3 + $0x114] sm:$0xf]
    %v4237 = vld [vmem:[#allocation3 + $0x118] sm:$0xf]
    %v4238 = vld [vmem:[#allocation3 + $0x11c] sm:$0xf]
    %v4239 = vld [vmem:[#allocation3 + $0x120] sm:$0xf]
    %v4240 = vld [vmem:[#allocation3 + $0x124] sm:$0xf]
    %v4241 = vld [vmem:[#allocation3 + $0x128] sm:$0xf]
    %v4242 = vld [vmem:[#allocation3 + $0x12c] sm:$0xf]
    %v4243 = vld [vmem:[#allocation3 + $0x130] sm:$0xf]
    %v4244 = vld [vmem:[#allocation3 + $0x134] sm:$0xf]
    %v4245 = vld [vmem:[#allocation3 + $0x138] sm:$0xf]
    %v4246 = vld [vmem:[#allocation3 + $0x13c] sm:$0xf]
    %v4247 = vld [vmem:[#allocation3 + $0x140] sm:$0xf]
    %v4248 = vld [vmem:[#allocation3 + $0x144] sm:$0xf]
    %v4249 = vld [vmem:[#allocation3 + $0x148] sm:$0xf]
    %v4250 = vld [vmem:[#allocation3 + $0x14c] sm:$0xf]
    %v4251 = vld [vmem:[#allocation3 + $0x150] sm:$0xf]
    %v4252 = vld [vmem:[#allocation3 + $0x154] sm:$0xf]
    %v4253 = vld [vmem:[#allocation3 + $0x158] sm:$0xf]
    %v4254 = vld [vmem:[#allocation3 + $0x15c] sm:$0xf]
    %v4255 = vld [vmem:[#allocation3 + $0x160] sm:$0xf]
    %v4256 = vld [vmem:[#allocation3 + $0x164] sm:$0xf]
    %v4257 = vld [vmem:[#allocation3 + $0x168] sm:$0xf]
    %v4258 = vld [vmem:[#allocation3 + $0x16c] sm:$0xf]
    %v4259 = vld [vmem:[#allocation3 + $0x170] sm:$0xf]
    %v4260 = vld [vmem:[#allocation3 + $0x174] sm:$0xf]
    %v4261 = vld [vmem:[#allocation3 + $0x178] sm:$0xf]
    %v4262 = vld [vmem:[#allocation3 + $0x17c] sm:$0xf]
    %v4359 = vunpack.c.l.b16 %v4167
    %v4360 = vunpack.c.l.b16 %v4168
    %v4361 = vunpack.c.l.b16 %v4169
    %v4362 = vunpack.c.l.b16 %v4170
    %v4363 = vunpack.c.l.b16 %v4171
    %v4364 = vunpack.c.l.b16 %v4172
    %v4365 = vunpack.c.l.b16 %v4173
    %v4366 = vunpack.c.l.b16 %v4174
    %v4367 = vunpack.c.l.b16 %v4175
    %v4368 = vunpack.c.l.b16 %v4176
    %v4369 = vunpack.c.l.b16 %v4177
    %v4370 = vunpack.c.l.b16 %v4178
    %v4371 = vunpack.c.l.b16 %v4179
    %v4372 = vunpack.c.l.b16 %v4180
    %v4373 = vunpack.c.l.b16 %v4181
    %v4374 = vunpack.c.l.b16 %v4182
    %v4375 = vunpack.c.l.b16 %v4183
    %v4376 = vunpack.c.l.b16 %v4184
    %v4377 = vunpack.c.l.b16 %v4185
    %v4378 = vunpack.c.l.b16 %v4186
    %v4379 = vunpack.c.l.b16 %v4187
    %v4380 = vunpack.c.l.b16 %v4188
    %v4381 = vunpack.c.l.b16 %v4189
    %v4382 = vunpack.c.l.b16 %v4190
    %v4383 = vunpack.c.l.b16 %v4191
    %v4384 = vunpack.c.l.b16 %v4192
    %v4385 = vunpack.c.l.b16 %v4193
    %v4386 = vunpack.c.l.b16 %v4194
    %v4387 = vunpack.c.l.b16 %v4195
    %v4388 = vunpack.c.l.b16 %v4196
    %v4389 = vunpack.c.l.b16 %v4197
    %v4390 = vunpack.c.l.b16 %v4198
    %v4391 = vunpack.c.l.b16 %v4199
    %v4392 = vunpack.c.l.b16 %v4200
    %v4393 = vunpack.c.l.b16 %v4201
    %v4394 = vunpack.c.l.b16 %v4202
    %v4395 = vunpack.c.l.b16 %v4203
    %v4396 = vunpack.c.l.b16 %v4204
    %v4397 = vunpack.c.l.b16 %v4205
    %v4398 = vunpack.c.l.b16 %v4206
    %v4399 = vunpack.c.l.b16 %v4207
    %v4400 = vunpack.c.l.b16 %v4208
    %v4401 = vunpack.c.l.b16 %v4209
    %v4402 = vunpack.c.l.b16 %v4210
    %v4403 = vunpack.c.l.b16 %v4211
    %v4404 = vunpack.c.l.b16 %v4212
    %v4405 = vunpack.c.l.b16 %v4213
    %v4406 = vunpack.c.l.b16 %v4214
    %v4407 = vunpack.c.l.b16 %v4215
    %v4408 = vunpack.c.l.b16 %v4216
    %v4409 = vunpack.c.l.b16 %v4217
    %v4410 = vunpack.c.l.b16 %v4218
    %v4411 = vunpack.c.l.b16 %v4219
    %v4412 = vunpack.c.l.b16 %v4220
    %v4413 = vunpack.c.l.b16 %v4221
    %v4414 = vunpack.c.l.b16 %v4222
    %v4415 = vunpack.c.l.b16 %v4223
    %v4416 = vunpack.c.l.b16 %v4224
    %v4417 = vunpack.c.l.b16 %v4225
    %v4418 = vunpack.c.l.b16 %v4226
    %v4419 = vunpack.c.l.b16 %v4227
    %v4420 = vunpack.c.l.b16 %v4228
    %v4421 = vunpack.c.l.b16 %v4229
    %v4422 = vunpack.c.l.b16 %v4230
    %v4423 = vunpack.c.l.b16 %v4231
    %v4424 = vunpack.c.l.b16 %v4232
    %v4425 = vunpack.c.l.b16 %v4233
    %v4426 = vunpack.c.l.b16 %v4234
    %v4427 = vunpack.c.l.b16 %v4235
    %v4428 = vunpack.c.l.b16 %v4236
    %v4429 = vunpack.c.l.b16 %v4237
    %v4430 = vunpack.c.l.b16 %v4238
    %v4431 = vunpack.c.l.b16 %v4239
    %v4432 = vunpack.c.l.b16 %v4240
    %v4433 = vunpack.c.l.b16 %v4241
    %v4434 = vunpack.c.l.b16 %v4242
    %v4435 = vunpack.c.l.b16 %v4243
    %v4436 = vunpack.c.l.b16 %v4244
    %v4437 = vunpack.c.l.b16 %v4245
    %v4438 = vunpack.c.l.b16 %v4246
    %v4439 = vunpack.c.l.b16 %v4247
    %v4440 = vunpack.c.l.b16 %v4248
    %v4441 = vunpack.c.l.b16 %v4249
    %v4442 = vunpack.c.l.b16 %v4250
    %v4443 = vunpack.c.l.b16 %v4251
    %v4444 = vunpack.c.l.b16 %v4252
    %v4445 = vunpack.c.l.b16 %v4253
    %v4446 = vunpack.c.l.b16 %v4254
    %v4447 = vunpack.c.l.b16 %v4255
    %v4448 = vunpack.c.l.b16 %v4256
    %v4449 = vunpack.c.l.b16 %v4257
    %v4450 = vunpack.c.l.b16 %v4258
    %v4451 = vunpack.c.l.b16 %v4259
    %v4452 = vunpack.c.l.b16 %v4260
    %v4453 = vunpack.c.l.b16 %v4261
    %v4454 = vunpack.c.l.b16 %v4262
    %v4455 = vpack.c.b16 %v4360, %v4359
    %v4456 = vpack.c.b16 %v4362, %v4361
    %v4457 = vpack.c.b16 %v4364, %v4363
    %v4458 = vpack.c.b16 %v4366, %v4365
    %v4459 = vpack.c.b16 %v4368, %v4367
    %v4460 = vpack.c.b16 %v4370, %v4369
    %v4461 = vpack.c.b16 %v4372, %v4371
    %v4462 = vpack.c.b16 %v4374, %v4373
    %v4463 = vpack.c.b16 %v4376, %v4375
    %v4464 = vpack.c.b16 %v4378, %v4377
    %v4465 = vpack.c.b16 %v4380, %v4379
    %v4466 = vpack.c.b16 %v4382, %v4381
    %v4467 = vpack.c.b16 %v4384, %v4383
    %v4468 = vpack.c.b16 %v4386, %v4385
    %v4469 = vpack.c.b16 %v4388, %v4387
    %v4470 = vpack.c.b16 %v4390, %v4389
    %v4471 = vpack.c.b16 %v4392, %v4391
    %v4472 = vpack.c.b16 %v4394, %v4393
    %v4473 = vpack.c.b16 %v4396, %v4395
    %v4474 = vpack.c.b16 %v4398, %v4397
    %v4475 = vpack.c.b16 %v4400, %v4399
    %v4476 = vpack.c.b16 %v4402, %v4401
    %v4477 = vpack.c.b16 %v4404, %v4403
    %v4478 = vpack.c.b16 %v4406, %v4405
    %v4479 = vpack.c.b16 %v4408, %v4407
    %v4480 = vpack.c.b16 %v4410, %v4409
    %v4481 = vpack.c.b16 %v4412, %v4411
    %v4482 = vpack.c.b16 %v4414, %v4413
    %v4483 = vpack.c.b16 %v4416, %v4415
    %v4484 = vpack.c.b16 %v4418, %v4417
    %v4485 = vpack.c.b16 %v4420, %v4419
    %v4486 = vpack.c.b16 %v4422, %v4421
    %v4487 = vpack.c.b16 %v4424, %v4423
    %v4488 = vpack.c.b16 %v4426, %v4425
    %v4489 = vpack.c.b16 %v4428, %v4427
    %v4490 = vpack.c.b16 %v4430, %v4429
    %v4491 = vpack.c.b16 %v4432, %v4431
    %v4492 = vpack.c.b16 %v4434, %v4433
    %v4493 = vpack.c.b16 %v4436, %v4435
    %v4494 = vpack.c.b16 %v4438, %v4437
    %v4495 = vpack.c.b16 %v4440, %v4439
    %v4496 = vpack.c.b16 %v4442, %v4441
    %v4497 = vpack.c.b16 %v4444, %v4443
    %v4498 = vpack.c.b16 %v4446, %v4445
    %v4499 = vpack.c.b16 %v4448, %v4447
    %v4500 = vpack.c.b16 %v4450, %v4449
    %v4501 = vpack.c.b16 %v4452, %v4451
    %v4502 = vpack.c.b16 %v4454, %v4453
    %4551 = vmatpush.bf16.msra.mxu0 %v4462
    %4552 = vmatpush.bf16.msra.mxu0 %v4461
    %4553 = vmatpush.bf16.msra.mxu0 %v4460
    %4554 = vmatpush.bf16.msra.mxu0 %v4459
    %4555 = vmatpush.bf16.msra.mxu0 %v4458
    %4556 = vmatpush.bf16.msra.mxu0 %v4457
    %4557 = vmatpush.bf16.msra.mxu0 %v4456
    %4558 = vmatpush.bf16.msra.mxu0 %v4455
    %4559 = vmatmul.bf16.gmra.mxu0 %v4161
    %v4560 = vpop.f32.mrf.mxu0
    %v4561 = vadd.f32 0.0, %v4560
    %v4562 = vpop.f32.mrf.mxu0
    %4563 = vdwg.mxu0
    %4564 = vmatpush.bf16.msra.mxu0 %v4470
    %4565 = vmatpush.bf16.msra.mxu0 %v4469
    %4566 = vmatpush.bf16.msra.mxu0 %v4468
    %4567 = vmatpush.bf16.msra.mxu0 %v4467
    %4568 = vmatpush.bf16.msra.mxu0 %v4466
    %4569 = vmatpush.bf16.msra.mxu0 %v4465
    %4570 = vmatpush.bf16.msra.mxu0 %v4464
    %4571 = vmatpush.bf16.msra.mxu0 %v4463
    %4572 = vmatmul.bf16.gmra.mxu0 %v4162
    %v4573 = vpop.f32.mrf.mxu0
    %v4574 = vadd.f32 %v4561, %v4573
    %v4575 = vpop.f32.mrf.mxu0
    %4576 = vdwg.mxu0
    %4577 = vmatpush.bf16.msra.mxu0 %v4478
    %4578 = vmatpush.bf16.msra.mxu0 %v4477
    %4579 = vmatpush.bf16.msra.mxu0 %v4476
    %4580 = vmatpush.bf16.msra.mxu0 %v4475
    %4581 = vmatpush.bf16.msra.mxu0 %v4474
    %4582 = vmatpush.bf16.msra.mxu0 %v4473
    %4583 = vmatpush.bf16.msra.mxu0 %v4472
    %4584 = vmatpush.bf16.msra.mxu0 %v4471
    %4585 = vmatmul.bf16.gmra.mxu0 %v4163
    %v4586 = vpop.f32.mrf.mxu0
    %v4587 = vadd.f32 %v4574, %v4586
    %v4588 = vpop.f32.mrf.mxu0
    %4589 = vdwg.mxu0
    %4590 = vmatpush.bf16.msra.mxu0 %v4486
    %4591 = vmatpush.bf16.msra.mxu0 %v4485
    %4592 = vmatpush.bf16.msra.mxu0 %v4484
    %4593 = vmatpush.bf16.msra.mxu0 %v4483
    %4594 = vmatpush.bf16.msra.mxu0 %v4482
    %4595 = vmatpush.bf16.msra.mxu0 %v4481
    %4596 = vmatpush.bf16.msra.mxu0 %v4480
    %4597 = vmatpush.bf16.msra.mxu0 %v4479
    %4598 = vmatmul.bf16.gmra.mxu0 %v4164
    %v4599 = vpop.f32.mrf.mxu0
    %v4600 = vadd.f32 %v4587, %v4599
    %v4601 = vpop.f32.mrf.mxu0
    %4602 = vdwg.mxu0
    %4603 = vmatpush.bf16.msra.mxu0 %v4494
    %4604 = vmatpush.bf16.msra.mxu0 %v4493
    %4605 = vmatpush.bf16.msra.mxu0 %v4492
    %4606 = vmatpush.bf16.msra.mxu0 %v4491
    %4607 = vmatpush.bf16.msra.mxu0 %v4490
    %4608 = vmatpush.bf16.msra.mxu0 %v4489
    %4609 = vmatpush.bf16.msra.mxu0 %v4488
    %4610 = vmatpush.bf16.msra.mxu0 %v4487
    %4611 = vmatmul.bf16.gmra.mxu0 %v4165
    %v4612 = vpop.f32.mrf.mxu0
    %v4613 = vadd.f32 %v4600, %v4612
    %v4614 = vpop.f32.mrf.mxu0
    %4615 = vdwg.mxu0
    %4616 = vmatpush.bf16.msra.mxu0 %v4502
    %4617 = vmatpush.bf16.msra.mxu0 %v4501
    %4618 = vmatpush.bf16.msra.mxu0 %v4500
    %4619 = vmatpush.bf16.msra.mxu0 %v4499
    %4620 = vmatpush.bf16.msra.mxu0 %v4498
    %4621 = vmatpush.bf16.msra.mxu0 %v4497
    %4622 = vmatpush.bf16.msra.mxu0 %v4496
    %4623 = vmatpush.bf16.msra.mxu0 %v4495
    %4624 = vmatmul.bf16.gmra.mxu0 %v4166
    %v4625 = vpop.f32.mrf.mxu0
    %v4626 = vadd.f32 %v4613, %v4625
    %v4627 = vpop.f32.mrf.mxu0
    %4628 = vdwg.mxu0
    %v4629 = vperm.slane %v3251, 0
    %v4630 = vmul.f32 %v4626, %v4629
    %v4631 = vperm.slane %v3252, 0
    %v4632 = vadd.f32 %v4630, %v4631
    %v4633 = vmax.f32 %v4632, 0.0
    %vm4634 = vcmask 1042432
    %v4635 = vsel %vm4634, %v4633, -inf
    %v4636 = vrot.slane %v4635, 4
    %v4637 = vmax.f32 %v4635, %v4636
    %v4638 = vrot.slane %v4637, 2
    %v4639 = vmax.f32 %v4637, %v4638
    %v4640 = vrot.slane %v4639, 1
    %v4641 = vmax.f32 %v4639, %v4640
    %v4644 = vrot.slane %v4145, 1
    %v4645 = vrot.slane %v4146, 1
    %v4648 = vrot.slane %v4145, 2
    %v4649 = vrot.slane %v4146, 2
    %v4652 = vpack.c.bf16 %v4145, %v4145
    %v4653 = vpack.c.bf16 %v4146, %v4146
    %v4654 = vpack.c.bf16 %v4644, %v4644
    %v4655 = vpack.c.bf16 %v4645, %v4645
    %v4656 = vpack.c.bf16 %v4648, %v4648
    %v4657 = vpack.c.bf16 %v4649, %v4649
    %4658 = vmatpush.bf16.msra.mxu0 %v4462
    %4659 = vmatpush.bf16.msra.mxu0 %v4461
    %4660 = vmatpush.bf16.msra.mxu0 %v4460
    %4661 = vmatpush.bf16.msra.mxu0 %v4459
    %4662 = vmatpush.bf16.msra.mxu0 %v4458
    %4663 = vmatpush.bf16.msra.mxu0 %v4457
    %4664 = vmatpush.bf16.msra.mxu0 %v4456
    %4665 = vmatpush.bf16.msra.mxu0 %v4455
    %4666 = vmatmul.bf16.gmra.mxu0 %v4652
    %v4667 = vpop.f32.mrf.mxu0
    %v4668 = vadd.f32 0.0, %v4667
    %v4669 = vpop.f32.mrf.mxu0
    %4670 = vdwg.mxu0
    %4671 = vmatpush.bf16.msra.mxu0 %v4470
    %4672 = vmatpush.bf16.msra.mxu0 %v4469
    %4673 = vmatpush.bf16.msra.mxu0 %v4468
    %4674 = vmatpush.bf16.msra.mxu0 %v4467
    %4675 = vmatpush.bf16.msra.mxu0 %v4466
    %4676 = vmatpush.bf16.msra.mxu0 %v4465
    %4677 = vmatpush.bf16.msra.mxu0 %v4464
    %4678 = vmatpush.bf16.msra.mxu0 %v4463
    %4679 = vmatmul.bf16.gmra.mxu0 %v4653
    %v4680 = vpop.f32.mrf.mxu0
    %v4681 = vadd.f32 %v4668, %v4680
    %v4682 = vpop.f32.mrf.mxu0
    %4683 = vdwg.mxu0
    %4684 = vmatpush.bf16.msra.mxu0 %v4478
    %4685 = vmatpush.bf16.msra.mxu0 %v4477
    %4686 = vmatpush.bf16.msra.mxu0 %v4476
    %4687 = vmatpush.bf16.msra.mxu0 %v4475
    %4688 = vmatpush.bf16.msra.mxu0 %v4474
    %4689 = vmatpush.bf16.msra.mxu0 %v4473
    %4690 = vmatpush.bf16.msra.mxu0 %v4472
    %4691 = vmatpush.bf16.msra.mxu0 %v4471
    %4692 = vmatmul.bf16.gmra.mxu0 %v4654
    %v4693 = vpop.f32.mrf.mxu0
    %v4694 = vadd.f32 %v4681, %v4693
    %v4695 = vpop.f32.mrf.mxu0
    %4696 = vdwg.mxu0
    %4697 = vmatpush.bf16.msra.mxu0 %v4486
    %4698 = vmatpush.bf16.msra.mxu0 %v4485
    %4699 = vmatpush.bf16.msra.mxu0 %v4484
    %4700 = vmatpush.bf16.msra.mxu0 %v4483
    %4701 = vmatpush.bf16.msra.mxu0 %v4482
    %4702 = vmatpush.bf16.msra.mxu0 %v4481
    %4703 = vmatpush.bf16.msra.mxu0 %v4480
    %4704 = vmatpush.bf16.msra.mxu0 %v4479
    %4705 = vmatmul.bf16.gmra.mxu0 %v4655
    %v4706 = vpop.f32.mrf.mxu0
    %v4707 = vadd.f32 %v4694, %v4706
    %v4708 = vpop.f32.mrf.mxu0
    %4709 = vdwg.mxu0
    %4710 = vmatpush.bf16.msra.mxu0 %v4494
    %4711 = vmatpush.bf16.msra.mxu0 %v4493
    %4712 = vmatpush.bf16.msra.mxu0 %v4492
    %4713 = vmatpush.bf16.msra.mxu0 %v4491
    %4714 = vmatpush.bf16.msra.mxu0 %v4490
    %4715 = vmatpush.bf16.msra.mxu0 %v4489
    %4716 = vmatpush.bf16.msra.mxu0 %v4488
    %4717 = vmatpush.bf16.msra.mxu0 %v4487
    %4718 = vmatmul.bf16.gmra.mxu0 %v4656
    %v4719 = vpop.f32.mrf.mxu0
    %v4720 = vadd.f32 %v4707, %v4719
    %v4721 = vpop.f32.mrf.mxu0
    %4722 = vdwg.mxu0
    %4723 = vmatpush.bf16.msra.mxu0 %v4502
    %4724 = vmatpush.bf16.msra.mxu0 %v4501
    %4725 = vmatpush.bf16.msra.mxu0 %v4500
    %4726 = vmatpush.bf16.msra.mxu0 %v4499
    %4727 = vmatpush.bf16.msra.mxu0 %v4498
    %4728 = vmatpush.bf16.msra.mxu0 %v4497
    %4729 = vmatpush.bf16.msra.mxu0 %v4496
    %4730 = vmatpush.bf16.msra.mxu0 %v4495
    %4731 = vmatmul.bf16.gmra.mxu0 %v4657
    %v4732 = vpop.f32.mrf.mxu0
    %v4733 = vadd.f32 %v4720, %v4732
    %v4734 = vpop.f32.mrf.mxu0
    %4735 = vdwg.mxu0
    %v4736 = vmul.f32 %v4733, %v4629
    %v4737 = vadd.f32 %v4736, %v4631
    %v4738 = vmax.f32 %v4737, 0.0
    %v4739 = vsel %vm4634, %v4738, -inf
    %v4740 = vrot.slane %v4739, 4
    %v4741 = vmax.f32 %v4739, %v4740
    %v4742 = vrot.slane %v4741, 2
    %v4743 = vmax.f32 %v4741, %v4742
    %v4744 = vrot.slane %v4743, 1
    %v4745 = vmax.f32 %v4743, %v4744
    %v4746 = vlaneseq
    %v4747 = vshrl.u32 %v4746, 7
    %vm4748 = vcmp.eq.s32.totalorder %v4747, 0
    %v4749 = vsel %vm4748, %v4641, 0.0
    %vm4750 = vcmp.eq.s32.totalorder %v4747, 1
    %v4751 = vsel %vm4750, %v4745, %v4749
    %v4752 = vld [vmem:[#allocation5 + $0x98] sm:$0xff]
    %v4753 = vld [vmem:[#allocation5 + $0xa0] sm:$0xff]
    %v4754 = vld [vmem:[#allocation5 + $0xa8] sm:$0xff]
    %v4755 = vld [vmem:[#allocation5 + $0xb0] sm:$0xff]
    %v4756 = vld [vmem:[#allocation5 + $0xb8] sm:$0xff]
    %v4757 = vld [vmem:[#allocation5 + $0xc0] sm:$0xff]
    %v4758 = vld [vmem:[#allocation5 + $0xc8] sm:$0xff]
    %v4759 = vld [vmem:[#allocation5 + $0xd0] sm:$0xff]
    %v4760 = vld [vmem:[#allocation5 + $0xd8] sm:$0xff]
    %v4761 = vld [vmem:[#allocation5 + $0xe0] sm:$0xff]
    %v4762 = vld [vmem:[#allocation5 + $0xe8] sm:$0xff]
    %v4763 = vld [vmem:[#allocation5 + $0xf0] sm:$0xff]
    %v4764 = vld [vmem:[#allocation5 + $0xf8] sm:$0xff]
    %v4765 = vld [vmem:[#allocation5 + $0x100] sm:$0xff]
    %v4766 = vld [vmem:[#allocation5 + $0x108] sm:$0xff]
    %v4767 = vld [vmem:[#allocation5 + $0x110] sm:$0xff]
    %v4768 = vld [vmem:[#allocation5 + $0x118] sm:$0xff]
    %v4769 = vld [vmem:[#allocation5 + $0x120] sm:$0xff]
    %v4770 = vld [vmem:[#allocation5 + $0x128] sm:$0xff]
    %v4771 = vld [vmem:[#allocation5 + $0x130] sm:$0xff]
    %v4772 = vld [vmem:[#allocation5 + $0x138] sm:$0x1]
    %v4773 = vld [vmem:[#allocation5 + $0x140] sm:$0x1]
    %v4774 = vld [vmem:[#allocation5 + $0x148] sm:$0x1]
    %4775 = vmatpush.msra.mxu0 %v4771
    %4776 = vmatpush.msra.mxu0 %v4770
    %4777 = vmatpush.msra.mxu0 %v4769
    %4778 = vmatpush.msra.mxu0 %v4768
    %4779 = vmatpush.msra.mxu0 %v4767
    %4780 = vmatpush.msra.mxu0 %v4766
    %4781 = vmatpush.msra.mxu0 %v4765
    %4782 = vmatpush.msra.mxu0 %v4764
    %4783 = vmatpush.msra.mxu0 %v4763
    %4784 = vmatpush.msra.mxu0 %v4762
    %4785 = vmatpush.msra.mxu0 %v4761
    %4786 = vmatpush.msra.mxu0 %v4760
    %4787 = vmatpush.msra.mxu0 %v4759
    %4788 = vmatpush.msra.mxu0 %v4758
    %4789 = vmatpush.msra.mxu0 %v4757
    %4790 = vmatpush.msra.mxu0 %v4756
    %4791 = vmatmul.f32.gmra.mxu0 %v4751
    %v4792 = vpop.f32.mrf.mxu0
    %v4793 = vadd.f32 0.0, %v4792
    %4794 = vdwg.mxu0
    %4796 = vrot.lane.b32.xlu0 %v3244, 32
    %v4797 = vpop.permute.xlu0 %4796
    %v4798 = vsel %vm373, %v4797, 0
    %4800 = vmatpush.msra.mxu0 0.0
    %4801 = vmatpush.msra.mxu0 0.0
    %4802 = vmatpush.msra.mxu0 0.0
    %4803 = vmatpush.msra.mxu0 0.0
    %4804 = vmatpush.msra.mxu0 0.0
    %4805 = vmatpush.msra.mxu0 0.0
    %4806 = vmatpush.msra.mxu0 0.0
    %4807 = vmatpush.msra.mxu0 0.0
    %4808 = vmatpush.msra.mxu0 0.0
    %4809 = vmatpush.msra.mxu0 0.0
    %4810 = vmatpush.msra.mxu0 0.0
    %4811 = vmatpush.msra.mxu0 0.0
    %4812 = vmatpush.msra.mxu0 %v4755
    %4813 = vmatpush.msra.mxu0 %v4754
    %4814 = vmatpush.msra.mxu0 %v4753
    %4815 = vmatpush.msra.mxu0 %v4752
    %4816 = vmatmul.f32.gmra.mxu0 %v4798
    %v4817 = vpop.f32.mrf.mxu0
    %v4818 = vadd.f32 %v4793, %v4817
    %4819 = vdwg.mxu0
    %v4820 = vperm.slane %v4772, 0
    %v4821 = vadd.f32 %v4818, %v4820
    %v4822 = vmax.f32 %v4821, 0.0
    %v4823 = vperm.slane %v4773, 0
    %v4824 = vmul.f32 %v4822, %v4823
    %vm4825 = vcmask 1041408
    %v4826 = vsel %vm4825, %v4824, 0.0
    %4827 = vadd.xlane.f32.xlu0 %v4826
    %v4828 = vpop.xlane.xlu0 %4827
    %v4829 = vperm.slane %v4774, 0
    %v4830 = vadd.f32 %v4828, %v4829
    %vm4831 = vcmask 1024
    %4832 = vst.msk [vmem:[%s6] sm:$0x3] %vm4831, %v4830
    // Predicated region
    $region45: #{model_forward.1} parent=1 // pred_check
      _
    $region46: #{model_forward.1} parent=1 // pred_check_branch
      %4834 = sbr.rel (0) target = $region48
    $region47: #{model_forward.1} parent=1 // pred_region
      _
    $region48: #{model_forward.1} parent=1 // pred_fallthru
      _
    // Predicated region
    $region49: #{model_forward.1} parent=1 // pred_check
      _
    $region50: #{model_forward.1} parent=1 // pred_check_branch
      %4836 = sbr.rel (0) target = $region52
    $region51: #{model_forward.1} parent=1 // pred_region
      _
    $region52: #{model_forward.1} parent=1 // pred_fallthru
      _
    %4837 = vsyncpa [#allocation6], 1
  %4838 = vsyncmov [#allocation4]
  %s4839 = vpop.sfrf %4838
  %p4840 = scmp.eq.s32.totalorder %s4839, 0
  %p4841 = pneg %p4840
  %4843 = shalt.err (%p4841)
  %s4844 = scalar_lea.sflag [#allocation4], 1
  %4845 = vsyncmov %s4844
  %s4846 = vpop.sfrf %4845
  %p4847 = scmp.eq.s32.totalorder %s4846, 0
  %p4848 = pneg %p4847
  %4850 = shalt.err (%p4848)

</llo_original>
